<compile_context>
chip_gen: v6e
topology: v6e:2x2x1
jax: 0.10.0
libtpu: 0.0.40
codegen_flags: <defaults>
</compile_context>

<pallas_src>
import functools

import jax
import jax.numpy as jnp
from jax.experimental import pallas as pl
from jax.experimental.pallas import tpu as pltpu

_EPS = 1e-5
_VMEM_LIMIT_BYTES = 40 * 1024 * 1024          # explicit scoped-VMEM limit (all gens)
_WEIGHT_TILE_BYTES = 8 * 1024 * 1024          # ~8 MiB f32 weight tile per grid step


# ---------------------------------------------------------------------------
# Big layers: full-K matmul, N-tiled weight streaming, fused epilogue.
# ---------------------------------------------------------------------------

def _big_linear_kernel(x_ref, w_ref, b_ref, g_ref, be_ref, o_ref, *, use_bn, act):
    # One grid step computes the full-K matmul for one tn-wide output slice, so the
    # bias / BatchNorm / activation epilogue runs every step (no accumulator scratch).
    y = jnp.dot(x_ref[...], w_ref[...], preferred_element_type=jnp.float32)
    y = y + b_ref[...]
    if use_bn:
        # Training-mode BatchNorm1d: per-feature batch mean / biased variance.
        # The full batch is resident in this block (batch axis is never tiled).
        mean = jnp.mean(y, axis=0, keepdims=True)
        var = jnp.mean((y - mean) ** 2, axis=0, keepdims=True)
        y = (y - mean) * jax.lax.rsqrt(var + _EPS)
        y = y * g_ref[...] + be_ref[...]
    if act == "relu":
        y = jnp.maximum(y, 0.0)
    elif act == "tanh":
        y = jnp.tanh(y)
    o_ref[...] = y.astype(o_ref.dtype)


def big_linear_bn_act(x, w, b, gamma, beta, *, use_bn, act):
    """y = act(BN(x @ w + b)); x: [B, K], w: [K, N], b/gamma/beta: [1, N]."""
    B, K = x.shape
    K2, N = w.shape
    assert K == K2
    assert B % 8 == 0 and K % 128 == 0 and N % 128 == 0

    # ~8 MiB f32 weight tile, multiple of 128 lanes, dividing N.
    tn = max(128, (_WEIGHT_TILE_BYTES // (K * 4)) // 128 * 128)
    tn = min(tn, N)
    while N % tn != 0:
        tn //= 2
    assert tn >= 128 and tn % 128 == 0 and N % tn == 0

    kernel = functools.partial(_big_linear_kernel, use_bn=use_bn, act=act)

    return pl.pallas_call(
        kernel,
        out_shape=jax.ShapeDtypeStruct((B, N), x.dtype),
        grid=(N // tn,),
        in_specs=[
            pl.BlockSpec((B, K), lambda j: (0, 0)),    # x: full batch, full K, resident
            pl.BlockSpec((K, tn), lambda j: (0, j)),   # weight: streamed over N
            pl.BlockSpec((1, tn), lambda j: (0, j)),   # bias
            pl.BlockSpec((1, tn), lambda j: (0, j)),   # gamma
            pl.BlockSpec((1, tn), lambda j: (0, j)),   # beta
        ],
        out_specs=pl.BlockSpec((B, tn), lambda j: (0, j)),
        compiler_params=pltpu.CompilerParams(
            dimension_semantics=("parallel",),
            vmem_limit_bytes=_VMEM_LIMIT_BYTES,
        ),
    )(x, w, b, gamma, beta)


# ---------------------------------------------------------------------------
# Middle layers: 1024 -> 128 -> 8 -> 128 -> 1024, all fused into one kernel.
# ---------------------------------------------------------------------------

def _fused_mlp_kernel(x_ref, *refs):
    *param_refs, o_ref = refs
    n_layers = len(param_refs) // 4
    h = x_ref[...]
    for i in range(n_layers):
        w_ref, b_ref, g_ref, be_ref = param_refs[4 * i: 4 * i + 4]
        y = jnp.dot(h, w_ref[...], preferred_element_type=jnp.float32) + b_ref[...]
        mean = jnp.mean(y, axis=0, keepdims=True)
        var = jnp.mean((y - mean) ** 2, axis=0, keepdims=True)
        y = (y - mean) * jax.lax.rsqrt(var + _EPS)
        y = y * g_ref[...] + be_ref[...]
        h = jnp.maximum(y, 0.0)
    o_ref[...] = h.astype(o_ref.dtype)


def fused_middle_mlp(x, layer_params):
    """Chain of (Linear -> BN -> ReLU) layers, everything resident in VMEM, 1 launch."""
    B, _ = x.shape
    assert B % 8 == 0
    flat = []
    for (w, b, gamma, beta) in layer_params:
        flat += [w, b, gamma, beta]
    n_out = layer_params[-1][0].shape[1]
    # No grid: single invocation, all inputs/outputs placed whole in VMEM (<1.2 MiB).
    return pl.pallas_call(
        _fused_mlp_kernel,
        out_shape=jax.ShapeDtypeStruct((B, n_out), x.dtype),
        compiler_params=pltpu.CompilerParams(vmem_limit_bytes=_VMEM_LIMIT_BYTES),
    )(x, *flat)


# ---------------------------------------------------------------------------
# Parameters (deterministic, synthetic) and the full forward pass.
# ---------------------------------------------------------------------------

IN_DIM = 64 * 64 * 2  # 8192
LAYER_DIMS = [
    # (in, out, use_bn, act)
    (IN_DIM, 1024, True, "relu"),   # encoder
    (1024, 128, True, "relu"),
    (128, 8, True, "relu"),
    (8, 128, True, "relu"),         # decoder
    (128, 1024, True, "relu"),
    (1024, IN_DIM, False, "tanh"),
]


def init_params(key):
    params = []
    for (din, dout, use_bn, act) in LAYER_DIMS:
        key, kw, kb, kg, kbe = jax.random.split(key, 5)
        w = jax.random.normal(kw, (din, dout), jnp.float32) * 0.02
        b = jax.random.normal(kb, (1, dout), jnp.float32) * 0.02
        gamma = 1.0 + 0.1 * jax.random.normal(kg, (1, dout), jnp.float32)
        beta = 0.1 * jax.random.normal(kbe, (1, dout), jnp.float32)
        params.append((w, b, gamma, beta, use_bn, act))
    return params


def autoencoder_forward(x, params):
    # Layer 0: 8192 -> 1024  (Linear + BN + ReLU), N-tiled weight streaming.
    w, b, g, be, use_bn, act = params[0]
    h = big_linear_bn_act(x, w, b, g, be, use_bn=use_bn, act=act)
    # Layers 1..4: tiny middle layers fused into one kernel (all Linear+BN+ReLU).
    mid = [(w, b, g, be) for (w, b, g, be, _, _) in params[1:5]]
    h = fused_middle_mlp(h, mid)
    # Layer 5: 1024 -> 8192  (Linear + Tanh), N-tiled weight streaming.
    w, b, g, be, use_bn, act = params[5]
    h = big_linear_bn_act(h, w, b, g, be, use_bn=use_bn, act=act)
    return h


def autoencoder_reference(x, params):
    """Pure-JAX reference matching the PyTorch training-mode forward."""
    h = x
    for (w, b, gamma, beta, use_bn, act) in params:
        y = jnp.dot(h, w, preferred_element_type=jnp.float32) + b
        if use_bn:
            mean = jnp.mean(y, axis=0, keepdims=True)
            var = jnp.mean((y - mean) ** 2, axis=0, keepdims=True)
            y = (y - mean) * jax.lax.rsqrt(var + 1e-5)
            y = y * gamma + beta
        if act == "relu":
            y = jnp.maximum(y, 0.0)
        elif act == "tanh":
            y = jnp.tanh(y)
        h = y
    return h


if __name__ == "__main__":
    key = jax.random.PRNGKey(0)
    key, kx = jax.random.split(key)

    B = 8  # batch: multiple of 8 (sublane tiling); whole batch stays in one block for BN
    x = jax.random.normal(kx, (B, IN_DIM), jnp.float32)

    params = init_params(key)

    out = autoencoder_forward(x, params)
    out = jax.block_until_ready(out)

    ref = autoencoder_reference(x, params)
    assert out.shape == (B, IN_DIM)
    assert jnp.allclose(out, ref, atol=1e-4, rtol=1e-4), (
        float(jnp.max(jnp.abs(out - ref))))

    print("KERNEL_OK")
</pallas_src>

<mosaic_0001>
module attributes {stable_mosaic.version = 11 : i64} {
  func.func @_big_linear_kernel(%arg0: i32, %arg1: memref<8x8192xf32, #tpu.memory_space<vmem>>, %arg2: memref<8192x256xf32, #tpu.memory_space<vmem>>, %arg3: memref<1x256xf32, #tpu.memory_space<vmem>>, %arg4: memref<1x256xf32, #tpu.memory_space<vmem>>, %arg5: memref<1x256xf32, #tpu.memory_space<vmem>>, %arg6: memref<8x256xf32, #tpu.memory_space<vmem>>) attributes {dimension_semantics = [#tpu.dimension_semantics<parallel>], iteration_bounds = array<i64: 4>, scalar_prefetch = 0 : i64, scratch_operands = 0 : i64, tpu.core_type = #tpu.core_type<tc>, window_params = [{pipeline_mode = #tpu.pipeline_mode<synchronous>, transform_indices = @transform_0, window_bounds = array<i64: 8, 8192>}, {transform_indices = @transform_1, window_bounds = array<i64: 8192, 256>}, {transform_indices = @transform_2, window_bounds = array<i64: 1, 256>}, {transform_indices = @transform_3, window_bounds = array<i64: 1, 256>}, {transform_indices = @transform_4, window_bounds = array<i64: 1, 256>}, {transform_indices = @transform_5, window_bounds = array<i64: 8, 256>}]} {
    %c0 = arith.constant 0 : index
    %c0_0 = arith.constant 0 : index
    %0 = vector.load %arg1[%c0, %c0_0] : memref<8x8192xf32, #tpu.memory_space<vmem>>, vector<8x8192xf32>
    %c0_1 = arith.constant 0 : index
    %c0_2 = arith.constant 0 : index
    %1 = vector.load %arg2[%c0_1, %c0_2] : memref<8192x256xf32, #tpu.memory_space<vmem>>, vector<8192x256xf32>
    %cst = arith.constant dense<0.000000e+00> : vector<8x256xf32>
    %2 = tpu.matmul %0, %1, %cst {dimension_numbers = #tpu.dot_dimension_numbers<[1], [0], [0], [1], [0, 0, 1, 1], [], []>} : vector<8x8192xf32>, vector<8192x256xf32>, vector<8x256xf32> -> vector<8x256xf32>
    %c0_3 = arith.constant 0 : index
    %c0_4 = arith.constant 0 : index
    %3 = vector.load %arg3[%c0_3, %c0_4] : memref<1x256xf32, #tpu.memory_space<vmem>>, vector<1x256xf32>
    %4 = vector.broadcast %3 : vector<1x256xf32> to vector<8x256xf32>
    %5 = arith.addf %2, %4 : vector<8x256xf32>
    %cst_5 = arith.constant dense<0.000000e+00> : vector<256xf32>
    %6 = vector.multi_reduction <add>, %5, %cst_5 [0] : vector<8x256xf32> to vector<256xf32>
    %7 = vector.shape_cast %6 : vector<256xf32> to vector<1x256xf32>
    %cst_6 = arith.constant 8.000000e+00 : f32
    %8 = vector.broadcast %cst_6 : f32 to vector<1x256xf32>
    %9 = arith.divf %7, %8 : vector<1x256xf32>
    %10 = vector.broadcast %9 : vector<1x256xf32> to vector<8x256xf32>
    %11 = arith.subf %5, %10 : vector<8x256xf32>
    %12 = arith.mulf %11, %11 : vector<8x256xf32>
    %cst_7 = arith.constant dense<0.000000e+00> : vector<256xf32>
    %13 = vector.multi_reduction <add>, %12, %cst_7 [0] : vector<8x256xf32> to vector<256xf32>
    %14 = vector.shape_cast %13 : vector<256xf32> to vector<1x256xf32>
    %cst_8 = arith.constant 8.000000e+00 : f32
    %15 = vector.broadcast %cst_8 : f32 to vector<1x256xf32>
    %16 = arith.divf %14, %15 : vector<1x256xf32>
    %17 = vector.broadcast %9 : vector<1x256xf32> to vector<8x256xf32>
    %18 = arith.subf %5, %17 : vector<8x256xf32>
    %cst_9 = arith.constant 9.99999974E-6 : f32
    %19 = vector.broadcast %cst_9 : f32 to vector<1x256xf32>
    %20 = arith.addf %16, %19 : vector<1x256xf32>
    %21 = math.rsqrt %20 : vector<1x256xf32>
    %22 = vector.broadcast %21 : vector<1x256xf32> to vector<8x256xf32>
    %23 = arith.mulf %18, %22 : vector<8x256xf32>
    %c0_10 = arith.constant 0 : index
    %c0_11 = arith.constant 0 : index
    %24 = vector.load %arg4[%c0_10, %c0_11] : memref<1x256xf32, #tpu.memory_space<vmem>>, vector<1x256xf32>
    %25 = vector.broadcast %24 : vector<1x256xf32> to vector<8x256xf32>
    %26 = arith.mulf %23, %25 : vector<8x256xf32>
    %c0_12 = arith.constant 0 : index
    %c0_13 = arith.constant 0 : index
    %27 = vector.load %arg5[%c0_12, %c0_13] : memref<1x256xf32, #tpu.memory_space<vmem>>, vector<1x256xf32>
    %28 = vector.broadcast %27 : vector<1x256xf32> to vector<8x256xf32>
    %29 = arith.addf %26, %28 : vector<8x256xf32>
    %cst_14 = arith.constant 0.000000e+00 : f32
    %30 = vector.broadcast %cst_14 : f32 to vector<8x256xf32>
    %31 = arith.maximumf %29, %30 : vector<8x256xf32>
    %c0_15 = arith.constant 0 : index
    %c0_16 = arith.constant 0 : index
    %32 = vector.load %arg6[%c0_15, %c0_16] : memref<8x256xf32, #tpu.memory_space<vmem>>, vector<8x256xf32>
    tpu.vector_store %arg6[%c0_15, %c0_16], %31 {strides = array<i32>} : memref<8x256xf32, #tpu.memory_space<vmem>>, vector<8x256xf32>,
    return
  }
  func.func @transform_0(%arg0: i32) -> (i32, i32) {
    %c0_i32 = arith.constant 0 : i32
    %c0_i32_0 = arith.constant 0 : i32
    %c0_i32_1 = arith.constant 0 : i32
    return %c0_i32, %c0_i32_0 : i32, i32
  }
  func.func @transform_1(%arg0: i32) -> (i32, i32) {
    %c0_i32 = arith.constant 0 : i32
    %c0_i32_0 = arith.constant 0 : i32
    return %c0_i32, %arg0 : i32, i32
  }
  func.func @transform_2(%arg0: i32) -> (i32, i32) {
    %c0_i32 = arith.constant 0 : i32
    %c0_i32_0 = arith.constant 0 : i32
    return %c0_i32, %arg0 : i32, i32
  }
  func.func @transform_3(%arg0: i32) -> (i32, i32) {
    %c0_i32 = arith.constant 0 : i32
    %c0_i32_0 = arith.constant 0 : i32
    return %c0_i32, %arg0 : i32, i32
  }
  func.func @transform_4(%arg0: i32) -> (i32, i32) {
    %c0_i32 = arith.constant 0 : i32
    %c0_i32_0 = arith.constant 0 : i32
    return %c0_i32, %arg0 : i32, i32
  }
  func.func @transform_5(%arg0: i32) -> (i32, i32) {
    %c0_i32 = arith.constant 0 : i32
    %c0_i32_0 = arith.constant 0 : i32
    return %c0_i32, %arg0 : i32, i32
  }
}

</mosaic_0001>

<llo_original>
// kernel: tpu_custom_call.1
$region0: #{tpu_custom_call.1}
  #allocation0 [shape = 'u32[]', space=smem, size = 0x4, offset = 0x4, fixed_abs, tag = 'smem constant byte address 0x4 - core index']
  #allocation1 [shape = 'u32[144,128]{1,0:T(1,128)}', space=vmem, size = 0x12000, scoped, tag = 'internal scratch']
  %s0 = inlined_call_operand.hbm [shape: f32[8,8192], index: 0, kind: input, shape index: {}]
  %s1 = inlined_call_operand.hbm [shape: f32[8192,1024], index: 1, kind: input, shape index: {}]
  %s2 = inlined_call_operand.hbm [shape: f32[1,1024], index: 2, kind: input, shape index: {}]
  %s3 = inlined_call_operand.hbm [shape: f32[1,1024], index: 3, kind: input, shape index: {}]
  %s4 = inlined_call_operand.hbm [shape: f32[1,1024], index: 4, kind: input, shape index: {}]
  %s5 = inlined_call_operand.hbm [shape: f32[8,1024], index: 5, kind: output, shape index: {}]
  %s6 = sld [smem:[#allocation0]]
  $region73: #{tpu_custom_call.1} parent=0
    _
  %s8 = ssub.s32 1, %s6
  %s9 = scalar_select 0, %s8, %s6
  $region1: #{tpu_custom_call.1} parent=0
    #allocation2 [shape = 'u8[262144]{0}', space=vmem, size = 0x40000, scoped, tag = 'input window, operand 0, single buffered']
    #allocation3 [shape = 's32[2]{0}', space=sflag, size = 0x8, scoped, tag = 'scoped memory for tpu_custom_call.1']
    #allocation4 [shape = 's32[2]{0}', space=sflag, size = 0x8, scoped, tag = 'scoped memory for tpu_custom_call.1']
    #allocation5 [shape = 'u8[16777216]{0}', space=vmem, size = 0x1000000, scoped, tag = 'input window, operand 1']
    #allocation6 [shape = 's32[2]{0}', space=sflag, size = 0x8, scoped, tag = 'scoped memory for tpu_custom_call.1']
    #allocation7 [shape = 'u8[2048]{0}', space=vmem, size = 0x800, scoped, tag = 'input window, operand 2']
    #allocation8 [shape = 'u8[2048]{0}', space=vmem, size = 0x800, scoped, tag = 'input window, operand 3']
    #allocation9 [shape = 's32[2]{0}', space=sflag, size = 0x8, scoped, tag = 'scoped memory for tpu_custom_call.1']
    #allocation10 [shape = 'u8[2048]{0}', space=vmem, size = 0x800, scoped, tag = 'input window, operand 4']
    #allocation11 [shape = 'u8[16384]{0}', space=vmem, size = 0x4000, scoped, tag = 'output window, operand 0']
    %10 = vsyncpa [#allocation3], 0
    %11 = vsyncpa [#allocation6], 0
    %s12 = scalar_lea.sflag [#allocation6], 1
    %13 = vsyncpa %s12, 0
    %14 = vsyncpa [#allocation9], 0
    %s15 = scalar_lea.sflag [#allocation9], 1
    %16 = vsyncpa %s15, 0
    %17 = vsyncpa [#allocation4], 0
    %s18 = scalar_lea.sflag [#allocation4], 1
    %19 = vsyncpa %s18, 0
    loop: start=0, step=1, limit=6
    $region2: #{tpu_custom_call.1} parent=1 // loop_pre_header
      _
    $region3: #{tpu_custom_call.1} parent=1 // loop_header
      %s21 = sphi 0, %s25
      %p22 = scmp.ge.s32.totalorder %s21, 6
      %s29 = sphi 0, %s29
      %s31 = sphi 0, %s29
      %s32 = sphi 0, %s31
      %s46 = sphi 0, %s32
      %s52 = sphi 0, %s54
      %s55 = sphi 0, %s52
      %s56 = sphi 0, %s55
      %s72 = sphi 0, %s56
      %s78 = sphi 0, %s80
      %s81 = sphi 0, %s78
      %s82 = sphi 0, %s81
      %s98 = sphi 0, %s82
      %s104 = sphi 0, %s106
      %s107 = sphi 0, %s104
      %s108 = sphi 0, %s107
      %s124 = sphi 0, %s108
      %s130 = sphi 0, %s132
      %s133 = sphi 0, %s130
      %s134 = sphi 0, %s133
      %s150 = sphi 0, %s134
      %s156 = sphi 0, %s158
      %s159 = sphi 0, %s156
      %s160 = sphi 0, %s159
      %s176 = sphi 0, %s160
    $region4: #{tpu_custom_call.1} parent=1 // loop_header_branch
      %24 = sbr.rel (%p22) target = $region8
    $region5: #{tpu_custom_call.1} parent=1 // loop_body
      %s26 = ssub.s32 %s21, 1
      %s27 = ssub.s32 %s21, 2
      %s28 = sadd.s32 %s21, 1
      %s30 = sadd.s32 %s29, 1
      %p33 = scmp.eq.s32.totalorder %s21, 3
      %p34 = scmp.ne.s32.totalorder %s29, %s31
      %p35 = scmp.eq.s32.totalorder %s21, 0
      %p36 = por %p34, %p35
      %p37 = scmp.ne.s32.totalorder %s29, %s31
      %p38 = scmp.eq.s32.totalorder %s26, 3
      %p39 = por %p37, %p38
      %p40 = scmp.ne.s32.totalorder %s31, %s32
      %p41 = scmp.eq.s32.totalorder %s26, 0
      %p42 = por %p40, %p41
      %p43 = scmp.ne.s32.totalorder %s31, %s32
      %p44 = scmp.eq.s32.totalorder %s27, 3
      %p45 = por %p43, %p44
      %p47 = scmp.ne.s32.totalorder %s32, %s46
      %p48 = scmp.eq.s32.totalorder %s27, 0
      %p49 = por %p47, %p48
      %s50 = ssub.s32 %s21, %s28
      %p51 = scmp.eq.s32.totalorder %s50, 0
      %s53 = sadd.s32 %s52, 1
      %s54 = scalar_select %p51, %s52, %s53
      %p57 = pneg %p51
      %p58 = scmp.eq.s32.totalorder %s21, 3
      %p59 = por %p57, %p58
      %p60 = scmp.ne.s32.totalorder %s52, %s55
      %p61 = scmp.eq.s32.totalorder %s21, 0
      %p62 = por %p60, %p61
      %p63 = scmp.ne.s32.totalorder %s52, %s55
      %p64 = scmp.eq.s32.totalorder %s26, 3
      %p65 = por %p63, %p64
      %p66 = scmp.ne.s32.totalorder %s55, %s56
      %p67 = scmp.eq.s32.totalorder %s26, 0
      %p68 = por %p66, %p67
      %p69 = scmp.ne.s32.totalorder %s55, %s56
      %p70 = scmp.eq.s32.totalorder %s27, 3
      %p71 = por %p69, %p70
      %p73 = scmp.ne.s32.totalorder %s56, %s72
      %p74 = scmp.eq.s32.totalorder %s27, 0
      %p75 = por %p73, %p74
      %s76 = ssub.s32 %s21, %s28
      %p77 = scmp.eq.s32.totalorder %s76, 0
      %s79 = sadd.s32 %s78, 1
      %s80 = scalar_select %p77, %s78, %s79
      %p83 = pneg %p77
      %p84 = scmp.eq.s32.totalorder %s21, 3
      %p85 = por %p83, %p84
      %p86 = scmp.ne.s32.totalorder %s78, %s81
      %p87 = scmp.eq.s32.totalorder %s21, 0
      %p88 = por %p86, %p87
      %p89 = scmp.ne.s32.totalorder %s78, %s81
      %p90 = scmp.eq.s32.totalorder %s26, 3
      %p91 = por %p89, %p90
      %p92 = scmp.ne.s32.totalorder %s81, %s82
      %p93 = scmp.eq.s32.totalorder %s26, 0
      %p94 = por %p92, %p93
      %p95 = scmp.ne.s32.totalorder %s81, %s82
      %p96 = scmp.eq.s32.totalorder %s27, 3
      %p97 = por %p95, %p96
      %p99 = scmp.ne.s32.totalorder %s82, %s98
      %p100 = scmp.eq.s32.totalorder %s27, 0
      %p101 = por %p99, %p100
      %s102 = ssub.s32 %s21, %s28
      %p103 = scmp.eq.s32.totalorder %s102, 0
      %s105 = sadd.s32 %s104, 1
      %s106 = scalar_select %p103, %s104, %s105
      %p109 = pneg %p103
      %p110 = scmp.eq.s32.totalorder %s21, 3
      %p111 = por %p109, %p110
      %p112 = scmp.ne.s32.totalorder %s104, %s107
      %p113 = scmp.eq.s32.totalorder %s21, 0
      %p114 = por %p112, %p113
      %p115 = scmp.ne.s32.totalorder %s104, %s107
      %p116 = scmp.eq.s32.totalorder %s26, 3
      %p117 = por %p115, %p116
      %p118 = scmp.ne.s32.totalorder %s107, %s108
      %p119 = scmp.eq.s32.totalorder %s26, 0
      %p120 = por %p118, %p119
      %p121 = scmp.ne.s32.totalorder %s107, %s108
      %p122 = scmp.eq.s32.totalorder %s27, 3
      %p123 = por %p121, %p122
      %p125 = scmp.ne.s32.totalorder %s108, %s124
      %p126 = scmp.eq.s32.totalorder %s27, 0
      %p127 = por %p125, %p126
      %s128 = ssub.s32 %s21, %s28
      %p129 = scmp.eq.s32.totalorder %s128, 0
      %s131 = sadd.s32 %s130, 1
      %s132 = scalar_select %p129, %s130, %s131
      %p135 = pneg %p129
      %p136 = scmp.eq.s32.totalorder %s21, 3
      %p137 = por %p135, %p136
      %p138 = scmp.ne.s32.totalorder %s130, %s133
      %p139 = scmp.eq.s32.totalorder %s21, 0
      %p140 = por %p138, %p139
      %p141 = scmp.ne.s32.totalorder %s130, %s133
      %p142 = scmp.eq.s32.totalorder %s26, 3
      %p143 = por %p141, %p142
      %p144 = scmp.ne.s32.totalorder %s133, %s134
      %p145 = scmp.eq.s32.totalorder %s26, 0
      %p146 = por %p144, %p145
      %p147 = scmp.ne.s32.totalorder %s133, %s134
      %p148 = scmp.eq.s32.totalorder %s27, 3
      %p149 = por %p147, %p148
      %p151 = scmp.ne.s32.totalorder %s134, %s150
      %p152 = scmp.eq.s32.totalorder %s27, 0
      %p153 = por %p151, %p152
      %s154 = ssub.s32 %s21, %s28
      %p155 = scmp.eq.s32.totalorder %s154, 0
      %s157 = sadd.s32 %s156, 1
      %s158 = scalar_select %p155, %s156, %s157
      %p161 = pneg %p155
      %p162 = scmp.eq.s32.totalorder %s21, 3
      %p163 = por %p161, %p162
      %p164 = scmp.ne.s32.totalorder %s156, %s159
      %p165 = scmp.eq.s32.totalorder %s21, 0
      %p166 = por %p164, %p165
      %p167 = scmp.ne.s32.totalorder %s156, %s159
      %p168 = scmp.eq.s32.totalorder %s26, 3
      %p169 = por %p167, %p168
      %p170 = scmp.ne.s32.totalorder %s159, %s160
      %p171 = scmp.eq.s32.totalorder %s26, 0
      %p172 = por %p170, %p171
      %p173 = scmp.ne.s32.totalorder %s159, %s160
      %p174 = scmp.eq.s32.totalorder %s27, 3
      %p175 = por %p173, %p174
      %p177 = scmp.ne.s32.totalorder %s160, %s176
      %p178 = scmp.eq.s32.totalorder %s27, 0
      %p179 = por %p177, %p178
      %p180 = scmp.le.s32.totalorder 1, %s21
      %p181 = scmp.lt.s32.totalorder %s21, 5
      %p182 = pnand %p180, %p181
      %p183 = pneg %p182
      // Predicated region
      $region9: #{tpu_custom_call.1} parent=5 // pred_check
        _
      $region10: #{tpu_custom_call.1} parent=5 // pred_check_branch
        %185 = sbr.rel (%p182) target = $region12
      $region11: #{tpu_custom_call.1} parent=5 // pred_region
        %s186 = ssub.s32 %s21, 1
        // Predicated region
        $region13: #{tpu_custom_call.1} parent=11 // pred_check
          %p187 = pneg %p42
        $region14: #{tpu_custom_call.1} parent=11 // pred_check_branch
          %189 = sbr.rel (%p187) target = $region16
        $region15: #{tpu_custom_call.1} parent=11 // pred_region
          %s191 = ssub.s32 8192, 8192
          %192 = vsyncadd [#allocation3], %s191
          %s194 = sshll.u32 [#allocation2], 4
          %s195 = int_to_ptr.vmem [resolvable:$true] %s194
          %197 = dma.hbm_to_vmem [thread:$0]  %s0, 8192, %s195, [#allocation3]
        $region16: #{tpu_custom_call.1} parent=11 // pred_fallthru
          _
      $region12: #{tpu_custom_call.1} parent=5 // pred_fallthru
        _
      %p198 = scmp.lt.s32.totalorder %s21, 4
      // Predicated region
      $region17: #{tpu_custom_call.1} parent=5 // pred_check
        %p199 = pneg %p198
      $region18: #{tpu_custom_call.1} parent=5 // pred_check_branch
        %201 = sbr.rel (%p199) target = $region20
      $region19: #{tpu_custom_call.1} parent=5 // pred_region
        // Predicated region
        $region21: #{tpu_custom_call.1} parent=19 // pred_check
          %p202 = pneg %p62
        $region22: #{tpu_custom_call.1} parent=19 // pred_check_branch
          %204 = sbr.rel (%p202) target = $region24
        $region23: #{tpu_custom_call.1} parent=19 // pred_region
          %s205 = sand.u32 %s21, 1
          %s206 = scalar_lea.sflag [#allocation6], %s205
          %s207 = sand.u32 %s52, 1
          %s208 = smul.addr %s207, 16384
          %s209 = scalar_lea.vmem [#allocation5], %s208
          %s210 = smul.u32 2, %s21
          %s212 = ssub.s32 262144, 262144
          %213 = vsyncadd %s206, %s212
          %s214 = smul.addr %s210, 128
          %s215 = scalar_lea.hbm %s1, %s214
          %s216 = sshll.u32 %s209, 4
          %s217 = int_to_ptr.vmem [resolvable:$true] %s216
          %222 = dma.hbm_to_vmem [thread:$0]  %s215, 262144, %s217, %s206, 1024, 256, 16
        $region24: #{tpu_custom_call.1} parent=19 // pred_fallthru
          _
        // Predicated region
        $region25: #{tpu_custom_call.1} parent=19 // pred_check
          %p223 = pneg %p88
        $region26: #{tpu_custom_call.1} parent=19 // pred_check_branch
          %225 = sbr.rel (%p223) target = $region28
        $region27: #{tpu_custom_call.1} parent=19 // pred_region
          %s226 = sand.u32 %s21, 1
          %s227 = scalar_lea.sflag [#allocation6], %s226
          %s228 = sand.u32 %s78, 1
          %s229 = smul.addr %s228, 2
          %s230 = scalar_lea.vmem [#allocation7], %s229
          %s231 = smul.u32 2, %s21
          %s233 = ssub.s32 32, 32
          %234 = vsyncadd %s227, %s233
          %s235 = smul.addr %s231, 16
          %s236 = scalar_lea.hbm %s2, %s235
          %s238 = sshll.u32 %s230, 4
          %s239 = int_to_ptr.vmem [resolvable:$true] %s238
          %241 = dma.hbm_to_vmem [thread:$0]  %s236, 32, %s239, %s227
        $region28: #{tpu_custom_call.1} parent=19 // pred_fallthru
          _
        // Predicated region
        $region29: #{tpu_custom_call.1} parent=19 // pred_check
          %p242 = pneg %p114
        $region30: #{tpu_custom_call.1} parent=19 // pred_check_branch
          %244 = sbr.rel (%p242) target = $region32
        $region31: #{tpu_custom_call.1} parent=19 // pred_region
          %s245 = sand.u32 %s21, 1
          %s246 = scalar_lea.sflag [#allocation9], %s245
          %s247 = sand.u32 %s104, 1
          %s248 = smul.addr %s247, 2
          %s249 = scalar_lea.vmem [#allocation8], %s248
          %s250 = smul.u32 2, %s21
          %s252 = ssub.s32 32, 32
          %253 = vsyncadd %s246, %s252
          %s254 = smul.addr %s250, 16
          %s255 = scalar_lea.hbm %s3, %s254
          %s257 = sshll.u32 %s249, 4
          %s258 = int_to_ptr.vmem [resolvable:$true] %s257
          %260 = dma.hbm_to_vmem [thread:$0]  %s255, 32, %s258, %s246
        $region32: #{tpu_custom_call.1} parent=19 // pred_fallthru
          _
        // Predicated region
        $region33: #{tpu_custom_call.1} parent=19 // pred_check
          %p261 = pneg %p140
        $region34: #{tpu_custom_call.1} parent=19 // pred_check_branch
          %263 = sbr.rel (%p261) target = $region36
        $region35: #{tpu_custom_call.1} parent=19 // pred_region
          %s264 = sand.u32 %s21, 1
          %s265 = scalar_lea.sflag [#allocation9], %s264
          %s266 = sand.u32 %s130, 1
          %s267 = smul.addr %s266, 2
          %s268 = scalar_lea.vmem [#allocation10], %s267
          %s269 = smul.u32 2, %s21
          %s271 = ssub.s32 32, 32
          %272 = vsyncadd %s265, %s271
          %s273 = smul.addr %s269, 16
          %s274 = scalar_lea.hbm %s4, %s273
          %s276 = sshll.u32 %s268, 4
          %s277 = int_to_ptr.vmem [resolvable:$true] %s276
          %279 = dma.hbm_to_vmem [thread:$0]  %s274, 32, %s277, %s265
        $region36: #{tpu_custom_call.1} parent=19 // pred_fallthru
          _
      $region20: #{tpu_custom_call.1} parent=5 // pred_fallthru
        _
      %p280 = scmp.le.s32.totalorder 1, %s21
      %p281 = scmp.lt.s32.totalorder %s21, 5
      %p282 = pnand %p280, %p281
      %p283 = pneg %p282
      // Predicated region
      $region37: #{tpu_custom_call.1} parent=5 // pred_check
        _
      $region38: #{tpu_custom_call.1} parent=5 // pred_check_branch
        %285 = sbr.rel (%p282) target = $region40
      $region39: #{tpu_custom_call.1} parent=5 // pred_region
        %s286 = ssub.s32 %s21, 1
        // Predicated region
        $region41: #{tpu_custom_call.1} parent=39 // pred_check
          %p287 = pneg %p42
        $region42: #{tpu_custom_call.1} parent=39 // pred_check_branch
          %289 = sbr.rel (%p287) target = $region44
        $region43: #{tpu_custom_call.1} parent=39 // pred_region
          %290 = dma.done [#allocation3], 8192
        $region44: #{tpu_custom_call.1} parent=39 // pred_fallthru
          _
        %s291 = sand.u32 %s26, 1
        %s292 = scalar_lea.sflag [#allocation6], %s291
        %s293 = sand.u32 %s55, 1
        %s294 = smul.addr %s293, 16384
        %s295 = scalar_lea.vmem [#allocation5], %s294
        // Predicated region
        $region45: #{tpu_custom_call.1} parent=39 // pred_check
          %p296 = pneg %p68
        $region46: #{tpu_custom_call.1} parent=39 // pred_check_branch
          %298 = sbr.rel (%p296) target = $region48
        $region47: #{tpu_custom_call.1} parent=39 // pred_region
          %299 = dma.done %s292, 262144
        $region48: #{tpu_custom_call.1} parent=39 // pred_fallthru
          _
        %s300 = sand.u32 %s26, 1
        %s301 = scalar_lea.sflag [#allocation6], %s300
        %s302 = sand.u32 %s81, 1
        %s303 = smul.addr %s302, 2
        %s304 = scalar_lea.vmem [#allocation7], %s303
        // Predicated region
        $region49: #{tpu_custom_call.1} parent=39 // pred_check
          %p305 = pneg %p94
        $region50: #{tpu_custom_call.1} parent=39 // pred_check_branch
          %307 = sbr.rel (%p305) target = $region52
        $region51: #{tpu_custom_call.1} parent=39 // pred_region
          %308 = dma.done %s301, 32
        $region52: #{tpu_custom_call.1} parent=39 // pred_fallthru
          _
        %s309 = sand.u32 %s26, 1
        %s310 = scalar_lea.sflag [#allocation9], %s309
        %s311 = sand.u32 %s107, 1
        %s312 = smul.addr %s311, 2
        %s313 = scalar_lea.vmem [#allocation8], %s312
        // Predicated region
        $region53: #{tpu_custom_call.1} parent=39 // pred_check
          %p314 = pneg %p120
        $region54: #{tpu_custom_call.1} parent=39 // pred_check_branch
          %316 = sbr.rel (%p314) target = $region56
        $region55: #{tpu_custom_call.1} parent=39 // pred_region
          %317 = dma.done %s310, 32
        $region56: #{tpu_custom_call.1} parent=39 // pred_fallthru
          _
        %s318 = sand.u32 %s26, 1
        %s319 = scalar_lea.sflag [#allocation9], %s318
        %s320 = sand.u32 %s133, 1
        %s321 = smul.addr %s320, 2
        %s322 = scalar_lea.vmem [#allocation10], %s321
        // Predicated region
        $region57: #{tpu_custom_call.1} parent=39 // pred_check
          %p323 = pneg %p146
        $region58: #{tpu_custom_call.1} parent=39 // pred_check_branch
          %325 = sbr.rel (%p323) target = $region60
        $region59: #{tpu_custom_call.1} parent=39 // pred_region
          %326 = dma.done %s319, 32
        $region60: #{tpu_custom_call.1} parent=39 // pred_fallthru
          _
        %p327 = pneg %p42
        %p328 = pneg %p39
        %s329 = sand.u32 %s26, 1
        %s330 = scalar_lea.sflag [#allocation6], %s329
        %s331 = sand.u32 %s55, 1
        %s332 = smul.addr %s331, 16384
        %s333 = scalar_lea.vmem [#allocation5], %s332
        %p334 = pneg %p68
        %p335 = pneg %p65
        %s336 = sand.u32 %s26, 1
        %s337 = scalar_lea.sflag [#allocation6], %s336
        %s338 = sand.u32 %s81, 1
        %s339 = smul.addr %s338, 2
        %s340 = scalar_lea.vmem [#allocation7], %s339
        %p341 = pneg %p94
        %p342 = pneg %p91
        %s343 = sand.u32 %s26, 1
        %s344 = scalar_lea.sflag [#allocation9], %s343
        %s345 = sand.u32 %s107, 1
        %s346 = smul.addr %s345, 2
        %s347 = scalar_lea.vmem [#allocation8], %s346
        %p348 = pneg %p120
        %p349 = pneg %p117
        %s350 = sand.u32 %s26, 1
        %s351 = scalar_lea.sflag [#allocation9], %s350
        %s352 = sand.u32 %s133, 1
        %s353 = smul.addr %s352, 2
        %s354 = scalar_lea.vmem [#allocation10], %s353
        %p355 = pneg %p146
        %p356 = pneg %p143
        %p357 = pneg %p172
        %p358 = pneg %p169
        %s359 = sand.u32 %s159, 1
        %s360 = scalar_lea.sflag [#allocation4], %s359
        %s361 = sand.u32 %s159, 1
        %s362 = smul.addr %s361, 16
        %s363 = scalar_lea.vmem [#allocation11], %s362
        %s364 = smul.u32 2, %s26
        %s365 = smul.u32 2, %s26
        %s366 = smul.u32 2, %s26
        %s367 = smul.u32 2, %s26
        %s368 = smul.u32 2, %s26
        %v369 = vld [vmem:[#allocation2] sm:$0xff]
        %v370 = vld [vmem:[#allocation2 + $0x8] sm:$0xff]
        %v371 = vld [vmem:[#allocation2 + $0x10] sm:$0xff]
        %v372 = vld [vmem:[#allocation2 + $0x18] sm:$0xff]
        %v373 = vld [vmem:[#allocation2 + $0x20] sm:$0xff]
        %v374 = vld [vmem:[#allocation2 + $0x28] sm:$0xff]
        %v375 = vld [vmem:[#allocation2 + $0x30] sm:$0xff]
        %v376 = vld [vmem:[#allocation2 + $0x38] sm:$0xff]
        %v377 = vld [vmem:[#allocation2 + $0x40] sm:$0xff]
        %v378 = vld [vmem:[#allocation2 + $0x48] sm:$0xff]
        %v379 = vld [vmem:[#allocation2 + $0x50] sm:$0xff]
        %v380 = vld [vmem:[#allocation2 + $0x58] sm:$0xff]
        %v381 = vld [vmem:[#allocation2 + $0x60] sm:$0xff]
        %v382 = vld [vmem:[#allocation2 + $0x68] sm:$0xff]
        %v383 = vld [vmem:[#allocation2 + $0x70] sm:$0xff]
        %v384 = vld [vmem:[#allocation2 + $0x78] sm:$0xff]
        %v385 = vld [vmem:[#allocation2 + $0x80] sm:$0xff]
        %v386 = vld [vmem:[#allocation2 + $0x88] sm:$0xff]
        %v387 = vld [vmem:[#allocation2 + $0x90] sm:$0xff]
        %v388 = vld [vmem:[#allocation2 + $0x98] sm:$0xff]
        %v389 = vld [vmem:[#allocation2 + $0xa0] sm:$0xff]
        %v390 = vld [vmem:[#allocation2 + $0xa8] sm:$0xff]
        %v391 = vld [vmem:[#allocation2 + $0xb0] sm:$0xff]
        %v392 = vld [vmem:[#allocation2 + $0xb8] sm:$0xff]
        %v393 = vld [vmem:[#allocation2 + $0xc0] sm:$0xff]
        %v394 = vld [vmem:[#allocation2 + $0xc8] sm:$0xff]
        %v395 = vld [vmem:[#allocation2 + $0xd0] sm:$0xff]
        %v396 = vld [vmem:[#allocation2 + $0xd8] sm:$0xff]
        %v397 = vld [vmem:[#allocation2 + $0xe0] sm:$0xff]
        %v398 = vld [vmem:[#allocation2 + $0xe8] sm:$0xff]
        %v399 = vld [vmem:[#allocation2 + $0xf0] sm:$0xff]
        %v400 = vld [vmem:[#allocation2 + $0xf8] sm:$0xff]
        %v401 = vld [vmem:[#allocation2 + $0x100] sm:$0xff]
        %v402 = vld [vmem:[#allocation2 + $0x108] sm:$0xff]
        %v403 = vld [vmem:[#allocation2 + $0x110] sm:$0xff]
        %v404 = vld [vmem:[#allocation2 + $0x118] sm:$0xff]
        %v405 = vld [vmem:[#allocation2 + $0x120] sm:$0xff]
        %v406 = vld [vmem:[#allocation2 + $0x128] sm:$0xff]
        %v407 = vld [vmem:[#allocation2 + $0x130] sm:$0xff]
        %v408 = vld [vmem:[#allocation2 + $0x138] sm:$0xff]
        %v409 = vld [vmem:[#allocation2 + $0x140] sm:$0xff]
        %v410 = vld [vmem:[#allocation2 + $0x148] sm:$0xff]
        %v411 = vld [vmem:[#allocation2 + $0x150] sm:$0xff]
        %v412 = vld [vmem:[#allocation2 + $0x158] sm:$0xff]
        %v413 = vld [vmem:[#allocation2 + $0x160] sm:$0xff]
        %v414 = vld [vmem:[#allocation2 + $0x168] sm:$0xff]
        %v415 = vld [vmem:[#allocation2 + $0x170] sm:$0xff]
        %v416 = vld [vmem:[#allocation2 + $0x178] sm:$0xff]
        %v417 = vld [vmem:[#allocation2 + $0x180] sm:$0xff]
        %v418 = vld [vmem:[#allocation2 + $0x188] sm:$0xff]
        %v419 = vld [vmem:[#allocation2 + $0x190] sm:$0xff]
        %v420 = vld [vmem:[#allocation2 + $0x198] sm:$0xff]
        %v421 = vld [vmem:[#allocation2 + $0x1a0] sm:$0xff]
        %v422 = vld [vmem:[#allocation2 + $0x1a8] sm:$0xff]
        %v423 = vld [vmem:[#allocation2 + $0x1b0] sm:$0xff]
        %v424 = vld [vmem:[#allocation2 + $0x1b8] sm:$0xff]
        %v425 = vld [vmem:[#allocation2 + $0x1c0] sm:$0xff]
        %v426 = vld [vmem:[#allocation2 + $0x1c8] sm:$0xff]
        %v427 = vld [vmem:[#allocation2 + $0x1d0] sm:$0xff]
        %v428 = vld [vmem:[#allocation2 + $0x1d8] sm:$0xff]
        %v429 = vld [vmem:[#allocation2 + $0x1e0] sm:$0xff]
        %v430 = vld [vmem:[#allocation2 + $0x1e8] sm:$0xff]
        %v431 = vld [vmem:[#allocation2 + $0x1f0] sm:$0xff]
        %v432 = vld [vmem:[#allocation2 + $0x1f8] sm:$0xff]
        %v433 = vld [vmem:[%s295] sm:$0xff]
        %v434 = vld [vmem:[%s295 + $0x8] sm:$0xff]
        %v435 = vld [vmem:[%s295 + $0x10] sm:$0xff]
        %v436 = vld [vmem:[%s295 + $0x18] sm:$0xff]
        %v437 = vld [vmem:[%s295 + $0x20] sm:$0xff]
        %v438 = vld [vmem:[%s295 + $0x28] sm:$0xff]
        %v439 = vld [vmem:[%s295 + $0x30] sm:$0xff]
        %v440 = vld [vmem:[%s295 + $0x38] sm:$0xff]
        %v441 = vld [vmem:[%s295 + $0x40] sm:$0xff]
        %v442 = vld [vmem:[%s295 + $0x48] sm:$0xff]
        %v443 = vld [vmem:[%s295 + $0x50] sm:$0xff]
        %v444 = vld [vmem:[%s295 + $0x58] sm:$0xff]
        %v445 = vld [vmem:[%s295 + $0x60] sm:$0xff]
        %v446 = vld [vmem:[%s295 + $0x68] sm:$0xff]
        %v447 = vld [vmem:[%s295 + $0x70] sm:$0xff]
        %v448 = vld [vmem:[%s295 + $0x78] sm:$0xff]
        %v449 = vld [vmem:[%s295 + $0x80] sm:$0xff]
        %v450 = vld [vmem:[%s295 + $0x88] sm:$0xff]
        %v451 = vld [vmem:[%s295 + $0x90] sm:$0xff]
        %v452 = vld [vmem:[%s295 + $0x98] sm:$0xff]
        %v453 = vld [vmem:[%s295 + $0xa0] sm:$0xff]
        %v454 = vld [vmem:[%s295 + $0xa8] sm:$0xff]
        %v455 = vld [vmem:[%s295 + $0xb0] sm:$0xff]
        %v456 = vld [vmem:[%s295 + $0xb8] sm:$0xff]
        %v457 = vld [vmem:[%s295 + $0xc0] sm:$0xff]
        %v458 = vld [vmem:[%s295 + $0xc8] sm:$0xff]
        %v459 = vld [vmem:[%s295 + $0xd0] sm:$0xff]
        %v460 = vld [vmem:[%s295 + $0xd8] sm:$0xff]
        %v461 = vld [vmem:[%s295 + $0xe0] sm:$0xff]
        %v462 = vld [vmem:[%s295 + $0xe8] sm:$0xff]
        %v463 = vld [vmem:[%s295 + $0xf0] sm:$0xff]
        %v464 = vld [vmem:[%s295 + $0xf8] sm:$0xff]
        %v465 = vld [vmem:[%s295 + $0x100] sm:$0xff]
        %v466 = vld [vmem:[%s295 + $0x108] sm:$0xff]
        %v467 = vld [vmem:[%s295 + $0x110] sm:$0xff]
        %v468 = vld [vmem:[%s295 + $0x118] sm:$0xff]
        %v469 = vld [vmem:[%s295 + $0x120] sm:$0xff]
        %v470 = vld [vmem:[%s295 + $0x128] sm:$0xff]
        %v471 = vld [vmem:[%s295 + $0x130] sm:$0xff]
        %v472 = vld [vmem:[%s295 + $0x138] sm:$0xff]
        %v473 = vld [vmem:[%s295 + $0x140] sm:$0xff]
        %v474 = vld [vmem:[%s295 + $0x148] sm:$0xff]
        %v475 = vld [vmem:[%s295 + $0x150] sm:$0xff]
        %v476 = vld [vmem:[%s295 + $0x158] sm:$0xff]
        %v477 = vld [vmem:[%s295 + $0x160] sm:$0xff]
        %v478 = vld [vmem:[%s295 + $0x168] sm:$0xff]
        %v479 = vld [vmem:[%s295 + $0x170] sm:$0xff]
        %v480 = vld [vmem:[%s295 + $0x178] sm:$0xff]
        %v481 = vld [vmem:[%s295 + $0x180] sm:$0xff]
        %v482 = vld [vmem:[%s295 + $0x188] sm:$0xff]
        %v483 = vld [vmem:[%s295 + $0x190] sm:$0xff]
        %v484 = vld [vmem:[%s295 + $0x198] sm:$0xff]
        %v485 = vld [vmem:[%s295 + $0x1a0] sm:$0xff]
        %v486 = vld [vmem:[%s295 + $0x1a8] sm:$0xff]
        %v487 = vld [vmem:[%s295 + $0x1b0] sm:$0xff]
        %v488 = vld [vmem:[%s295 + $0x1b8] sm:$0xff]
        %v489 = vld [vmem:[%s295 + $0x1c0] sm:$0xff]
        %v490 = vld [vmem:[%s295 + $0x1c8] sm:$0xff]
        %v491 = vld [vmem:[%s295 + $0x1d0] sm:$0xff]
        %v492 = vld [vmem:[%s295 + $0x1d8] sm:$0xff]
        %v493 = vld [vmem:[%s295 + $0x1e0] sm:$0xff]
        %v494 = vld [vmem:[%s295 + $0x1e8] sm:$0xff]
        %v495 = vld [vmem:[%s295 + $0x1f0] sm:$0xff]
        %v496 = vld [vmem:[%s295 + $0x1f8] sm:$0xff]
        %v497 = vld [vmem:[%s295 + $0x200] sm:$0xff]
        %v498 = vld [vmem:[%s295 + $0x208] sm:$0xff]
        %v499 = vld [vmem:[%s295 + $0x210] sm:$0xff]
        %v500 = vld [vmem:[%s295 + $0x218] sm:$0xff]
        %v501 = vld [vmem:[%s295 + $0x220] sm:$0xff]
        %v502 = vld [vmem:[%s295 + $0x228] sm:$0xff]
        %v503 = vld [vmem:[%s295 + $0x230] sm:$0xff]
        %v504 = vld [vmem:[%s295 + $0x238] sm:$0xff]
        %v505 = vld [vmem:[%s295 + $0x240] sm:$0xff]
        %v506 = vld [vmem:[%s295 + $0x248] sm:$0xff]
        %v507 = vld [vmem:[%s295 + $0x250] sm:$0xff]
        %v508 = vld [vmem:[%s295 + $0x258] sm:$0xff]
        %v509 = vld [vmem:[%s295 + $0x260] sm:$0xff]
        %v510 = vld [vmem:[%s295 + $0x268] sm:$0xff]
        %v511 = vld [vmem:[%s295 + $0x270] sm:$0xff]
        %v512 = vld [vmem:[%s295 + $0x278] sm:$0xff]
        %v513 = vld [vmem:[%s295 + $0x280] sm:$0xff]
        %v514 = vld [vmem:[%s295 + $0x288] sm:$0xff]
        %v515 = vld [vmem:[%s295 + $0x290] sm:$0xff]
        %v516 = vld [vmem:[%s295 + $0x298] sm:$0xff]
        %v517 = vld [vmem:[%s295 + $0x2a0] sm:$0xff]
        %v518 = vld [vmem:[%s295 + $0x2a8] sm:$0xff]
        %v519 = vld [vmem:[%s295 + $0x2b0] sm:$0xff]
        %v520 = vld [vmem:[%s295 + $0x2b8] sm:$0xff]
        %v521 = vld [vmem:[%s295 + $0x2c0] sm:$0xff]
        %v522 = vld [vmem:[%s295 + $0x2c8] sm:$0xff]
        %v523 = vld [vmem:[%s295 + $0x2d0] sm:$0xff]
        %v524 = vld [vmem:[%s295 + $0x2d8] sm:$0xff]
        %v525 = vld [vmem:[%s295 + $0x2e0] sm:$0xff]
        %v526 = vld [vmem:[%s295 + $0x2e8] sm:$0xff]
        %v527 = vld [vmem:[%s295 + $0x2f0] sm:$0xff]
        %v528 = vld [vmem:[%s295 + $0x2f8] sm:$0xff]
        %v529 = vld [vmem:[%s295 + $0x300] sm:$0xff]
        %v530 = vld [vmem:[%s295 + $0x308] sm:$0xff]
        %v531 = vld [vmem:[%s295 + $0x310] sm:$0xff]
        %v532 = vld [vmem:[%s295 + $0x318] sm:$0xff]
        %v533 = vld [vmem:[%s295 + $0x320] sm:$0xff]
        %v534 = vld [vmem:[%s295 + $0x328] sm:$0xff]
        %v535 = vld [vmem:[%s295 + $0x330] sm:$0xff]
        %v536 = vld [vmem:[%s295 + $0x338] sm:$0xff]
        %v537 = vld [vmem:[%s295 + $0x340] sm:$0xff]
        %v538 = vld [vmem:[%s295 + $0x348] sm:$0xff]
        %v539 = vld [vmem:[%s295 + $0x350] sm:$0xff]
        %v540 = vld [vmem:[%s295 + $0x358] sm:$0xff]
        %v541 = vld [vmem:[%s295 + $0x360] sm:$0xff]
        %v542 = vld [vmem:[%s295 + $0x368] sm:$0xff]
        %v543 = vld [vmem:[%s295 + $0x370] sm:$0xff]
        %v544 = vld [vmem:[%s295 + $0x378] sm:$0xff]
        %v545 = vld [vmem:[%s295 + $0x380] sm:$0xff]
        %v546 = vld [vmem:[%s295 + $0x388] sm:$0xff]
        %v547 = vld [vmem:[%s295 + $0x390] sm:$0xff]
        %v548 = vld [vmem:[%s295 + $0x398] sm:$0xff]
        %v549 = vld [vmem:[%s295 + $0x3a0] sm:$0xff]
        %v550 = vld [vmem:[%s295 + $0x3a8] sm:$0xff]
        %v551 = vld [vmem:[%s295 + $0x3b0] sm:$0xff]
        %v552 = vld [vmem:[%s295 + $0x3b8] sm:$0xff]
        %v553 = vld [vmem:[%s295 + $0x3c0] sm:$0xff]
        %v554 = vld [vmem:[%s295 + $0x3c8] sm:$0xff]
        %v555 = vld [vmem:[%s295 + $0x3d0] sm:$0xff]
        %v556 = vld [vmem:[%s295 + $0x3d8] sm:$0xff]
        %v557 = vld [vmem:[%s295 + $0x3e0] sm:$0xff]
        %v558 = vld [vmem:[%s295 + $0x3e8] sm:$0xff]
        %v559 = vld [vmem:[%s295 + $0x3f0] sm:$0xff]
        %v560 = vld [vmem:[%s295 + $0x3f8] sm:$0xff]
        %v561 = vld [vmem:[%s295 + $0x400] sm:$0xff]
        %v562 = vld [vmem:[%s295 + $0x408] sm:$0xff]
        %v563 = vld [vmem:[%s295 + $0x410] sm:$0xff]
        %v564 = vld [vmem:[%s295 + $0x418] sm:$0xff]
        %v565 = vld [vmem:[%s295 + $0x420] sm:$0xff]
        %v566 = vld [vmem:[%s295 + $0x428] sm:$0xff]
        %v567 = vld [vmem:[%s295 + $0x430] sm:$0xff]
        %v568 = vld [vmem:[%s295 + $0x438] sm:$0xff]
        %v569 = vld [vmem:[%s295 + $0x440] sm:$0xff]
        %v570 = vld [vmem:[%s295 + $0x448] sm:$0xff]
        %v571 = vld [vmem:[%s295 + $0x450] sm:$0xff]
        %v572 = vld [vmem:[%s295 + $0x458] sm:$0xff]
        %v573 = vld [vmem:[%s295 + $0x460] sm:$0xff]
        %v574 = vld [vmem:[%s295 + $0x468] sm:$0xff]
        %v575 = vld [vmem:[%s295 + $0x470] sm:$0xff]
        %v576 = vld [vmem:[%s295 + $0x478] sm:$0xff]
        %v577 = vld [vmem:[%s295 + $0x480] sm:$0xff]
        %v578 = vld [vmem:[%s295 + $0x488] sm:$0xff]
        %v579 = vld [vmem:[%s295 + $0x490] sm:$0xff]
        %v580 = vld [vmem:[%s295 + $0x498] sm:$0xff]
        %v581 = vld [vmem:[%s295 + $0x4a0] sm:$0xff]
        %v582 = vld [vmem:[%s295 + $0x4a8] sm:$0xff]
        %v583 = vld [vmem:[%s295 + $0x4b0] sm:$0xff]
        %v584 = vld [vmem:[%s295 + $0x4b8] sm:$0xff]
        %v585 = vld [vmem:[%s295 + $0x4c0] sm:$0xff]
        %v586 = vld [vmem:[%s295 + $0x4c8] sm:$0xff]
        %v587 = vld [vmem:[%s295 + $0x4d0] sm:$0xff]
        %v588 = vld [vmem:[%s295 + $0x4d8] sm:$0xff]
        %v589 = vld [vmem:[%s295 + $0x4e0] sm:$0xff]
        %v590 = vld [vmem:[%s295 + $0x4e8] sm:$0xff]
        %v591 = vld [vmem:[%s295 + $0x4f0] sm:$0xff]
        %v592 = vld [vmem:[%s295 + $0x4f8] sm:$0xff]
        %v593 = vld [vmem:[%s295 + $0x500] sm:$0xff]
        %v594 = vld [vmem:[%s295 + $0x508] sm:$0xff]
        %v595 = vld [vmem:[%s295 + $0x510] sm:$0xff]
        %v596 = vld [vmem:[%s295 + $0x518] sm:$0xff]
        %v597 = vld [vmem:[%s295 + $0x520] sm:$0xff]
        %v598 = vld [vmem:[%s295 + $0x528] sm:$0xff]
        %v599 = vld [vmem:[%s295 + $0x530] sm:$0xff]
        %v600 = vld [vmem:[%s295 + $0x538] sm:$0xff]
        %v601 = vld [vmem:[%s295 + $0x540] sm:$0xff]
        %v602 = vld [vmem:[%s295 + $0x548] sm:$0xff]
        %v603 = vld [vmem:[%s295 + $0x550] sm:$0xff]
        %v604 = vld [vmem:[%s295 + $0x558] sm:$0xff]
        %v605 = vld [vmem:[%s295 + $0x560] sm:$0xff]
        %v606 = vld [vmem:[%s295 + $0x568] sm:$0xff]
        %v607 = vld [vmem:[%s295 + $0x570] sm:$0xff]
        %v608 = vld [vmem:[%s295 + $0x578] sm:$0xff]
        %v609 = vld [vmem:[%s295 + $0x580] sm:$0xff]
        %v610 = vld [vmem:[%s295 + $0x588] sm:$0xff]
        %v611 = vld [vmem:[%s295 + $0x590] sm:$0xff]
        %v612 = vld [vmem:[%s295 + $0x598] sm:$0xff]
        %v613 = vld [vmem:[%s295 + $0x5a0] sm:$0xff]
        %v614 = vld [vmem:[%s295 + $0x5a8] sm:$0xff]
        %v615 = vld [vmem:[%s295 + $0x5b0] sm:$0xff]
        %v616 = vld [vmem:[%s295 + $0x5b8] sm:$0xff]
        %v617 = vld [vmem:[%s295 + $0x5c0] sm:$0xff]
        %v618 = vld [vmem:[%s295 + $0x5c8] sm:$0xff]
        %v619 = vld [vmem:[%s295 + $0x5d0] sm:$0xff]
        %v620 = vld [vmem:[%s295 + $0x5d8] sm:$0xff]
        %v621 = vld [vmem:[%s295 + $0x5e0] sm:$0xff]
        %v622 = vld [vmem:[%s295 + $0x5e8] sm:$0xff]
        %v623 = vld [vmem:[%s295 + $0x5f0] sm:$0xff]
        %v624 = vld [vmem:[%s295 + $0x5f8] sm:$0xff]
        %v625 = vld [vmem:[%s295 + $0x600] sm:$0xff]
        %v626 = vld [vmem:[%s295 + $0x608] sm:$0xff]
        %v627 = vld [vmem:[%s295 + $0x610] sm:$0xff]
        %v628 = vld [vmem:[%s295 + $0x618] sm:$0xff]
        %v629 = vld [vmem:[%s295 + $0x620] sm:$0xff]
        %v630 = vld [vmem:[%s295 + $0x628] sm:$0xff]
        %v631 = vld [vmem:[%s295 + $0x630] sm:$0xff]
        %v632 = vld [vmem:[%s295 + $0x638] sm:$0xff]
        %v633 = vld [vmem:[%s295 + $0x640] sm:$0xff]
        %v634 = vld [vmem:[%s295 + $0x648] sm:$0xff]
        %v635 = vld [vmem:[%s295 + $0x650] sm:$0xff]
        %v636 = vld [vmem:[%s295 + $0x658] sm:$0xff]
        %v637 = vld [vmem:[%s295 + $0x660] sm:$0xff]
        %v638 = vld [vmem:[%s295 + $0x668] sm:$0xff]
        %v639 = vld [vmem:[%s295 + $0x670] sm:$0xff]
        %v640 = vld [vmem:[%s295 + $0x678] sm:$0xff]
        %v641 = vld [vmem:[%s295 + $0x680] sm:$0xff]
        %v642 = vld [vmem:[%s295 + $0x688] sm:$0xff]
        %v643 = vld [vmem:[%s295 + $0x690] sm:$0xff]
        %v644 = vld [vmem:[%s295 + $0x698] sm:$0xff]
        %v645 = vld [vmem:[%s295 + $0x6a0] sm:$0xff]
        %v646 = vld [vmem:[%s295 + $0x6a8] sm:$0xff]
        %v647 = vld [vmem:[%s295 + $0x6b0] sm:$0xff]
        %v648 = vld [vmem:[%s295 + $0x6b8] sm:$0xff]
        %v649 = vld [vmem:[%s295 + $0x6c0] sm:$0xff]
        %v650 = vld [vmem:[%s295 + $0x6c8] sm:$0xff]
        %v651 = vld [vmem:[%s295 + $0x6d0] sm:$0xff]
        %v652 = vld [vmem:[%s295 + $0x6d8] sm:$0xff]
        %v653 = vld [vmem:[%s295 + $0x6e0] sm:$0xff]
        %v654 = vld [vmem:[%s295 + $0x6e8] sm:$0xff]
        %v655 = vld [vmem:[%s295 + $0x6f0] sm:$0xff]
        %v656 = vld [vmem:[%s295 + $0x6f8] sm:$0xff]
        %v657 = vld [vmem:[%s295 + $0x700] sm:$0xff]
        %v658 = vld [vmem:[%s295 + $0x708] sm:$0xff]
        %v659 = vld [vmem:[%s295 + $0x710] sm:$0xff]
        %v660 = vld [vmem:[%s295 + $0x718] sm:$0xff]
        %v661 = vld [vmem:[%s295 + $0x720] sm:$0xff]
        %v662 = vld [vmem:[%s295 + $0x728] sm:$0xff]
        %v663 = vld [vmem:[%s295 + $0x730] sm:$0xff]
        %v664 = vld [vmem:[%s295 + $0x738] sm:$0xff]
        %v665 = vld [vmem:[%s295 + $0x740] sm:$0xff]
        %v666 = vld [vmem:[%s295 + $0x748] sm:$0xff]
        %v667 = vld [vmem:[%s295 + $0x750] sm:$0xff]
        %v668 = vld [vmem:[%s295 + $0x758] sm:$0xff]
        %v669 = vld [vmem:[%s295 + $0x760] sm:$0xff]
        %v670 = vld [vmem:[%s295 + $0x768] sm:$0xff]
        %v671 = vld [vmem:[%s295 + $0x770] sm:$0xff]
        %v672 = vld [vmem:[%s295 + $0x778] sm:$0xff]
        %v673 = vld [vmem:[%s295 + $0x780] sm:$0xff]
        %v674 = vld [vmem:[%s295 + $0x788] sm:$0xff]
        %v675 = vld [vmem:[%s295 + $0x790] sm:$0xff]
        %v676 = vld [vmem:[%s295 + $0x798] sm:$0xff]
        %v677 = vld [vmem:[%s295 + $0x7a0] sm:$0xff]
        %v678 = vld [vmem:[%s295 + $0x7a8] sm:$0xff]
        %v679 = vld [vmem:[%s295 + $0x7b0] sm:$0xff]
        %v680 = vld [vmem:[%s295 + $0x7b8] sm:$0xff]
        %v681 = vld [vmem:[%s295 + $0x7c0] sm:$0xff]
        %v682 = vld [vmem:[%s295 + $0x7c8] sm:$0xff]
        %v683 = vld [vmem:[%s295 + $0x7d0] sm:$0xff]
        %v684 = vld [vmem:[%s295 + $0x7d8] sm:$0xff]
        %v685 = vld [vmem:[%s295 + $0x7e0] sm:$0xff]
        %v686 = vld [vmem:[%s295 + $0x7e8] sm:$0xff]
        %v687 = vld [vmem:[%s295 + $0x7f0] sm:$0xff]
        %v688 = vld [vmem:[%s295 + $0x7f8] sm:$0xff]
        %v689 = vld [vmem:[%s295 + $0x800] sm:$0xff]
        %v690 = vld [vmem:[%s295 + $0x808] sm:$0xff]
        %v691 = vld [vmem:[%s295 + $0x810] sm:$0xff]
        %v692 = vld [vmem:[%s295 + $0x818] sm:$0xff]
        %v693 = vld [vmem:[%s295 + $0x820] sm:$0xff]
        %v694 = vld [vmem:[%s295 + $0x828] sm:$0xff]
        %v695 = vld [vmem:[%s295 + $0x830] sm:$0xff]
        %v696 = vld [vmem:[%s295 + $0x838] sm:$0xff]
        %v697 = vld [vmem:[%s295 + $0x840] sm:$0xff]
        %v698 = vld [vmem:[%s295 + $0x848] sm:$0xff]
        %v699 = vld [vmem:[%s295 + $0x850] sm:$0xff]
        %v700 = vld [vmem:[%s295 + $0x858] sm:$0xff]
        %v701 = vld [vmem:[%s295 + $0x860] sm:$0xff]
        %v702 = vld [vmem:[%s295 + $0x868] sm:$0xff]
        %v703 = vld [vmem:[%s295 + $0x870] sm:$0xff]
        %v704 = vld [vmem:[%s295 + $0x878] sm:$0xff]
        %v705 = vld [vmem:[%s295 + $0x880] sm:$0xff]
        %v706 = vld [vmem:[%s295 + $0x888] sm:$0xff]
        %v707 = vld [vmem:[%s295 + $0x890] sm:$0xff]
        %v708 = vld [vmem:[%s295 + $0x898] sm:$0xff]
        %v709 = vld [vmem:[%s295 + $0x8a0] sm:$0xff]
        %v710 = vld [vmem:[%s295 + $0x8a8] sm:$0xff]
        %v711 = vld [vmem:[%s295 + $0x8b0] sm:$0xff]
        %v712 = vld [vmem:[%s295 + $0x8b8] sm:$0xff]
        %v713 = vld [vmem:[%s295 + $0x8c0] sm:$0xff]
        %v714 = vld [vmem:[%s295 + $0x8c8] sm:$0xff]
        %v715 = vld [vmem:[%s295 + $0x8d0] sm:$0xff]
        %v716 = vld [vmem:[%s295 + $0x8d8] sm:$0xff]
        %v717 = vld [vmem:[%s295 + $0x8e0] sm:$0xff]
        %v718 = vld [vmem:[%s295 + $0x8e8] sm:$0xff]
        %v719 = vld [vmem:[%s295 + $0x8f0] sm:$0xff]
        %v720 = vld [vmem:[%s295 + $0x8f8] sm:$0xff]
        %v721 = vld [vmem:[%s295 + $0x900] sm:$0xff]
        %v722 = vld [vmem:[%s295 + $0x908] sm:$0xff]
        %v723 = vld [vmem:[%s295 + $0x910] sm:$0xff]
        %v724 = vld [vmem:[%s295 + $0x918] sm:$0xff]
        %v725 = vld [vmem:[%s295 + $0x920] sm:$0xff]
        %v726 = vld [vmem:[%s295 + $0x928] sm:$0xff]
        %v727 = vld [vmem:[%s295 + $0x930] sm:$0xff]
        %v728 = vld [vmem:[%s295 + $0x938] sm:$0xff]
        %v729 = vld [vmem:[%s295 + $0x940] sm:$0xff]
        %v730 = vld [vmem:[%s295 + $0x948] sm:$0xff]
        %v731 = vld [vmem:[%s295 + $0x950] sm:$0xff]
        %v732 = vld [vmem:[%s295 + $0x958] sm:$0xff]
        %v733 = vld [vmem:[%s295 + $0x960] sm:$0xff]
        %v734 = vld [vmem:[%s295 + $0x968] sm:$0xff]
        %v735 = vld [vmem:[%s295 + $0x970] sm:$0xff]
        %v736 = vld [vmem:[%s295 + $0x978] sm:$0xff]
        %v737 = vld [vmem:[%s295 + $0x980] sm:$0xff]
        %v738 = vld [vmem:[%s295 + $0x988] sm:$0xff]
        %v739 = vld [vmem:[%s295 + $0x990] sm:$0xff]
        %v740 = vld [vmem:[%s295 + $0x998] sm:$0xff]
        %v741 = vld [vmem:[%s295 + $0x9a0] sm:$0xff]
        %v742 = vld [vmem:[%s295 + $0x9a8] sm:$0xff]
        %v743 = vld [vmem:[%s295 + $0x9b0] sm:$0xff]
        %v744 = vld [vmem:[%s295 + $0x9b8] sm:$0xff]
        %v745 = vld [vmem:[%s295 + $0x9c0] sm:$0xff]
        %v746 = vld [vmem:[%s295 + $0x9c8] sm:$0xff]
        %v747 = vld [vmem:[%s295 + $0x9d0] sm:$0xff]
        %v748 = vld [vmem:[%s295 + $0x9d8] sm:$0xff]
        %v749 = vld [vmem:[%s295 + $0x9e0] sm:$0xff]
        %v750 = vld [vmem:[%s295 + $0x9e8] sm:$0xff]
        %v751 = vld [vmem:[%s295 + $0x9f0] sm:$0xff]
        %v752 = vld [vmem:[%s295 + $0x9f8] sm:$0xff]
        %v753 = vld [vmem:[%s295 + $0xa00] sm:$0xff]
        %v754 = vld [vmem:[%s295 + $0xa08] sm:$0xff]
        %v755 = vld [vmem:[%s295 + $0xa10] sm:$0xff]
        %v756 = vld [vmem:[%s295 + $0xa18] sm:$0xff]
        %v757 = vld [vmem:[%s295 + $0xa20] sm:$0xff]
        %v758 = vld [vmem:[%s295 + $0xa28] sm:$0xff]
        %v759 = vld [vmem:[%s295 + $0xa30] sm:$0xff]
        %v760 = vld [vmem:[%s295 + $0xa38] sm:$0xff]
        %v761 = vld [vmem:[%s295 + $0xa40] sm:$0xff]
        %v762 = vld [vmem:[%s295 + $0xa48] sm:$0xff]
        %v763 = vld [vmem:[%s295 + $0xa50] sm:$0xff]
        %v764 = vld [vmem:[%s295 + $0xa58] sm:$0xff]
        %v765 = vld [vmem:[%s295 + $0xa60] sm:$0xff]
        %v766 = vld [vmem:[%s295 + $0xa68] sm:$0xff]
        %v767 = vld [vmem:[%s295 + $0xa70] sm:$0xff]
        %v768 = vld [vmem:[%s295 + $0xa78] sm:$0xff]
        %v769 = vld [vmem:[%s295 + $0xa80] sm:$0xff]
        %v770 = vld [vmem:[%s295 + $0xa88] sm:$0xff]
        %v771 = vld [vmem:[%s295 + $0xa90] sm:$0xff]
        %v772 = vld [vmem:[%s295 + $0xa98] sm:$0xff]
        %v773 = vld [vmem:[%s295 + $0xaa0] sm:$0xff]
        %v774 = vld [vmem:[%s295 + $0xaa8] sm:$0xff]
        %v775 = vld [vmem:[%s295 + $0xab0] sm:$0xff]
        %v776 = vld [vmem:[%s295 + $0xab8] sm:$0xff]
        %v777 = vld [vmem:[%s295 + $0xac0] sm:$0xff]
        %v778 = vld [vmem:[%s295 + $0xac8] sm:$0xff]
        %v779 = vld [vmem:[%s295 + $0xad0] sm:$0xff]
        %v780 = vld [vmem:[%s295 + $0xad8] sm:$0xff]
        %v781 = vld [vmem:[%s295 + $0xae0] sm:$0xff]
        %v782 = vld [vmem:[%s295 + $0xae8] sm:$0xff]
        %v783 = vld [vmem:[%s295 + $0xaf0] sm:$0xff]
        %v784 = vld [vmem:[%s295 + $0xaf8] sm:$0xff]
        %v785 = vld [vmem:[%s295 + $0xb00] sm:$0xff]
        %v786 = vld [vmem:[%s295 + $0xb08] sm:$0xff]
        %v787 = vld [vmem:[%s295 + $0xb10] sm:$0xff]
        %v788 = vld [vmem:[%s295 + $0xb18] sm:$0xff]
        %v789 = vld [vmem:[%s295 + $0xb20] sm:$0xff]
        %v790 = vld [vmem:[%s295 + $0xb28] sm:$0xff]
        %v791 = vld [vmem:[%s295 + $0xb30] sm:$0xff]
        %v792 = vld [vmem:[%s295 + $0xb38] sm:$0xff]
        %v793 = vld [vmem:[%s295 + $0xb40] sm:$0xff]
        %v794 = vld [vmem:[%s295 + $0xb48] sm:$0xff]
        %v795 = vld [vmem:[%s295 + $0xb50] sm:$0xff]
        %v796 = vld [vmem:[%s295 + $0xb58] sm:$0xff]
        %v797 = vld [vmem:[%s295 + $0xb60] sm:$0xff]
        %v798 = vld [vmem:[%s295 + $0xb68] sm:$0xff]
        %v799 = vld [vmem:[%s295 + $0xb70] sm:$0xff]
        %v800 = vld [vmem:[%s295 + $0xb78] sm:$0xff]
        %v801 = vld [vmem:[%s295 + $0xb80] sm:$0xff]
        %v802 = vld [vmem:[%s295 + $0xb88] sm:$0xff]
        %v803 = vld [vmem:[%s295 + $0xb90] sm:$0xff]
        %v804 = vld [vmem:[%s295 + $0xb98] sm:$0xff]
        %v805 = vld [vmem:[%s295 + $0xba0] sm:$0xff]
        %v806 = vld [vmem:[%s295 + $0xba8] sm:$0xff]
        %v807 = vld [vmem:[%s295 + $0xbb0] sm:$0xff]
        %v808 = vld [vmem:[%s295 + $0xbb8] sm:$0xff]
        %v809 = vld [vmem:[%s295 + $0xbc0] sm:$0xff]
        %v810 = vld [vmem:[%s295 + $0xbc8] sm:$0xff]
        %v811 = vld [vmem:[%s295 + $0xbd0] sm:$0xff]
        %v812 = vld [vmem:[%s295 + $0xbd8] sm:$0xff]
        %v813 = vld [vmem:[%s295 + $0xbe0] sm:$0xff]
        %v814 = vld [vmem:[%s295 + $0xbe8] sm:$0xff]
        %v815 = vld [vmem:[%s295 + $0xbf0] sm:$0xff]
        %v816 = vld [vmem:[%s295 + $0xbf8] sm:$0xff]
        %v817 = vld [vmem:[%s295 + $0xc00] sm:$0xff]
        %v818 = vld [vmem:[%s295 + $0xc08] sm:$0xff]
        %v819 = vld [vmem:[%s295 + $0xc10] sm:$0xff]
        %v820 = vld [vmem:[%s295 + $0xc18] sm:$0xff]
        %v821 = vld [vmem:[%s295 + $0xc20] sm:$0xff]
        %v822 = vld [vmem:[%s295 + $0xc28] sm:$0xff]
        %v823 = vld [vmem:[%s295 + $0xc30] sm:$0xff]
        %v824 = vld [vmem:[%s295 + $0xc38] sm:$0xff]
        %v825 = vld [vmem:[%s295 + $0xc40] sm:$0xff]
        %v826 = vld [vmem:[%s295 + $0xc48] sm:$0xff]
        %v827 = vld [vmem:[%s295 + $0xc50] sm:$0xff]
        %v828 = vld [vmem:[%s295 + $0xc58] sm:$0xff]
        %v829 = vld [vmem:[%s295 + $0xc60] sm:$0xff]
        %v830 = vld [vmem:[%s295 + $0xc68] sm:$0xff]
        %v831 = vld [vmem:[%s295 + $0xc70] sm:$0xff]
        %v832 = vld [vmem:[%s295 + $0xc78] sm:$0xff]
        %v833 = vld [vmem:[%s295 + $0xc80] sm:$0xff]
        %v834 = vld [vmem:[%s295 + $0xc88] sm:$0xff]
        %v835 = vld [vmem:[%s295 + $0xc90] sm:$0xff]
        %v836 = vld [vmem:[%s295 + $0xc98] sm:$0xff]
        %v837 = vld [vmem:[%s295 + $0xca0] sm:$0xff]
        %v838 = vld [vmem:[%s295 + $0xca8] sm:$0xff]
        %v839 = vld [vmem:[%s295 + $0xcb0] sm:$0xff]
        %v840 = vld [vmem:[%s295 + $0xcb8] sm:$0xff]
        %v841 = vld [vmem:[%s295 + $0xcc0] sm:$0xff]
        %v842 = vld [vmem:[%s295 + $0xcc8] sm:$0xff]
        %v843 = vld [vmem:[%s295 + $0xcd0] sm:$0xff]
        %v844 = vld [vmem:[%s295 + $0xcd8] sm:$0xff]
        %v845 = vld [vmem:[%s295 + $0xce0] sm:$0xff]
        %v846 = vld [vmem:[%s295 + $0xce8] sm:$0xff]
        %v847 = vld [vmem:[%s295 + $0xcf0] sm:$0xff]
        %v848 = vld [vmem:[%s295 + $0xcf8] sm:$0xff]
        %v849 = vld [vmem:[%s295 + $0xd00] sm:$0xff]
        %v850 = vld [vmem:[%s295 + $0xd08] sm:$0xff]
        %v851 = vld [vmem:[%s295 + $0xd10] sm:$0xff]
        %v852 = vld [vmem:[%s295 + $0xd18] sm:$0xff]
        %v853 = vld [vmem:[%s295 + $0xd20] sm:$0xff]
        %v854 = vld [vmem:[%s295 + $0xd28] sm:$0xff]
        %v855 = vld [vmem:[%s295 + $0xd30] sm:$0xff]
        %v856 = vld [vmem:[%s295 + $0xd38] sm:$0xff]
        %v857 = vld [vmem:[%s295 + $0xd40] sm:$0xff]
        %v858 = vld [vmem:[%s295 + $0xd48] sm:$0xff]
        %v859 = vld [vmem:[%s295 + $0xd50] sm:$0xff]
        %v860 = vld [vmem:[%s295 + $0xd58] sm:$0xff]
        %v861 = vld [vmem:[%s295 + $0xd60] sm:$0xff]
        %v862 = vld [vmem:[%s295 + $0xd68] sm:$0xff]
        %v863 = vld [vmem:[%s295 + $0xd70] sm:$0xff]
        %v864 = vld [vmem:[%s295 + $0xd78] sm:$0xff]
        %v865 = vld [vmem:[%s295 + $0xd80] sm:$0xff]
        %v866 = vld [vmem:[%s295 + $0xd88] sm:$0xff]
        %v867 = vld [vmem:[%s295 + $0xd90] sm:$0xff]
        %v868 = vld [vmem:[%s295 + $0xd98] sm:$0xff]
        %v869 = vld [vmem:[%s295 + $0xda0] sm:$0xff]
        %v870 = vld [vmem:[%s295 + $0xda8] sm:$0xff]
        %v871 = vld [vmem:[%s295 + $0xdb0] sm:$0xff]
        %v872 = vld [vmem:[%s295 + $0xdb8] sm:$0xff]
        %v873 = vld [vmem:[%s295 + $0xdc0] sm:$0xff]
        %v874 = vld [vmem:[%s295 + $0xdc8] sm:$0xff]
        %v875 = vld [vmem:[%s295 + $0xdd0] sm:$0xff]
        %v876 = vld [vmem:[%s295 + $0xdd8] sm:$0xff]
        %v877 = vld [vmem:[%s295 + $0xde0] sm:$0xff]
        %v878 = vld [vmem:[%s295 + $0xde8] sm:$0xff]
        %v879 = vld [vmem:[%s295 + $0xdf0] sm:$0xff]
        %v880 = vld [vmem:[%s295 + $0xdf8] sm:$0xff]
        %v881 = vld [vmem:[%s295 + $0xe00] sm:$0xff]
        %v882 = vld [vmem:[%s295 + $0xe08] sm:$0xff]
        %v883 = vld [vmem:[%s295 + $0xe10] sm:$0xff]
        %v884 = vld [vmem:[%s295 + $0xe18] sm:$0xff]
        %v885 = vld [vmem:[%s295 + $0xe20] sm:$0xff]
        %v886 = vld [vmem:[%s295 + $0xe28] sm:$0xff]
        %v887 = vld [vmem:[%s295 + $0xe30] sm:$0xff]
        %v888 = vld [vmem:[%s295 + $0xe38] sm:$0xff]
        %v889 = vld [vmem:[%s295 + $0xe40] sm:$0xff]
        %v890 = vld [vmem:[%s295 + $0xe48] sm:$0xff]
        %v891 = vld [vmem:[%s295 + $0xe50] sm:$0xff]
        %v892 = vld [vmem:[%s295 + $0xe58] sm:$0xff]
        %v893 = vld [vmem:[%s295 + $0xe60] sm:$0xff]
        %v894 = vld [vmem:[%s295 + $0xe68] sm:$0xff]
        %v895 = vld [vmem:[%s295 + $0xe70] sm:$0xff]
        %v896 = vld [vmem:[%s295 + $0xe78] sm:$0xff]
        %v897 = vld [vmem:[%s295 + $0xe80] sm:$0xff]
        %v898 = vld [vmem:[%s295 + $0xe88] sm:$0xff]
        %v899 = vld [vmem:[%s295 + $0xe90] sm:$0xff]
        %v900 = vld [vmem:[%s295 + $0xe98] sm:$0xff]
        %v901 = vld [vmem:[%s295 + $0xea0] sm:$0xff]
        %v902 = vld [vmem:[%s295 + $0xea8] sm:$0xff]
        %v903 = vld [vmem:[%s295 + $0xeb0] sm:$0xff]
        %v904 = vld [vmem:[%s295 + $0xeb8] sm:$0xff]
        %v905 = vld [vmem:[%s295 + $0xec0] sm:$0xff]
        %v906 = vld [vmem:[%s295 + $0xec8] sm:$0xff]
        %v907 = vld [vmem:[%s295 + $0xed0] sm:$0xff]
        %v908 = vld [vmem:[%s295 + $0xed8] sm:$0xff]
        %v909 = vld [vmem:[%s295 + $0xee0] sm:$0xff]
        %v910 = vld [vmem:[%s295 + $0xee8] sm:$0xff]
        %v911 = vld [vmem:[%s295 + $0xef0] sm:$0xff]
        %v912 = vld [vmem:[%s295 + $0xef8] sm:$0xff]
        %v913 = vld [vmem:[%s295 + $0xf00] sm:$0xff]
        %v914 = vld [vmem:[%s295 + $0xf08] sm:$0xff]
        %v915 = vld [vmem:[%s295 + $0xf10] sm:$0xff]
        %v916 = vld [vmem:[%s295 + $0xf18] sm:$0xff]
        %v917 = vld [vmem:[%s295 + $0xf20] sm:$0xff]
        %v918 = vld [vmem:[%s295 + $0xf28] sm:$0xff]
        %v919 = vld [vmem:[%s295 + $0xf30] sm:$0xff]
        %v920 = vld [vmem:[%s295 + $0xf38] sm:$0xff]
        %v921 = vld [vmem:[%s295 + $0xf40] sm:$0xff]
        %v922 = vld [vmem:[%s295 + $0xf48] sm:$0xff]
        %v923 = vld [vmem:[%s295 + $0xf50] sm:$0xff]
        %v924 = vld [vmem:[%s295 + $0xf58] sm:$0xff]
        %v925 = vld [vmem:[%s295 + $0xf60] sm:$0xff]
        %v926 = vld [vmem:[%s295 + $0xf68] sm:$0xff]
        %v927 = vld [vmem:[%s295 + $0xf70] sm:$0xff]
        %v928 = vld [vmem:[%s295 + $0xf78] sm:$0xff]
        %v929 = vld [vmem:[%s295 + $0xf80] sm:$0xff]
        %v930 = vld [vmem:[%s295 + $0xf88] sm:$0xff]
        %v931 = vld [vmem:[%s295 + $0xf90] sm:$0xff]
        %v932 = vld [vmem:[%s295 + $0xf98] sm:$0xff]
        %v933 = vld [vmem:[%s295 + $0xfa0] sm:$0xff]
        %v934 = vld [vmem:[%s295 + $0xfa8] sm:$0xff]
        %v935 = vld [vmem:[%s295 + $0xfb0] sm:$0xff]
        %v936 = vld [vmem:[%s295 + $0xfb8] sm:$0xff]
        %v937 = vld [vmem:[%s295 + $0xfc0] sm:$0xff]
        %v938 = vld [vmem:[%s295 + $0xfc8] sm:$0xff]
        %v939 = vld [vmem:[%s295 + $0xfd0] sm:$0xff]
        %v940 = vld [vmem:[%s295 + $0xfd8] sm:$0xff]
        %v941 = vld [vmem:[%s295 + $0xfe0] sm:$0xff]
        %v942 = vld [vmem:[%s295 + $0xfe8] sm:$0xff]
        %v943 = vld [vmem:[%s295 + $0xff0] sm:$0xff]
        %v944 = vld [vmem:[%s295 + $0xff8] sm:$0xff]
        %v945 = vld [vmem:[%s295 + $0x1000] sm:$0xff]
        %v946 = vld [vmem:[%s295 + $0x1008] sm:$0xff]
        %v947 = vld [vmem:[%s295 + $0x1010] sm:$0xff]
        %v948 = vld [vmem:[%s295 + $0x1018] sm:$0xff]
        %v949 = vld [vmem:[%s295 + $0x1020] sm:$0xff]
        %v950 = vld [vmem:[%s295 + $0x1028] sm:$0xff]
        %v951 = vld [vmem:[%s295 + $0x1030] sm:$0xff]
        %v952 = vld [vmem:[%s295 + $0x1038] sm:$0xff]
        %v953 = vld [vmem:[%s295 + $0x1040] sm:$0xff]
        %v954 = vld [vmem:[%s295 + $0x1048] sm:$0xff]
        %v955 = vld [vmem:[%s295 + $0x1050] sm:$0xff]
        %v956 = vld [vmem:[%s295 + $0x1058] sm:$0xff]
        %v957 = vld [vmem:[%s295 + $0x1060] sm:$0xff]
        %v958 = vld [vmem:[%s295 + $0x1068] sm:$0xff]
        %v959 = vld [vmem:[%s295 + $0x1070] sm:$0xff]
        %v960 = vld [vmem:[%s295 + $0x1078] sm:$0xff]
        %v961 = vld [vmem:[%s295 + $0x1080] sm:$0xff]
        %v962 = vld [vmem:[%s295 + $0x1088] sm:$0xff]
        %v963 = vld [vmem:[%s295 + $0x1090] sm:$0xff]
        %v964 = vld [vmem:[%s295 + $0x1098] sm:$0xff]
        %v965 = vld [vmem:[%s295 + $0x10a0] sm:$0xff]
        %v966 = vld [vmem:[%s295 + $0x10a8] sm:$0xff]
        %v967 = vld [vmem:[%s295 + $0x10b0] sm:$0xff]
        %v968 = vld [vmem:[%s295 + $0x10b8] sm:$0xff]
        %v969 = vld [vmem:[%s295 + $0x10c0] sm:$0xff]
        %v970 = vld [vmem:[%s295 + $0x10c8] sm:$0xff]
        %v971 = vld [vmem:[%s295 + $0x10d0] sm:$0xff]
        %v972 = vld [vmem:[%s295 + $0x10d8] sm:$0xff]
        %v973 = vld [vmem:[%s295 + $0x10e0] sm:$0xff]
        %v974 = vld [vmem:[%s295 + $0x10e8] sm:$0xff]
        %v975 = vld [vmem:[%s295 + $0x10f0] sm:$0xff]
        %v976 = vld [vmem:[%s295 + $0x10f8] sm:$0xff]
        %v977 = vld [vmem:[%s295 + $0x1100] sm:$0xff]
        %v978 = vld [vmem:[%s295 + $0x1108] sm:$0xff]
        %v979 = vld [vmem:[%s295 + $0x1110] sm:$0xff]
        %v980 = vld [vmem:[%s295 + $0x1118] sm:$0xff]
        %v981 = vld [vmem:[%s295 + $0x1120] sm:$0xff]
        %v982 = vld [vmem:[%s295 + $0x1128] sm:$0xff]
        %v983 = vld [vmem:[%s295 + $0x1130] sm:$0xff]
        %v984 = vld [vmem:[%s295 + $0x1138] sm:$0xff]
        %v985 = vld [vmem:[%s295 + $0x1140] sm:$0xff]
        %v986 = vld [vmem:[%s295 + $0x1148] sm:$0xff]
        %v987 = vld [vmem:[%s295 + $0x1150] sm:$0xff]
        %v988 = vld [vmem:[%s295 + $0x1158] sm:$0xff]
        %v989 = vld [vmem:[%s295 + $0x1160] sm:$0xff]
        %v990 = vld [vmem:[%s295 + $0x1168] sm:$0xff]
        %v991 = vld [vmem:[%s295 + $0x1170] sm:$0xff]
        %v992 = vld [vmem:[%s295 + $0x1178] sm:$0xff]
        %v993 = vld [vmem:[%s295 + $0x1180] sm:$0xff]
        %v994 = vld [vmem:[%s295 + $0x1188] sm:$0xff]
        %v995 = vld [vmem:[%s295 + $0x1190] sm:$0xff]
        %v996 = vld [vmem:[%s295 + $0x1198] sm:$0xff]
        %v997 = vld [vmem:[%s295 + $0x11a0] sm:$0xff]
        %v998 = vld [vmem:[%s295 + $0x11a8] sm:$0xff]
        %v999 = vld [vmem:[%s295 + $0x11b0] sm:$0xff]
        %v1000 = vld [vmem:[%s295 + $0x11b8] sm:$0xff]
        %v1001 = vld [vmem:[%s295 + $0x11c0] sm:$0xff]
        %v1002 = vld [vmem:[%s295 + $0x11c8] sm:$0xff]
        %v1003 = vld [vmem:[%s295 + $0x11d0] sm:$0xff]
        %v1004 = vld [vmem:[%s295 + $0x11d8] sm:$0xff]
        %v1005 = vld [vmem:[%s295 + $0x11e0] sm:$0xff]
        %v1006 = vld [vmem:[%s295 + $0x11e8] sm:$0xff]
        %v1007 = vld [vmem:[%s295 + $0x11f0] sm:$0xff]
        %v1008 = vld [vmem:[%s295 + $0x11f8] sm:$0xff]
        %v1009 = vld [vmem:[%s295 + $0x1200] sm:$0xff]
        %v1010 = vld [vmem:[%s295 + $0x1208] sm:$0xff]
        %v1011 = vld [vmem:[%s295 + $0x1210] sm:$0xff]
        %v1012 = vld [vmem:[%s295 + $0x1218] sm:$0xff]
        %v1013 = vld [vmem:[%s295 + $0x1220] sm:$0xff]
        %v1014 = vld [vmem:[%s295 + $0x1228] sm:$0xff]
        %v1015 = vld [vmem:[%s295 + $0x1230] sm:$0xff]
        %v1016 = vld [vmem:[%s295 + $0x1238] sm:$0xff]
        %v1017 = vld [vmem:[%s295 + $0x1240] sm:$0xff]
        %v1018 = vld [vmem:[%s295 + $0x1248] sm:$0xff]
        %v1019 = vld [vmem:[%s295 + $0x1250] sm:$0xff]
        %v1020 = vld [vmem:[%s295 + $0x1258] sm:$0xff]
        %v1021 = vld [vmem:[%s295 + $0x1260] sm:$0xff]
        %v1022 = vld [vmem:[%s295 + $0x1268] sm:$0xff]
        %v1023 = vld [vmem:[%s295 + $0x1270] sm:$0xff]
        %v1024 = vld [vmem:[%s295 + $0x1278] sm:$0xff]
        %v1025 = vld [vmem:[%s295 + $0x1280] sm:$0xff]
        %v1026 = vld [vmem:[%s295 + $0x1288] sm:$0xff]
        %v1027 = vld [vmem:[%s295 + $0x1290] sm:$0xff]
        %v1028 = vld [vmem:[%s295 + $0x1298] sm:$0xff]
        %v1029 = vld [vmem:[%s295 + $0x12a0] sm:$0xff]
        %v1030 = vld [vmem:[%s295 + $0x12a8] sm:$0xff]
        %v1031 = vld [vmem:[%s295 + $0x12b0] sm:$0xff]
        %v1032 = vld [vmem:[%s295 + $0x12b8] sm:$0xff]
        %v1033 = vld [vmem:[%s295 + $0x12c0] sm:$0xff]
        %v1034 = vld [vmem:[%s295 + $0x12c8] sm:$0xff]
        %v1035 = vld [vmem:[%s295 + $0x12d0] sm:$0xff]
        %v1036 = vld [vmem:[%s295 + $0x12d8] sm:$0xff]
        %v1037 = vld [vmem:[%s295 + $0x12e0] sm:$0xff]
        %v1038 = vld [vmem:[%s295 + $0x12e8] sm:$0xff]
        %v1039 = vld [vmem:[%s295 + $0x12f0] sm:$0xff]
        %v1040 = vld [vmem:[%s295 + $0x12f8] sm:$0xff]
        %v1041 = vld [vmem:[%s295 + $0x1300] sm:$0xff]
        %v1042 = vld [vmem:[%s295 + $0x1308] sm:$0xff]
        %v1043 = vld [vmem:[%s295 + $0x1310] sm:$0xff]
        %v1044 = vld [vmem:[%s295 + $0x1318] sm:$0xff]
        %v1045 = vld [vmem:[%s295 + $0x1320] sm:$0xff]
        %v1046 = vld [vmem:[%s295 + $0x1328] sm:$0xff]
        %v1047 = vld [vmem:[%s295 + $0x1330] sm:$0xff]
        %v1048 = vld [vmem:[%s295 + $0x1338] sm:$0xff]
        %v1049 = vld [vmem:[%s295 + $0x1340] sm:$0xff]
        %v1050 = vld [vmem:[%s295 + $0x1348] sm:$0xff]
        %v1051 = vld [vmem:[%s295 + $0x1350] sm:$0xff]
        %v1052 = vld [vmem:[%s295 + $0x1358] sm:$0xff]
        %v1053 = vld [vmem:[%s295 + $0x1360] sm:$0xff]
        %v1054 = vld [vmem:[%s295 + $0x1368] sm:$0xff]
        %v1055 = vld [vmem:[%s295 + $0x1370] sm:$0xff]
        %v1056 = vld [vmem:[%s295 + $0x1378] sm:$0xff]
        %v1057 = vld [vmem:[%s295 + $0x1380] sm:$0xff]
        %v1058 = vld [vmem:[%s295 + $0x1388] sm:$0xff]
        %v1059 = vld [vmem:[%s295 + $0x1390] sm:$0xff]
        %v1060 = vld [vmem:[%s295 + $0x1398] sm:$0xff]
        %v1061 = vld [vmem:[%s295 + $0x13a0] sm:$0xff]
        %v1062 = vld [vmem:[%s295 + $0x13a8] sm:$0xff]
        %v1063 = vld [vmem:[%s295 + $0x13b0] sm:$0xff]
        %v1064 = vld [vmem:[%s295 + $0x13b8] sm:$0xff]
        %v1065 = vld [vmem:[%s295 + $0x13c0] sm:$0xff]
        %v1066 = vld [vmem:[%s295 + $0x13c8] sm:$0xff]
        %v1067 = vld [vmem:[%s295 + $0x13d0] sm:$0xff]
        %v1068 = vld [vmem:[%s295 + $0x13d8] sm:$0xff]
        %v1069 = vld [vmem:[%s295 + $0x13e0] sm:$0xff]
        %v1070 = vld [vmem:[%s295 + $0x13e8] sm:$0xff]
        %v1071 = vld [vmem:[%s295 + $0x13f0] sm:$0xff]
        %v1072 = vld [vmem:[%s295 + $0x13f8] sm:$0xff]
        %v1073 = vld [vmem:[%s295 + $0x1400] sm:$0xff]
        %v1074 = vld [vmem:[%s295 + $0x1408] sm:$0xff]
        %v1075 = vld [vmem:[%s295 + $0x1410] sm:$0xff]
        %v1076 = vld [vmem:[%s295 + $0x1418] sm:$0xff]
        %v1077 = vld [vmem:[%s295 + $0x1420] sm:$0xff]
        %v1078 = vld [vmem:[%s295 + $0x1428] sm:$0xff]
        %v1079 = vld [vmem:[%s295 + $0x1430] sm:$0xff]
        %v1080 = vld [vmem:[%s295 + $0x1438] sm:$0xff]
        %v1081 = vld [vmem:[%s295 + $0x1440] sm:$0xff]
        %v1082 = vld [vmem:[%s295 + $0x1448] sm:$0xff]
        %v1083 = vld [vmem:[%s295 + $0x1450] sm:$0xff]
        %v1084 = vld [vmem:[%s295 + $0x1458] sm:$0xff]
        %v1085 = vld [vmem:[%s295 + $0x1460] sm:$0xff]
        %v1086 = vld [vmem:[%s295 + $0x1468] sm:$0xff]
        %v1087 = vld [vmem:[%s295 + $0x1470] sm:$0xff]
        %v1088 = vld [vmem:[%s295 + $0x1478] sm:$0xff]
        %v1089 = vld [vmem:[%s295 + $0x1480] sm:$0xff]
        %v1090 = vld [vmem:[%s295 + $0x1488] sm:$0xff]
        %v1091 = vld [vmem:[%s295 + $0x1490] sm:$0xff]
        %v1092 = vld [vmem:[%s295 + $0x1498] sm:$0xff]
        %v1093 = vld [vmem:[%s295 + $0x14a0] sm:$0xff]
        %v1094 = vld [vmem:[%s295 + $0x14a8] sm:$0xff]
        %v1095 = vld [vmem:[%s295 + $0x14b0] sm:$0xff]
        %v1096 = vld [vmem:[%s295 + $0x14b8] sm:$0xff]
        %v1097 = vld [vmem:[%s295 + $0x14c0] sm:$0xff]
        %v1098 = vld [vmem:[%s295 + $0x14c8] sm:$0xff]
        %v1099 = vld [vmem:[%s295 + $0x14d0] sm:$0xff]
        %v1100 = vld [vmem:[%s295 + $0x14d8] sm:$0xff]
        %v1101 = vld [vmem:[%s295 + $0x14e0] sm:$0xff]
        %v1102 = vld [vmem:[%s295 + $0x14e8] sm:$0xff]
        %v1103 = vld [vmem:[%s295 + $0x14f0] sm:$0xff]
        %v1104 = vld [vmem:[%s295 + $0x14f8] sm:$0xff]
        %v1105 = vld [vmem:[%s295 + $0x1500] sm:$0xff]
        %v1106 = vld [vmem:[%s295 + $0x1508] sm:$0xff]
        %v1107 = vld [vmem:[%s295 + $0x1510] sm:$0xff]
        %v1108 = vld [vmem:[%s295 + $0x1518] sm:$0xff]
        %v1109 = vld [vmem:[%s295 + $0x1520] sm:$0xff]
        %v1110 = vld [vmem:[%s295 + $0x1528] sm:$0xff]
        %v1111 = vld [vmem:[%s295 + $0x1530] sm:$0xff]
        %v1112 = vld [vmem:[%s295 + $0x1538] sm:$0xff]
        %v1113 = vld [vmem:[%s295 + $0x1540] sm:$0xff]
        %v1114 = vld [vmem:[%s295 + $0x1548] sm:$0xff]
        %v1115 = vld [vmem:[%s295 + $0x1550] sm:$0xff]
        %v1116 = vld [vmem:[%s295 + $0x1558] sm:$0xff]
        %v1117 = vld [vmem:[%s295 + $0x1560] sm:$0xff]
        %v1118 = vld [vmem:[%s295 + $0x1568] sm:$0xff]
        %v1119 = vld [vmem:[%s295 + $0x1570] sm:$0xff]
        %v1120 = vld [vmem:[%s295 + $0x1578] sm:$0xff]
        %v1121 = vld [vmem:[%s295 + $0x1580] sm:$0xff]
        %v1122 = vld [vmem:[%s295 + $0x1588] sm:$0xff]
        %v1123 = vld [vmem:[%s295 + $0x1590] sm:$0xff]
        %v1124 = vld [vmem:[%s295 + $0x1598] sm:$0xff]
        %v1125 = vld [vmem:[%s295 + $0x15a0] sm:$0xff]
        %v1126 = vld [vmem:[%s295 + $0x15a8] sm:$0xff]
        %v1127 = vld [vmem:[%s295 + $0x15b0] sm:$0xff]
        %v1128 = vld [vmem:[%s295 + $0x15b8] sm:$0xff]
        %v1129 = vld [vmem:[%s295 + $0x15c0] sm:$0xff]
        %v1130 = vld [vmem:[%s295 + $0x15c8] sm:$0xff]
        %v1131 = vld [vmem:[%s295 + $0x15d0] sm:$0xff]
        %v1132 = vld [vmem:[%s295 + $0x15d8] sm:$0xff]
        %v1133 = vld [vmem:[%s295 + $0x15e0] sm:$0xff]
        %v1134 = vld [vmem:[%s295 + $0x15e8] sm:$0xff]
        %v1135 = vld [vmem:[%s295 + $0x15f0] sm:$0xff]
        %v1136 = vld [vmem:[%s295 + $0x15f8] sm:$0xff]
        %v1137 = vld [vmem:[%s295 + $0x1600] sm:$0xff]
        %v1138 = vld [vmem:[%s295 + $0x1608] sm:$0xff]
        %v1139 = vld [vmem:[%s295 + $0x1610] sm:$0xff]
        %v1140 = vld [vmem:[%s295 + $0x1618] sm:$0xff]
        %v1141 = vld [vmem:[%s295 + $0x1620] sm:$0xff]
        %v1142 = vld [vmem:[%s295 + $0x1628] sm:$0xff]
        %v1143 = vld [vmem:[%s295 + $0x1630] sm:$0xff]
        %v1144 = vld [vmem:[%s295 + $0x1638] sm:$0xff]
        %v1145 = vld [vmem:[%s295 + $0x1640] sm:$0xff]
        %v1146 = vld [vmem:[%s295 + $0x1648] sm:$0xff]
        %v1147 = vld [vmem:[%s295 + $0x1650] sm:$0xff]
        %v1148 = vld [vmem:[%s295 + $0x1658] sm:$0xff]
        %v1149 = vld [vmem:[%s295 + $0x1660] sm:$0xff]
        %v1150 = vld [vmem:[%s295 + $0x1668] sm:$0xff]
        %v1151 = vld [vmem:[%s295 + $0x1670] sm:$0xff]
        %v1152 = vld [vmem:[%s295 + $0x1678] sm:$0xff]
        %v1153 = vld [vmem:[%s295 + $0x1680] sm:$0xff]
        %v1154 = vld [vmem:[%s295 + $0x1688] sm:$0xff]
        %v1155 = vld [vmem:[%s295 + $0x1690] sm:$0xff]
        %v1156 = vld [vmem:[%s295 + $0x1698] sm:$0xff]
        %v1157 = vld [vmem:[%s295 + $0x16a0] sm:$0xff]
        %v1158 = vld [vmem:[%s295 + $0x16a8] sm:$0xff]
        %v1159 = vld [vmem:[%s295 + $0x16b0] sm:$0xff]
        %v1160 = vld [vmem:[%s295 + $0x16b8] sm:$0xff]
        %v1161 = vld [vmem:[%s295 + $0x16c0] sm:$0xff]
        %v1162 = vld [vmem:[%s295 + $0x16c8] sm:$0xff]
        %v1163 = vld [vmem:[%s295 + $0x16d0] sm:$0xff]
        %v1164 = vld [vmem:[%s295 + $0x16d8] sm:$0xff]
        %v1165 = vld [vmem:[%s295 + $0x16e0] sm:$0xff]
        %v1166 = vld [vmem:[%s295 + $0x16e8] sm:$0xff]
        %v1167 = vld [vmem:[%s295 + $0x16f0] sm:$0xff]
        %v1168 = vld [vmem:[%s295 + $0x16f8] sm:$0xff]
        %v1169 = vld [vmem:[%s295 + $0x1700] sm:$0xff]
        %v1170 = vld [vmem:[%s295 + $0x1708] sm:$0xff]
        %v1171 = vld [vmem:[%s295 + $0x1710] sm:$0xff]
        %v1172 = vld [vmem:[%s295 + $0x1718] sm:$0xff]
        %v1173 = vld [vmem:[%s295 + $0x1720] sm:$0xff]
        %v1174 = vld [vmem:[%s295 + $0x1728] sm:$0xff]
        %v1175 = vld [vmem:[%s295 + $0x1730] sm:$0xff]
        %v1176 = vld [vmem:[%s295 + $0x1738] sm:$0xff]
        %v1177 = vld [vmem:[%s295 + $0x1740] sm:$0xff]
        %v1178 = vld [vmem:[%s295 + $0x1748] sm:$0xff]
        %v1179 = vld [vmem:[%s295 + $0x1750] sm:$0xff]
        %v1180 = vld [vmem:[%s295 + $0x1758] sm:$0xff]
        %v1181 = vld [vmem:[%s295 + $0x1760] sm:$0xff]
        %v1182 = vld [vmem:[%s295 + $0x1768] sm:$0xff]
        %v1183 = vld [vmem:[%s295 + $0x1770] sm:$0xff]
        %v1184 = vld [vmem:[%s295 + $0x1778] sm:$0xff]
        %v1185 = vld [vmem:[%s295 + $0x1780] sm:$0xff]
        %v1186 = vld [vmem:[%s295 + $0x1788] sm:$0xff]
        %v1187 = vld [vmem:[%s295 + $0x1790] sm:$0xff]
        %v1188 = vld [vmem:[%s295 + $0x1798] sm:$0xff]
        %v1189 = vld [vmem:[%s295 + $0x17a0] sm:$0xff]
        %v1190 = vld [vmem:[%s295 + $0x17a8] sm:$0xff]
        %v1191 = vld [vmem:[%s295 + $0x17b0] sm:$0xff]
        %v1192 = vld [vmem:[%s295 + $0x17b8] sm:$0xff]
        %v1193 = vld [vmem:[%s295 + $0x17c0] sm:$0xff]
        %v1194 = vld [vmem:[%s295 + $0x17c8] sm:$0xff]
        %v1195 = vld [vmem:[%s295 + $0x17d0] sm:$0xff]
        %v1196 = vld [vmem:[%s295 + $0x17d8] sm:$0xff]
        %v1197 = vld [vmem:[%s295 + $0x17e0] sm:$0xff]
        %v1198 = vld [vmem:[%s295 + $0x17e8] sm:$0xff]
        %v1199 = vld [vmem:[%s295 + $0x17f0] sm:$0xff]
        %v1200 = vld [vmem:[%s295 + $0x17f8] sm:$0xff]
        %v1201 = vld [vmem:[%s295 + $0x1800] sm:$0xff]
        %v1202 = vld [vmem:[%s295 + $0x1808] sm:$0xff]
        %v1203 = vld [vmem:[%s295 + $0x1810] sm:$0xff]
        %v1204 = vld [vmem:[%s295 + $0x1818] sm:$0xff]
        %v1205 = vld [vmem:[%s295 + $0x1820] sm:$0xff]
        %v1206 = vld [vmem:[%s295 + $0x1828] sm:$0xff]
        %v1207 = vld [vmem:[%s295 + $0x1830] sm:$0xff]
        %v1208 = vld [vmem:[%s295 + $0x1838] sm:$0xff]
        %v1209 = vld [vmem:[%s295 + $0x1840] sm:$0xff]
        %v1210 = vld [vmem:[%s295 + $0x1848] sm:$0xff]
        %v1211 = vld [vmem:[%s295 + $0x1850] sm:$0xff]
        %v1212 = vld [vmem:[%s295 + $0x1858] sm:$0xff]
        %v1213 = vld [vmem:[%s295 + $0x1860] sm:$0xff]
        %v1214 = vld [vmem:[%s295 + $0x1868] sm:$0xff]
        %v1215 = vld [vmem:[%s295 + $0x1870] sm:$0xff]
        %v1216 = vld [vmem:[%s295 + $0x1878] sm:$0xff]
        %v1217 = vld [vmem:[%s295 + $0x1880] sm:$0xff]
        %v1218 = vld [vmem:[%s295 + $0x1888] sm:$0xff]
        %v1219 = vld [vmem:[%s295 + $0x1890] sm:$0xff]
        %v1220 = vld [vmem:[%s295 + $0x1898] sm:$0xff]
        %v1221 = vld [vmem:[%s295 + $0x18a0] sm:$0xff]
        %v1222 = vld [vmem:[%s295 + $0x18a8] sm:$0xff]
        %v1223 = vld [vmem:[%s295 + $0x18b0] sm:$0xff]
        %v1224 = vld [vmem:[%s295 + $0x18b8] sm:$0xff]
        %v1225 = vld [vmem:[%s295 + $0x18c0] sm:$0xff]
        %v1226 = vld [vmem:[%s295 + $0x18c8] sm:$0xff]
        %v1227 = vld [vmem:[%s295 + $0x18d0] sm:$0xff]
        %v1228 = vld [vmem:[%s295 + $0x18d8] sm:$0xff]
        %v1229 = vld [vmem:[%s295 + $0x18e0] sm:$0xff]
        %v1230 = vld [vmem:[%s295 + $0x18e8] sm:$0xff]
        %v1231 = vld [vmem:[%s295 + $0x18f0] sm:$0xff]
        %v1232 = vld [vmem:[%s295 + $0x18f8] sm:$0xff]
        %v1233 = vld [vmem:[%s295 + $0x1900] sm:$0xff]
        %v1234 = vld [vmem:[%s295 + $0x1908] sm:$0xff]
        %v1235 = vld [vmem:[%s295 + $0x1910] sm:$0xff]
        %v1236 = vld [vmem:[%s295 + $0x1918] sm:$0xff]
        %v1237 = vld [vmem:[%s295 + $0x1920] sm:$0xff]
        %v1238 = vld [vmem:[%s295 + $0x1928] sm:$0xff]
        %v1239 = vld [vmem:[%s295 + $0x1930] sm:$0xff]
        %v1240 = vld [vmem:[%s295 + $0x1938] sm:$0xff]
        %v1241 = vld [vmem:[%s295 + $0x1940] sm:$0xff]
        %v1242 = vld [vmem:[%s295 + $0x1948] sm:$0xff]
        %v1243 = vld [vmem:[%s295 + $0x1950] sm:$0xff]
        %v1244 = vld [vmem:[%s295 + $0x1958] sm:$0xff]
        %v1245 = vld [vmem:[%s295 + $0x1960] sm:$0xff]
        %v1246 = vld [vmem:[%s295 + $0x1968] sm:$0xff]
        %v1247 = vld [vmem:[%s295 + $0x1970] sm:$0xff]
        %v1248 = vld [vmem:[%s295 + $0x1978] sm:$0xff]
        %v1249 = vld [vmem:[%s295 + $0x1980] sm:$0xff]
        %v1250 = vld [vmem:[%s295 + $0x1988] sm:$0xff]
        %v1251 = vld [vmem:[%s295 + $0x1990] sm:$0xff]
        %v1252 = vld [vmem:[%s295 + $0x1998] sm:$0xff]
        %v1253 = vld [vmem:[%s295 + $0x19a0] sm:$0xff]
        %v1254 = vld [vmem:[%s295 + $0x19a8] sm:$0xff]
        %v1255 = vld [vmem:[%s295 + $0x19b0] sm:$0xff]
        %v1256 = vld [vmem:[%s295 + $0x19b8] sm:$0xff]
        %v1257 = vld [vmem:[%s295 + $0x19c0] sm:$0xff]
        %v1258 = vld [vmem:[%s295 + $0x19c8] sm:$0xff]
        %v1259 = vld [vmem:[%s295 + $0x19d0] sm:$0xff]
        %v1260 = vld [vmem:[%s295 + $0x19d8] sm:$0xff]
        %v1261 = vld [vmem:[%s295 + $0x19e0] sm:$0xff]
        %v1262 = vld [vmem:[%s295 + $0x19e8] sm:$0xff]
        %v1263 = vld [vmem:[%s295 + $0x19f0] sm:$0xff]
        %v1264 = vld [vmem:[%s295 + $0x19f8] sm:$0xff]
        %v1265 = vld [vmem:[%s295 + $0x1a00] sm:$0xff]
        %v1266 = vld [vmem:[%s295 + $0x1a08] sm:$0xff]
        %v1267 = vld [vmem:[%s295 + $0x1a10] sm:$0xff]
        %v1268 = vld [vmem:[%s295 + $0x1a18] sm:$0xff]
        %v1269 = vld [vmem:[%s295 + $0x1a20] sm:$0xff]
        %v1270 = vld [vmem:[%s295 + $0x1a28] sm:$0xff]
        %v1271 = vld [vmem:[%s295 + $0x1a30] sm:$0xff]
        %v1272 = vld [vmem:[%s295 + $0x1a38] sm:$0xff]
        %v1273 = vld [vmem:[%s295 + $0x1a40] sm:$0xff]
        %v1274 = vld [vmem:[%s295 + $0x1a48] sm:$0xff]
        %v1275 = vld [vmem:[%s295 + $0x1a50] sm:$0xff]
        %v1276 = vld [vmem:[%s295 + $0x1a58] sm:$0xff]
        %v1277 = vld [vmem:[%s295 + $0x1a60] sm:$0xff]
        %v1278 = vld [vmem:[%s295 + $0x1a68] sm:$0xff]
        %v1279 = vld [vmem:[%s295 + $0x1a70] sm:$0xff]
        %v1280 = vld [vmem:[%s295 + $0x1a78] sm:$0xff]
        %v1281 = vld [vmem:[%s295 + $0x1a80] sm:$0xff]
        %v1282 = vld [vmem:[%s295 + $0x1a88] sm:$0xff]
        %v1283 = vld [vmem:[%s295 + $0x1a90] sm:$0xff]
        %v1284 = vld [vmem:[%s295 + $0x1a98] sm:$0xff]
        %v1285 = vld [vmem:[%s295 + $0x1aa0] sm:$0xff]
        %v1286 = vld [vmem:[%s295 + $0x1aa8] sm:$0xff]
        %v1287 = vld [vmem:[%s295 + $0x1ab0] sm:$0xff]
        %v1288 = vld [vmem:[%s295 + $0x1ab8] sm:$0xff]
        %v1289 = vld [vmem:[%s295 + $0x1ac0] sm:$0xff]
        %v1290 = vld [vmem:[%s295 + $0x1ac8] sm:$0xff]
        %v1291 = vld [vmem:[%s295 + $0x1ad0] sm:$0xff]
        %v1292 = vld [vmem:[%s295 + $0x1ad8] sm:$0xff]
        %v1293 = vld [vmem:[%s295 + $0x1ae0] sm:$0xff]
        %v1294 = vld [vmem:[%s295 + $0x1ae8] sm:$0xff]
        %v1295 = vld [vmem:[%s295 + $0x1af0] sm:$0xff]
        %v1296 = vld [vmem:[%s295 + $0x1af8] sm:$0xff]
        %v1297 = vld [vmem:[%s295 + $0x1b00] sm:$0xff]
        %v1298 = vld [vmem:[%s295 + $0x1b08] sm:$0xff]
        %v1299 = vld [vmem:[%s295 + $0x1b10] sm:$0xff]
        %v1300 = vld [vmem:[%s295 + $0x1b18] sm:$0xff]
        %v1301 = vld [vmem:[%s295 + $0x1b20] sm:$0xff]
        %v1302 = vld [vmem:[%s295 + $0x1b28] sm:$0xff]
        %v1303 = vld [vmem:[%s295 + $0x1b30] sm:$0xff]
        %v1304 = vld [vmem:[%s295 + $0x1b38] sm:$0xff]
        %v1305 = vld [vmem:[%s295 + $0x1b40] sm:$0xff]
        %v1306 = vld [vmem:[%s295 + $0x1b48] sm:$0xff]
        %v1307 = vld [vmem:[%s295 + $0x1b50] sm:$0xff]
        %v1308 = vld [vmem:[%s295 + $0x1b58] sm:$0xff]
        %v1309 = vld [vmem:[%s295 + $0x1b60] sm:$0xff]
        %v1310 = vld [vmem:[%s295 + $0x1b68] sm:$0xff]
        %v1311 = vld [vmem:[%s295 + $0x1b70] sm:$0xff]
        %v1312 = vld [vmem:[%s295 + $0x1b78] sm:$0xff]
        %v1313 = vld [vmem:[%s295 + $0x1b80] sm:$0xff]
        %v1314 = vld [vmem:[%s295 + $0x1b88] sm:$0xff]
        %v1315 = vld [vmem:[%s295 + $0x1b90] sm:$0xff]
        %v1316 = vld [vmem:[%s295 + $0x1b98] sm:$0xff]
        %v1317 = vld [vmem:[%s295 + $0x1ba0] sm:$0xff]
        %v1318 = vld [vmem:[%s295 + $0x1ba8] sm:$0xff]
        %v1319 = vld [vmem:[%s295 + $0x1bb0] sm:$0xff]
        %v1320 = vld [vmem:[%s295 + $0x1bb8] sm:$0xff]
        %v1321 = vld [vmem:[%s295 + $0x1bc0] sm:$0xff]
        %v1322 = vld [vmem:[%s295 + $0x1bc8] sm:$0xff]
        %v1323 = vld [vmem:[%s295 + $0x1bd0] sm:$0xff]
        %v1324 = vld [vmem:[%s295 + $0x1bd8] sm:$0xff]
        %v1325 = vld [vmem:[%s295 + $0x1be0] sm:$0xff]
        %v1326 = vld [vmem:[%s295 + $0x1be8] sm:$0xff]
        %v1327 = vld [vmem:[%s295 + $0x1bf0] sm:$0xff]
        %v1328 = vld [vmem:[%s295 + $0x1bf8] sm:$0xff]
        %v1329 = vld [vmem:[%s295 + $0x1c00] sm:$0xff]
        %v1330 = vld [vmem:[%s295 + $0x1c08] sm:$0xff]
        %v1331 = vld [vmem:[%s295 + $0x1c10] sm:$0xff]
        %v1332 = vld [vmem:[%s295 + $0x1c18] sm:$0xff]
        %v1333 = vld [vmem:[%s295 + $0x1c20] sm:$0xff]
        %v1334 = vld [vmem:[%s295 + $0x1c28] sm:$0xff]
        %v1335 = vld [vmem:[%s295 + $0x1c30] sm:$0xff]
        %v1336 = vld [vmem:[%s295 + $0x1c38] sm:$0xff]
        %v1337 = vld [vmem:[%s295 + $0x1c40] sm:$0xff]
        %v1338 = vld [vmem:[%s295 + $0x1c48] sm:$0xff]
        %v1339 = vld [vmem:[%s295 + $0x1c50] sm:$0xff]
        %v1340 = vld [vmem:[%s295 + $0x1c58] sm:$0xff]
        %v1341 = vld [vmem:[%s295 + $0x1c60] sm:$0xff]
        %v1342 = vld [vmem:[%s295 + $0x1c68] sm:$0xff]
        %v1343 = vld [vmem:[%s295 + $0x1c70] sm:$0xff]
        %v1344 = vld [vmem:[%s295 + $0x1c78] sm:$0xff]
        %v1345 = vld [vmem:[%s295 + $0x1c80] sm:$0xff]
        %v1346 = vld [vmem:[%s295 + $0x1c88] sm:$0xff]
        %v1347 = vld [vmem:[%s295 + $0x1c90] sm:$0xff]
        %v1348 = vld [vmem:[%s295 + $0x1c98] sm:$0xff]
        %v1349 = vld [vmem:[%s295 + $0x1ca0] sm:$0xff]
        %v1350 = vld [vmem:[%s295 + $0x1ca8] sm:$0xff]
        %v1351 = vld [vmem:[%s295 + $0x1cb0] sm:$0xff]
        %v1352 = vld [vmem:[%s295 + $0x1cb8] sm:$0xff]
        %v1353 = vld [vmem:[%s295 + $0x1cc0] sm:$0xff]
        %v1354 = vld [vmem:[%s295 + $0x1cc8] sm:$0xff]
        %v1355 = vld [vmem:[%s295 + $0x1cd0] sm:$0xff]
        %v1356 = vld [vmem:[%s295 + $0x1cd8] sm:$0xff]
        %v1357 = vld [vmem:[%s295 + $0x1ce0] sm:$0xff]
        %v1358 = vld [vmem:[%s295 + $0x1ce8] sm:$0xff]
        %v1359 = vld [vmem:[%s295 + $0x1cf0] sm:$0xff]
        %v1360 = vld [vmem:[%s295 + $0x1cf8] sm:$0xff]
        %v1361 = vld [vmem:[%s295 + $0x1d00] sm:$0xff]
        %v1362 = vld [vmem:[%s295 + $0x1d08] sm:$0xff]
        %v1363 = vld [vmem:[%s295 + $0x1d10] sm:$0xff]
        %v1364 = vld [vmem:[%s295 + $0x1d18] sm:$0xff]
        %v1365 = vld [vmem:[%s295 + $0x1d20] sm:$0xff]
        %v1366 = vld [vmem:[%s295 + $0x1d28] sm:$0xff]
        %v1367 = vld [vmem:[%s295 + $0x1d30] sm:$0xff]
        %v1368 = vld [vmem:[%s295 + $0x1d38] sm:$0xff]
        %v1369 = vld [vmem:[%s295 + $0x1d40] sm:$0xff]
        %v1370 = vld [vmem:[%s295 + $0x1d48] sm:$0xff]
        %v1371 = vld [vmem:[%s295 + $0x1d50] sm:$0xff]
        %v1372 = vld [vmem:[%s295 + $0x1d58] sm:$0xff]
        %v1373 = vld [vmem:[%s295 + $0x1d60] sm:$0xff]
        %v1374 = vld [vmem:[%s295 + $0x1d68] sm:$0xff]
        %v1375 = vld [vmem:[%s295 + $0x1d70] sm:$0xff]
        %v1376 = vld [vmem:[%s295 + $0x1d78] sm:$0xff]
        %v1377 = vld [vmem:[%s295 + $0x1d80] sm:$0xff]
        %v1378 = vld [vmem:[%s295 + $0x1d88] sm:$0xff]
        %v1379 = vld [vmem:[%s295 + $0x1d90] sm:$0xff]
        %v1380 = vld [vmem:[%s295 + $0x1d98] sm:$0xff]
        %v1381 = vld [vmem:[%s295 + $0x1da0] sm:$0xff]
        %v1382 = vld [vmem:[%s295 + $0x1da8] sm:$0xff]
        %v1383 = vld [vmem:[%s295 + $0x1db0] sm:$0xff]
        %v1384 = vld [vmem:[%s295 + $0x1db8] sm:$0xff]
        %v1385 = vld [vmem:[%s295 + $0x1dc0] sm:$0xff]
        %v1386 = vld [vmem:[%s295 + $0x1dc8] sm:$0xff]
        %v1387 = vld [vmem:[%s295 + $0x1dd0] sm:$0xff]
        %v1388 = vld [vmem:[%s295 + $0x1dd8] sm:$0xff]
        %v1389 = vld [vmem:[%s295 + $0x1de0] sm:$0xff]
        %v1390 = vld [vmem:[%s295 + $0x1de8] sm:$0xff]
        %v1391 = vld [vmem:[%s295 + $0x1df0] sm:$0xff]
        %v1392 = vld [vmem:[%s295 + $0x1df8] sm:$0xff]
        %v1393 = vld [vmem:[%s295 + $0x1e00] sm:$0xff]
        %v1394 = vld [vmem:[%s295 + $0x1e08] sm:$0xff]
        %v1395 = vld [vmem:[%s295 + $0x1e10] sm:$0xff]
        %v1396 = vld [vmem:[%s295 + $0x1e18] sm:$0xff]
        %v1397 = vld [vmem:[%s295 + $0x1e20] sm:$0xff]
        %v1398 = vld [vmem:[%s295 + $0x1e28] sm:$0xff]
        %v1399 = vld [vmem:[%s295 + $0x1e30] sm:$0xff]
        %v1400 = vld [vmem:[%s295 + $0x1e38] sm:$0xff]
        %v1401 = vld [vmem:[%s295 + $0x1e40] sm:$0xff]
        %v1402 = vld [vmem:[%s295 + $0x1e48] sm:$0xff]
        %v1403 = vld [vmem:[%s295 + $0x1e50] sm:$0xff]
        %v1404 = vld [vmem:[%s295 + $0x1e58] sm:$0xff]
        %v1405 = vld [vmem:[%s295 + $0x1e60] sm:$0xff]
        %v1406 = vld [vmem:[%s295 + $0x1e68] sm:$0xff]
        %v1407 = vld [vmem:[%s295 + $0x1e70] sm:$0xff]
        %v1408 = vld [vmem:[%s295 + $0x1e78] sm:$0xff]
        %v1409 = vld [vmem:[%s295 + $0x1e80] sm:$0xff]
        %v1410 = vld [vmem:[%s295 + $0x1e88] sm:$0xff]
        %v1411 = vld [vmem:[%s295 + $0x1e90] sm:$0xff]
        %v1412 = vld [vmem:[%s295 + $0x1e98] sm:$0xff]
        %v1413 = vld [vmem:[%s295 + $0x1ea0] sm:$0xff]
        %v1414 = vld [vmem:[%s295 + $0x1ea8] sm:$0xff]
        %v1415 = vld [vmem:[%s295 + $0x1eb0] sm:$0xff]
        %v1416 = vld [vmem:[%s295 + $0x1eb8] sm:$0xff]
        %v1417 = vld [vmem:[%s295 + $0x1ec0] sm:$0xff]
        %v1418 = vld [vmem:[%s295 + $0x1ec8] sm:$0xff]
        %v1419 = vld [vmem:[%s295 + $0x1ed0] sm:$0xff]
        %v1420 = vld [vmem:[%s295 + $0x1ed8] sm:$0xff]
        %v1421 = vld [vmem:[%s295 + $0x1ee0] sm:$0xff]
        %v1422 = vld [vmem:[%s295 + $0x1ee8] sm:$0xff]
        %v1423 = vld [vmem:[%s295 + $0x1ef0] sm:$0xff]
        %v1424 = vld [vmem:[%s295 + $0x1ef8] sm:$0xff]
        %v1425 = vld [vmem:[%s295 + $0x1f00] sm:$0xff]
        %v1426 = vld [vmem:[%s295 + $0x1f08] sm:$0xff]
        %v1427 = vld [vmem:[%s295 + $0x1f10] sm:$0xff]
        %v1428 = vld [vmem:[%s295 + $0x1f18] sm:$0xff]
        %v1429 = vld [vmem:[%s295 + $0x1f20] sm:$0xff]
        %v1430 = vld [vmem:[%s295 + $0x1f28] sm:$0xff]
        %v1431 = vld [vmem:[%s295 + $0x1f30] sm:$0xff]
        %v1432 = vld [vmem:[%s295 + $0x1f38] sm:$0xff]
        %v1433 = vld [vmem:[%s295 + $0x1f40] sm:$0xff]
        %v1434 = vld [vmem:[%s295 + $0x1f48] sm:$0xff]
        %v1435 = vld [vmem:[%s295 + $0x1f50] sm:$0xff]
        %v1436 = vld [vmem:[%s295 + $0x1f58] sm:$0xff]
        %v1437 = vld [vmem:[%s295 + $0x1f60] sm:$0xff]
        %v1438 = vld [vmem:[%s295 + $0x1f68] sm:$0xff]
        %v1439 = vld [vmem:[%s295 + $0x1f70] sm:$0xff]
        %v1440 = vld [vmem:[%s295 + $0x1f78] sm:$0xff]
        %v1441 = vld [vmem:[%s295 + $0x1f80] sm:$0xff]
        %v1442 = vld [vmem:[%s295 + $0x1f88] sm:$0xff]
        %v1443 = vld [vmem:[%s295 + $0x1f90] sm:$0xff]
        %v1444 = vld [vmem:[%s295 + $0x1f98] sm:$0xff]
        %v1445 = vld [vmem:[%s295 + $0x1fa0] sm:$0xff]
        %v1446 = vld [vmem:[%s295 + $0x1fa8] sm:$0xff]
        %v1447 = vld [vmem:[%s295 + $0x1fb0] sm:$0xff]
        %v1448 = vld [vmem:[%s295 + $0x1fb8] sm:$0xff]
        %v1449 = vld [vmem:[%s295 + $0x1fc0] sm:$0xff]
        %v1450 = vld [vmem:[%s295 + $0x1fc8] sm:$0xff]
        %v1451 = vld [vmem:[%s295 + $0x1fd0] sm:$0xff]
        %v1452 = vld [vmem:[%s295 + $0x1fd8] sm:$0xff]
        %v1453 = vld [vmem:[%s295 + $0x1fe0] sm:$0xff]
        %v1454 = vld [vmem:[%s295 + $0x1fe8] sm:$0xff]
        %v1455 = vld [vmem:[%s295 + $0x1ff0] sm:$0xff]
        %v1456 = vld [vmem:[%s295 + $0x1ff8] sm:$0xff]
        %v1457 = vld [vmem:[%s295 + $0x2000] sm:$0xff]
        %v1458 = vld [vmem:[%s295 + $0x2008] sm:$0xff]
        %v1459 = vld [vmem:[%s295 + $0x2010] sm:$0xff]
        %v1460 = vld [vmem:[%s295 + $0x2018] sm:$0xff]
        %v1461 = vld [vmem:[%s295 + $0x2020] sm:$0xff]
        %v1462 = vld [vmem:[%s295 + $0x2028] sm:$0xff]
        %v1463 = vld [vmem:[%s295 + $0x2030] sm:$0xff]
        %v1464 = vld [vmem:[%s295 + $0x2038] sm:$0xff]
        %v1465 = vld [vmem:[%s295 + $0x2040] sm:$0xff]
        %v1466 = vld [vmem:[%s295 + $0x2048] sm:$0xff]
        %v1467 = vld [vmem:[%s295 + $0x2050] sm:$0xff]
        %v1468 = vld [vmem:[%s295 + $0x2058] sm:$0xff]
        %v1469 = vld [vmem:[%s295 + $0x2060] sm:$0xff]
        %v1470 = vld [vmem:[%s295 + $0x2068] sm:$0xff]
        %v1471 = vld [vmem:[%s295 + $0x2070] sm:$0xff]
        %v1472 = vld [vmem:[%s295 + $0x2078] sm:$0xff]
        %v1473 = vld [vmem:[%s295 + $0x2080] sm:$0xff]
        %v1474 = vld [vmem:[%s295 + $0x2088] sm:$0xff]
        %v1475 = vld [vmem:[%s295 + $0x2090] sm:$0xff]
        %v1476 = vld [vmem:[%s295 + $0x2098] sm:$0xff]
        %v1477 = vld [vmem:[%s295 + $0x20a0] sm:$0xff]
        %v1478 = vld [vmem:[%s295 + $0x20a8] sm:$0xff]
        %v1479 = vld [vmem:[%s295 + $0x20b0] sm:$0xff]
        %v1480 = vld [vmem:[%s295 + $0x20b8] sm:$0xff]
        %v1481 = vld [vmem:[%s295 + $0x20c0] sm:$0xff]
        %v1482 = vld [vmem:[%s295 + $0x20c8] sm:$0xff]
        %v1483 = vld [vmem:[%s295 + $0x20d0] sm:$0xff]
        %v1484 = vld [vmem:[%s295 + $0x20d8] sm:$0xff]
        %v1485 = vld [vmem:[%s295 + $0x20e0] sm:$0xff]
        %v1486 = vld [vmem:[%s295 + $0x20e8] sm:$0xff]
        %v1487 = vld [vmem:[%s295 + $0x20f0] sm:$0xff]
        %v1488 = vld [vmem:[%s295 + $0x20f8] sm:$0xff]
        %v1489 = vld [vmem:[%s295 + $0x2100] sm:$0xff]
        %v1490 = vld [vmem:[%s295 + $0x2108] sm:$0xff]
        %v1491 = vld [vmem:[%s295 + $0x2110] sm:$0xff]
        %v1492 = vld [vmem:[%s295 + $0x2118] sm:$0xff]
        %v1493 = vld [vmem:[%s295 + $0x2120] sm:$0xff]
        %v1494 = vld [vmem:[%s295 + $0x2128] sm:$0xff]
        %v1495 = vld [vmem:[%s295 + $0x2130] sm:$0xff]
        %v1496 = vld [vmem:[%s295 + $0x2138] sm:$0xff]
        %v1497 = vld [vmem:[%s295 + $0x2140] sm:$0xff]
        %v1498 = vld [vmem:[%s295 + $0x2148] sm:$0xff]
        %v1499 = vld [vmem:[%s295 + $0x2150] sm:$0xff]
        %v1500 = vld [vmem:[%s295 + $0x2158] sm:$0xff]
        %v1501 = vld [vmem:[%s295 + $0x2160] sm:$0xff]
        %v1502 = vld [vmem:[%s295 + $0x2168] sm:$0xff]
        %v1503 = vld [vmem:[%s295 + $0x2170] sm:$0xff]
        %v1504 = vld [vmem:[%s295 + $0x2178] sm:$0xff]
        %v1505 = vld [vmem:[%s295 + $0x2180] sm:$0xff]
        %v1506 = vld [vmem:[%s295 + $0x2188] sm:$0xff]
        %v1507 = vld [vmem:[%s295 + $0x2190] sm:$0xff]
        %v1508 = vld [vmem:[%s295 + $0x2198] sm:$0xff]
        %v1509 = vld [vmem:[%s295 + $0x21a0] sm:$0xff]
        %v1510 = vld [vmem:[%s295 + $0x21a8] sm:$0xff]
        %v1511 = vld [vmem:[%s295 + $0x21b0] sm:$0xff]
        %v1512 = vld [vmem:[%s295 + $0x21b8] sm:$0xff]
        %v1513 = vld [vmem:[%s295 + $0x21c0] sm:$0xff]
        %v1514 = vld [vmem:[%s295 + $0x21c8] sm:$0xff]
        %v1515 = vld [vmem:[%s295 + $0x21d0] sm:$0xff]
        %v1516 = vld [vmem:[%s295 + $0x21d8] sm:$0xff]
        %v1517 = vld [vmem:[%s295 + $0x21e0] sm:$0xff]
        %v1518 = vld [vmem:[%s295 + $0x21e8] sm:$0xff]
        %v1519 = vld [vmem:[%s295 + $0x21f0] sm:$0xff]
        %v1520 = vld [vmem:[%s295 + $0x21f8] sm:$0xff]
        %v1521 = vld [vmem:[%s295 + $0x2200] sm:$0xff]
        %v1522 = vld [vmem:[%s295 + $0x2208] sm:$0xff]
        %v1523 = vld [vmem:[%s295 + $0x2210] sm:$0xff]
        %v1524 = vld [vmem:[%s295 + $0x2218] sm:$0xff]
        %v1525 = vld [vmem:[%s295 + $0x2220] sm:$0xff]
        %v1526 = vld [vmem:[%s295 + $0x2228] sm:$0xff]
        %v1527 = vld [vmem:[%s295 + $0x2230] sm:$0xff]
        %v1528 = vld [vmem:[%s295 + $0x2238] sm:$0xff]
        %v1529 = vld [vmem:[%s295 + $0x2240] sm:$0xff]
        %v1530 = vld [vmem:[%s295 + $0x2248] sm:$0xff]
        %v1531 = vld [vmem:[%s295 + $0x2250] sm:$0xff]
        %v1532 = vld [vmem:[%s295 + $0x2258] sm:$0xff]
        %v1533 = vld [vmem:[%s295 + $0x2260] sm:$0xff]
        %v1534 = vld [vmem:[%s295 + $0x2268] sm:$0xff]
        %v1535 = vld [vmem:[%s295 + $0x2270] sm:$0xff]
        %v1536 = vld [vmem:[%s295 + $0x2278] sm:$0xff]
        %v1537 = vld [vmem:[%s295 + $0x2280] sm:$0xff]
        %v1538 = vld [vmem:[%s295 + $0x2288] sm:$0xff]
        %v1539 = vld [vmem:[%s295 + $0x2290] sm:$0xff]
        %v1540 = vld [vmem:[%s295 + $0x2298] sm:$0xff]
        %v1541 = vld [vmem:[%s295 + $0x22a0] sm:$0xff]
        %v1542 = vld [vmem:[%s295 + $0x22a8] sm:$0xff]
        %v1543 = vld [vmem:[%s295 + $0x22b0] sm:$0xff]
        %v1544 = vld [vmem:[%s295 + $0x22b8] sm:$0xff]
        %v1545 = vld [vmem:[%s295 + $0x22c0] sm:$0xff]
        %v1546 = vld [vmem:[%s295 + $0x22c8] sm:$0xff]
        %v1547 = vld [vmem:[%s295 + $0x22d0] sm:$0xff]
        %v1548 = vld [vmem:[%s295 + $0x22d8] sm:$0xff]
        %v1549 = vld [vmem:[%s295 + $0x22e0] sm:$0xff]
        %v1550 = vld [vmem:[%s295 + $0x22e8] sm:$0xff]
        %v1551 = vld [vmem:[%s295 + $0x22f0] sm:$0xff]
        %v1552 = vld [vmem:[%s295 + $0x22f8] sm:$0xff]
        %v1553 = vld [vmem:[%s295 + $0x2300] sm:$0xff]
        %v1554 = vld [vmem:[%s295 + $0x2308] sm:$0xff]
        %v1555 = vld [vmem:[%s295 + $0x2310] sm:$0xff]
        %v1556 = vld [vmem:[%s295 + $0x2318] sm:$0xff]
        %v1557 = vld [vmem:[%s295 + $0x2320] sm:$0xff]
        %v1558 = vld [vmem:[%s295 + $0x2328] sm:$0xff]
        %v1559 = vld [vmem:[%s295 + $0x2330] sm:$0xff]
        %v1560 = vld [vmem:[%s295 + $0x2338] sm:$0xff]
        %v1561 = vld [vmem:[%s295 + $0x2340] sm:$0xff]
        %v1562 = vld [vmem:[%s295 + $0x2348] sm:$0xff]
        %v1563 = vld [vmem:[%s295 + $0x2350] sm:$0xff]
        %v1564 = vld [vmem:[%s295 + $0x2358] sm:$0xff]
        %v1565 = vld [vmem:[%s295 + $0x2360] sm:$0xff]
        %v1566 = vld [vmem:[%s295 + $0x2368] sm:$0xff]
        %v1567 = vld [vmem:[%s295 + $0x2370] sm:$0xff]
        %v1568 = vld [vmem:[%s295 + $0x2378] sm:$0xff]
        %v1569 = vld [vmem:[%s295 + $0x2380] sm:$0xff]
        %v1570 = vld [vmem:[%s295 + $0x2388] sm:$0xff]
        %v1571 = vld [vmem:[%s295 + $0x2390] sm:$0xff]
        %v1572 = vld [vmem:[%s295 + $0x2398] sm:$0xff]
        %v1573 = vld [vmem:[%s295 + $0x23a0] sm:$0xff]
        %v1574 = vld [vmem:[%s295 + $0x23a8] sm:$0xff]
        %v1575 = vld [vmem:[%s295 + $0x23b0] sm:$0xff]
        %v1576 = vld [vmem:[%s295 + $0x23b8] sm:$0xff]
        %v1577 = vld [vmem:[%s295 + $0x23c0] sm:$0xff]
        %v1578 = vld [vmem:[%s295 + $0x23c8] sm:$0xff]
        %v1579 = vld [vmem:[%s295 + $0x23d0] sm:$0xff]
        %v1580 = vld [vmem:[%s295 + $0x23d8] sm:$0xff]
        %v1581 = vld [vmem:[%s295 + $0x23e0] sm:$0xff]
        %v1582 = vld [vmem:[%s295 + $0x23e8] sm:$0xff]
        %v1583 = vld [vmem:[%s295 + $0x23f0] sm:$0xff]
        %v1584 = vld [vmem:[%s295 + $0x23f8] sm:$0xff]
        %v1585 = vld [vmem:[%s295 + $0x2400] sm:$0xff]
        %v1586 = vld [vmem:[%s295 + $0x2408] sm:$0xff]
        %v1587 = vld [vmem:[%s295 + $0x2410] sm:$0xff]
        %v1588 = vld [vmem:[%s295 + $0x2418] sm:$0xff]
        %v1589 = vld [vmem:[%s295 + $0x2420] sm:$0xff]
        %v1590 = vld [vmem:[%s295 + $0x2428] sm:$0xff]
        %v1591 = vld [vmem:[%s295 + $0x2430] sm:$0xff]
        %v1592 = vld [vmem:[%s295 + $0x2438] sm:$0xff]
        %v1593 = vld [vmem:[%s295 + $0x2440] sm:$0xff]
        %v1594 = vld [vmem:[%s295 + $0x2448] sm:$0xff]
        %v1595 = vld [vmem:[%s295 + $0x2450] sm:$0xff]
        %v1596 = vld [vmem:[%s295 + $0x2458] sm:$0xff]
        %v1597 = vld [vmem:[%s295 + $0x2460] sm:$0xff]
        %v1598 = vld [vmem:[%s295 + $0x2468] sm:$0xff]
        %v1599 = vld [vmem:[%s295 + $0x2470] sm:$0xff]
        %v1600 = vld [vmem:[%s295 + $0x2478] sm:$0xff]
        %v1601 = vld [vmem:[%s295 + $0x2480] sm:$0xff]
        %v1602 = vld [vmem:[%s295 + $0x2488] sm:$0xff]
        %v1603 = vld [vmem:[%s295 + $0x2490] sm:$0xff]
        %v1604 = vld [vmem:[%s295 + $0x2498] sm:$0xff]
        %v1605 = vld [vmem:[%s295 + $0x24a0] sm:$0xff]
        %v1606 = vld [vmem:[%s295 + $0x24a8] sm:$0xff]
        %v1607 = vld [vmem:[%s295 + $0x24b0] sm:$0xff]
        %v1608 = vld [vmem:[%s295 + $0x24b8] sm:$0xff]
        %v1609 = vld [vmem:[%s295 + $0x24c0] sm:$0xff]
        %v1610 = vld [vmem:[%s295 + $0x24c8] sm:$0xff]
        %v1611 = vld [vmem:[%s295 + $0x24d0] sm:$0xff]
        %v1612 = vld [vmem:[%s295 + $0x24d8] sm:$0xff]
        %v1613 = vld [vmem:[%s295 + $0x24e0] sm:$0xff]
        %v1614 = vld [vmem:[%s295 + $0x24e8] sm:$0xff]
        %v1615 = vld [vmem:[%s295 + $0x24f0] sm:$0xff]
        %v1616 = vld [vmem:[%s295 + $0x24f8] sm:$0xff]
        %v1617 = vld [vmem:[%s295 + $0x2500] sm:$0xff]
        %v1618 = vld [vmem:[%s295 + $0x2508] sm:$0xff]
        %v1619 = vld [vmem:[%s295 + $0x2510] sm:$0xff]
        %v1620 = vld [vmem:[%s295 + $0x2518] sm:$0xff]
        %v1621 = vld [vmem:[%s295 + $0x2520] sm:$0xff]
        %v1622 = vld [vmem:[%s295 + $0x2528] sm:$0xff]
        %v1623 = vld [vmem:[%s295 + $0x2530] sm:$0xff]
        %v1624 = vld [vmem:[%s295 + $0x2538] sm:$0xff]
        %v1625 = vld [vmem:[%s295 + $0x2540] sm:$0xff]
        %v1626 = vld [vmem:[%s295 + $0x2548] sm:$0xff]
        %v1627 = vld [vmem:[%s295 + $0x2550] sm:$0xff]
        %v1628 = vld [vmem:[%s295 + $0x2558] sm:$0xff]
        %v1629 = vld [vmem:[%s295 + $0x2560] sm:$0xff]
        %v1630 = vld [vmem:[%s295 + $0x2568] sm:$0xff]
        %v1631 = vld [vmem:[%s295 + $0x2570] sm:$0xff]
        %v1632 = vld [vmem:[%s295 + $0x2578] sm:$0xff]
        %v1633 = vld [vmem:[%s295 + $0x2580] sm:$0xff]
        %v1634 = vld [vmem:[%s295 + $0x2588] sm:$0xff]
        %v1635 = vld [vmem:[%s295 + $0x2590] sm:$0xff]
        %v1636 = vld [vmem:[%s295 + $0x2598] sm:$0xff]
        %v1637 = vld [vmem:[%s295 + $0x25a0] sm:$0xff]
        %v1638 = vld [vmem:[%s295 + $0x25a8] sm:$0xff]
        %v1639 = vld [vmem:[%s295 + $0x25b0] sm:$0xff]
        %v1640 = vld [vmem:[%s295 + $0x25b8] sm:$0xff]
        %v1641 = vld [vmem:[%s295 + $0x25c0] sm:$0xff]
        %v1642 = vld [vmem:[%s295 + $0x25c8] sm:$0xff]
        %v1643 = vld [vmem:[%s295 + $0x25d0] sm:$0xff]
        %v1644 = vld [vmem:[%s295 + $0x25d8] sm:$0xff]
        %v1645 = vld [vmem:[%s295 + $0x25e0] sm:$0xff]
        %v1646 = vld [vmem:[%s295 + $0x25e8] sm:$0xff]
        %v1647 = vld [vmem:[%s295 + $0x25f0] sm:$0xff]
        %v1648 = vld [vmem:[%s295 + $0x25f8] sm:$0xff]
        %v1649 = vld [vmem:[%s295 + $0x2600] sm:$0xff]
        %v1650 = vld [vmem:[%s295 + $0x2608] sm:$0xff]
        %v1651 = vld [vmem:[%s295 + $0x2610] sm:$0xff]
        %v1652 = vld [vmem:[%s295 + $0x2618] sm:$0xff]
        %v1653 = vld [vmem:[%s295 + $0x2620] sm:$0xff]
        %v1654 = vld [vmem:[%s295 + $0x2628] sm:$0xff]
        %v1655 = vld [vmem:[%s295 + $0x2630] sm:$0xff]
        %v1656 = vld [vmem:[%s295 + $0x2638] sm:$0xff]
        %v1657 = vld [vmem:[%s295 + $0x2640] sm:$0xff]
        %v1658 = vld [vmem:[%s295 + $0x2648] sm:$0xff]
        %v1659 = vld [vmem:[%s295 + $0x2650] sm:$0xff]
        %v1660 = vld [vmem:[%s295 + $0x2658] sm:$0xff]
        %v1661 = vld [vmem:[%s295 + $0x2660] sm:$0xff]
        %v1662 = vld [vmem:[%s295 + $0x2668] sm:$0xff]
        %v1663 = vld [vmem:[%s295 + $0x2670] sm:$0xff]
        %v1664 = vld [vmem:[%s295 + $0x2678] sm:$0xff]
        %v1665 = vld [vmem:[%s295 + $0x2680] sm:$0xff]
        %v1666 = vld [vmem:[%s295 + $0x2688] sm:$0xff]
        %v1667 = vld [vmem:[%s295 + $0x2690] sm:$0xff]
        %v1668 = vld [vmem:[%s295 + $0x2698] sm:$0xff]
        %v1669 = vld [vmem:[%s295 + $0x26a0] sm:$0xff]
        %v1670 = vld [vmem:[%s295 + $0x26a8] sm:$0xff]
        %v1671 = vld [vmem:[%s295 + $0x26b0] sm:$0xff]
        %v1672 = vld [vmem:[%s295 + $0x26b8] sm:$0xff]
        %v1673 = vld [vmem:[%s295 + $0x26c0] sm:$0xff]
        %v1674 = vld [vmem:[%s295 + $0x26c8] sm:$0xff]
        %v1675 = vld [vmem:[%s295 + $0x26d0] sm:$0xff]
        %v1676 = vld [vmem:[%s295 + $0x26d8] sm:$0xff]
        %v1677 = vld [vmem:[%s295 + $0x26e0] sm:$0xff]
        %v1678 = vld [vmem:[%s295 + $0x26e8] sm:$0xff]
        %v1679 = vld [vmem:[%s295 + $0x26f0] sm:$0xff]
        %v1680 = vld [vmem:[%s295 + $0x26f8] sm:$0xff]
        %v1681 = vld [vmem:[%s295 + $0x2700] sm:$0xff]
        %v1682 = vld [vmem:[%s295 + $0x2708] sm:$0xff]
        %v1683 = vld [vmem:[%s295 + $0x2710] sm:$0xff]
        %v1684 = vld [vmem:[%s295 + $0x2718] sm:$0xff]
        %v1685 = vld [vmem:[%s295 + $0x2720] sm:$0xff]
        %v1686 = vld [vmem:[%s295 + $0x2728] sm:$0xff]
        %v1687 = vld [vmem:[%s295 + $0x2730] sm:$0xff]
        %v1688 = vld [vmem:[%s295 + $0x2738] sm:$0xff]
        %v1689 = vld [vmem:[%s295 + $0x2740] sm:$0xff]
        %v1690 = vld [vmem:[%s295 + $0x2748] sm:$0xff]
        %v1691 = vld [vmem:[%s295 + $0x2750] sm:$0xff]
        %v1692 = vld [vmem:[%s295 + $0x2758] sm:$0xff]
        %v1693 = vld [vmem:[%s295 + $0x2760] sm:$0xff]
        %v1694 = vld [vmem:[%s295 + $0x2768] sm:$0xff]
        %v1695 = vld [vmem:[%s295 + $0x2770] sm:$0xff]
        %v1696 = vld [vmem:[%s295 + $0x2778] sm:$0xff]
        %v1697 = vld [vmem:[%s295 + $0x2780] sm:$0xff]
        %v1698 = vld [vmem:[%s295 + $0x2788] sm:$0xff]
        %v1699 = vld [vmem:[%s295 + $0x2790] sm:$0xff]
        %v1700 = vld [vmem:[%s295 + $0x2798] sm:$0xff]
        %v1701 = vld [vmem:[%s295 + $0x27a0] sm:$0xff]
        %v1702 = vld [vmem:[%s295 + $0x27a8] sm:$0xff]
        %v1703 = vld [vmem:[%s295 + $0x27b0] sm:$0xff]
        %v1704 = vld [vmem:[%s295 + $0x27b8] sm:$0xff]
        %v1705 = vld [vmem:[%s295 + $0x27c0] sm:$0xff]
        %v1706 = vld [vmem:[%s295 + $0x27c8] sm:$0xff]
        %v1707 = vld [vmem:[%s295 + $0x27d0] sm:$0xff]
        %v1708 = vld [vmem:[%s295 + $0x27d8] sm:$0xff]
        %v1709 = vld [vmem:[%s295 + $0x27e0] sm:$0xff]
        %v1710 = vld [vmem:[%s295 + $0x27e8] sm:$0xff]
        %v1711 = vld [vmem:[%s295 + $0x27f0] sm:$0xff]
        %v1712 = vld [vmem:[%s295 + $0x27f8] sm:$0xff]
        %v1713 = vld [vmem:[%s295 + $0x2800] sm:$0xff]
        %v1714 = vld [vmem:[%s295 + $0x2808] sm:$0xff]
        %v1715 = vld [vmem:[%s295 + $0x2810] sm:$0xff]
        %v1716 = vld [vmem:[%s295 + $0x2818] sm:$0xff]
        %v1717 = vld [vmem:[%s295 + $0x2820] sm:$0xff]
        %v1718 = vld [vmem:[%s295 + $0x2828] sm:$0xff]
        %v1719 = vld [vmem:[%s295 + $0x2830] sm:$0xff]
        %v1720 = vld [vmem:[%s295 + $0x2838] sm:$0xff]
        %v1721 = vld [vmem:[%s295 + $0x2840] sm:$0xff]
        %v1722 = vld [vmem:[%s295 + $0x2848] sm:$0xff]
        %v1723 = vld [vmem:[%s295 + $0x2850] sm:$0xff]
        %v1724 = vld [vmem:[%s295 + $0x2858] sm:$0xff]
        %v1725 = vld [vmem:[%s295 + $0x2860] sm:$0xff]
        %v1726 = vld [vmem:[%s295 + $0x2868] sm:$0xff]
        %v1727 = vld [vmem:[%s295 + $0x2870] sm:$0xff]
        %v1728 = vld [vmem:[%s295 + $0x2878] sm:$0xff]
        %v1729 = vld [vmem:[%s295 + $0x2880] sm:$0xff]
        %v1730 = vld [vmem:[%s295 + $0x2888] sm:$0xff]
        %v1731 = vld [vmem:[%s295 + $0x2890] sm:$0xff]
        %v1732 = vld [vmem:[%s295 + $0x2898] sm:$0xff]
        %v1733 = vld [vmem:[%s295 + $0x28a0] sm:$0xff]
        %v1734 = vld [vmem:[%s295 + $0x28a8] sm:$0xff]
        %v1735 = vld [vmem:[%s295 + $0x28b0] sm:$0xff]
        %v1736 = vld [vmem:[%s295 + $0x28b8] sm:$0xff]
        %v1737 = vld [vmem:[%s295 + $0x28c0] sm:$0xff]
        %v1738 = vld [vmem:[%s295 + $0x28c8] sm:$0xff]
        %v1739 = vld [vmem:[%s295 + $0x28d0] sm:$0xff]
        %v1740 = vld [vmem:[%s295 + $0x28d8] sm:$0xff]
        %v1741 = vld [vmem:[%s295 + $0x28e0] sm:$0xff]
        %v1742 = vld [vmem:[%s295 + $0x28e8] sm:$0xff]
        %v1743 = vld [vmem:[%s295 + $0x28f0] sm:$0xff]
        %v1744 = vld [vmem:[%s295 + $0x28f8] sm:$0xff]
        %v1745 = vld [vmem:[%s295 + $0x2900] sm:$0xff]
        %v1746 = vld [vmem:[%s295 + $0x2908] sm:$0xff]
        %v1747 = vld [vmem:[%s295 + $0x2910] sm:$0xff]
        %v1748 = vld [vmem:[%s295 + $0x2918] sm:$0xff]
        %v1749 = vld [vmem:[%s295 + $0x2920] sm:$0xff]
        %v1750 = vld [vmem:[%s295 + $0x2928] sm:$0xff]
        %v1751 = vld [vmem:[%s295 + $0x2930] sm:$0xff]
        %v1752 = vld [vmem:[%s295 + $0x2938] sm:$0xff]
        %v1753 = vld [vmem:[%s295 + $0x2940] sm:$0xff]
        %v1754 = vld [vmem:[%s295 + $0x2948] sm:$0xff]
        %v1755 = vld [vmem:[%s295 + $0x2950] sm:$0xff]
        %v1756 = vld [vmem:[%s295 + $0x2958] sm:$0xff]
        %v1757 = vld [vmem:[%s295 + $0x2960] sm:$0xff]
        %v1758 = vld [vmem:[%s295 + $0x2968] sm:$0xff]
        %v1759 = vld [vmem:[%s295 + $0x2970] sm:$0xff]
        %v1760 = vld [vmem:[%s295 + $0x2978] sm:$0xff]
        %v1761 = vld [vmem:[%s295 + $0x2980] sm:$0xff]
        %v1762 = vld [vmem:[%s295 + $0x2988] sm:$0xff]
        %v1763 = vld [vmem:[%s295 + $0x2990] sm:$0xff]
        %v1764 = vld [vmem:[%s295 + $0x2998] sm:$0xff]
        %v1765 = vld [vmem:[%s295 + $0x29a0] sm:$0xff]
        %v1766 = vld [vmem:[%s295 + $0x29a8] sm:$0xff]
        %v1767 = vld [vmem:[%s295 + $0x29b0] sm:$0xff]
        %v1768 = vld [vmem:[%s295 + $0x29b8] sm:$0xff]
        %v1769 = vld [vmem:[%s295 + $0x29c0] sm:$0xff]
        %v1770 = vld [vmem:[%s295 + $0x29c8] sm:$0xff]
        %v1771 = vld [vmem:[%s295 + $0x29d0] sm:$0xff]
        %v1772 = vld [vmem:[%s295 + $0x29d8] sm:$0xff]
        %v1773 = vld [vmem:[%s295 + $0x29e0] sm:$0xff]
        %v1774 = vld [vmem:[%s295 + $0x29e8] sm:$0xff]
        %v1775 = vld [vmem:[%s295 + $0x29f0] sm:$0xff]
        %v1776 = vld [vmem:[%s295 + $0x29f8] sm:$0xff]
        %v1777 = vld [vmem:[%s295 + $0x2a00] sm:$0xff]
        %v1778 = vld [vmem:[%s295 + $0x2a08] sm:$0xff]
        %v1779 = vld [vmem:[%s295 + $0x2a10] sm:$0xff]
        %v1780 = vld [vmem:[%s295 + $0x2a18] sm:$0xff]
        %v1781 = vld [vmem:[%s295 + $0x2a20] sm:$0xff]
        %v1782 = vld [vmem:[%s295 + $0x2a28] sm:$0xff]
        %v1783 = vld [vmem:[%s295 + $0x2a30] sm:$0xff]
        %v1784 = vld [vmem:[%s295 + $0x2a38] sm:$0xff]
        %v1785 = vld [vmem:[%s295 + $0x2a40] sm:$0xff]
        %v1786 = vld [vmem:[%s295 + $0x2a48] sm:$0xff]
        %v1787 = vld [vmem:[%s295 + $0x2a50] sm:$0xff]
        %v1788 = vld [vmem:[%s295 + $0x2a58] sm:$0xff]
        %v1789 = vld [vmem:[%s295 + $0x2a60] sm:$0xff]
        %v1790 = vld [vmem:[%s295 + $0x2a68] sm:$0xff]
        %v1791 = vld [vmem:[%s295 + $0x2a70] sm:$0xff]
        %v1792 = vld [vmem:[%s295 + $0x2a78] sm:$0xff]
        %v1793 = vld [vmem:[%s295 + $0x2a80] sm:$0xff]
        %v1794 = vld [vmem:[%s295 + $0x2a88] sm:$0xff]
        %v1795 = vld [vmem:[%s295 + $0x2a90] sm:$0xff]
        %v1796 = vld [vmem:[%s295 + $0x2a98] sm:$0xff]
        %v1797 = vld [vmem:[%s295 + $0x2aa0] sm:$0xff]
        %v1798 = vld [vmem:[%s295 + $0x2aa8] sm:$0xff]
        %v1799 = vld [vmem:[%s295 + $0x2ab0] sm:$0xff]
        %v1800 = vld [vmem:[%s295 + $0x2ab8] sm:$0xff]
        %v1801 = vld [vmem:[%s295 + $0x2ac0] sm:$0xff]
        %v1802 = vld [vmem:[%s295 + $0x2ac8] sm:$0xff]
        %v1803 = vld [vmem:[%s295 + $0x2ad0] sm:$0xff]
        %v1804 = vld [vmem:[%s295 + $0x2ad8] sm:$0xff]
        %v1805 = vld [vmem:[%s295 + $0x2ae0] sm:$0xff]
        %v1806 = vld [vmem:[%s295 + $0x2ae8] sm:$0xff]
        %v1807 = vld [vmem:[%s295 + $0x2af0] sm:$0xff]
        %v1808 = vld [vmem:[%s295 + $0x2af8] sm:$0xff]
        %v1809 = vld [vmem:[%s295 + $0x2b00] sm:$0xff]
        %v1810 = vld [vmem:[%s295 + $0x2b08] sm:$0xff]
        %v1811 = vld [vmem:[%s295 + $0x2b10] sm:$0xff]
        %v1812 = vld [vmem:[%s295 + $0x2b18] sm:$0xff]
        %v1813 = vld [vmem:[%s295 + $0x2b20] sm:$0xff]
        %v1814 = vld [vmem:[%s295 + $0x2b28] sm:$0xff]
        %v1815 = vld [vmem:[%s295 + $0x2b30] sm:$0xff]
        %v1816 = vld [vmem:[%s295 + $0x2b38] sm:$0xff]
        %v1817 = vld [vmem:[%s295 + $0x2b40] sm:$0xff]
        %v1818 = vld [vmem:[%s295 + $0x2b48] sm:$0xff]
        %v1819 = vld [vmem:[%s295 + $0x2b50] sm:$0xff]
        %v1820 = vld [vmem:[%s295 + $0x2b58] sm:$0xff]
        %v1821 = vld [vmem:[%s295 + $0x2b60] sm:$0xff]
        %v1822 = vld [vmem:[%s295 + $0x2b68] sm:$0xff]
        %v1823 = vld [vmem:[%s295 + $0x2b70] sm:$0xff]
        %v1824 = vld [vmem:[%s295 + $0x2b78] sm:$0xff]
        %v1825 = vld [vmem:[%s295 + $0x2b80] sm:$0xff]
        %v1826 = vld [vmem:[%s295 + $0x2b88] sm:$0xff]
        %v1827 = vld [vmem:[%s295 + $0x2b90] sm:$0xff]
        %v1828 = vld [vmem:[%s295 + $0x2b98] sm:$0xff]
        %v1829 = vld [vmem:[%s295 + $0x2ba0] sm:$0xff]
        %v1830 = vld [vmem:[%s295 + $0x2ba8] sm:$0xff]
        %v1831 = vld [vmem:[%s295 + $0x2bb0] sm:$0xff]
        %v1832 = vld [vmem:[%s295 + $0x2bb8] sm:$0xff]
        %v1833 = vld [vmem:[%s295 + $0x2bc0] sm:$0xff]
        %v1834 = vld [vmem:[%s295 + $0x2bc8] sm:$0xff]
        %v1835 = vld [vmem:[%s295 + $0x2bd0] sm:$0xff]
        %v1836 = vld [vmem:[%s295 + $0x2bd8] sm:$0xff]
        %v1837 = vld [vmem:[%s295 + $0x2be0] sm:$0xff]
        %v1838 = vld [vmem:[%s295 + $0x2be8] sm:$0xff]
        %v1839 = vld [vmem:[%s295 + $0x2bf0] sm:$0xff]
        %v1840 = vld [vmem:[%s295 + $0x2bf8] sm:$0xff]
        %v1841 = vld [vmem:[%s295 + $0x2c00] sm:$0xff]
        %v1842 = vld [vmem:[%s295 + $0x2c08] sm:$0xff]
        %v1843 = vld [vmem:[%s295 + $0x2c10] sm:$0xff]
        %v1844 = vld [vmem:[%s295 + $0x2c18] sm:$0xff]
        %v1845 = vld [vmem:[%s295 + $0x2c20] sm:$0xff]
        %v1846 = vld [vmem:[%s295 + $0x2c28] sm:$0xff]
        %v1847 = vld [vmem:[%s295 + $0x2c30] sm:$0xff]
        %v1848 = vld [vmem:[%s295 + $0x2c38] sm:$0xff]
        %v1849 = vld [vmem:[%s295 + $0x2c40] sm:$0xff]
        %v1850 = vld [vmem:[%s295 + $0x2c48] sm:$0xff]
        %v1851 = vld [vmem:[%s295 + $0x2c50] sm:$0xff]
        %v1852 = vld [vmem:[%s295 + $0x2c58] sm:$0xff]
        %v1853 = vld [vmem:[%s295 + $0x2c60] sm:$0xff]
        %v1854 = vld [vmem:[%s295 + $0x2c68] sm:$0xff]
        %v1855 = vld [vmem:[%s295 + $0x2c70] sm:$0xff]
        %v1856 = vld [vmem:[%s295 + $0x2c78] sm:$0xff]
        %v1857 = vld [vmem:[%s295 + $0x2c80] sm:$0xff]
        %v1858 = vld [vmem:[%s295 + $0x2c88] sm:$0xff]
        %v1859 = vld [vmem:[%s295 + $0x2c90] sm:$0xff]
        %v1860 = vld [vmem:[%s295 + $0x2c98] sm:$0xff]
        %v1861 = vld [vmem:[%s295 + $0x2ca0] sm:$0xff]
        %v1862 = vld [vmem:[%s295 + $0x2ca8] sm:$0xff]
        %v1863 = vld [vmem:[%s295 + $0x2cb0] sm:$0xff]
        %v1864 = vld [vmem:[%s295 + $0x2cb8] sm:$0xff]
        %v1865 = vld [vmem:[%s295 + $0x2cc0] sm:$0xff]
        %v1866 = vld [vmem:[%s295 + $0x2cc8] sm:$0xff]
        %v1867 = vld [vmem:[%s295 + $0x2cd0] sm:$0xff]
        %v1868 = vld [vmem:[%s295 + $0x2cd8] sm:$0xff]
        %v1869 = vld [vmem:[%s295 + $0x2ce0] sm:$0xff]
        %v1870 = vld [vmem:[%s295 + $0x2ce8] sm:$0xff]
        %v1871 = vld [vmem:[%s295 + $0x2cf0] sm:$0xff]
        %v1872 = vld [vmem:[%s295 + $0x2cf8] sm:$0xff]
        %v1873 = vld [vmem:[%s295 + $0x2d00] sm:$0xff]
        %v1874 = vld [vmem:[%s295 + $0x2d08] sm:$0xff]
        %v1875 = vld [vmem:[%s295 + $0x2d10] sm:$0xff]
        %v1876 = vld [vmem:[%s295 + $0x2d18] sm:$0xff]
        %v1877 = vld [vmem:[%s295 + $0x2d20] sm:$0xff]
        %v1878 = vld [vmem:[%s295 + $0x2d28] sm:$0xff]
        %v1879 = vld [vmem:[%s295 + $0x2d30] sm:$0xff]
        %v1880 = vld [vmem:[%s295 + $0x2d38] sm:$0xff]
        %v1881 = vld [vmem:[%s295 + $0x2d40] sm:$0xff]
        %v1882 = vld [vmem:[%s295 + $0x2d48] sm:$0xff]
        %v1883 = vld [vmem:[%s295 + $0x2d50] sm:$0xff]
        %v1884 = vld [vmem:[%s295 + $0x2d58] sm:$0xff]
        %v1885 = vld [vmem:[%s295 + $0x2d60] sm:$0xff]
        %v1886 = vld [vmem:[%s295 + $0x2d68] sm:$0xff]
        %v1887 = vld [vmem:[%s295 + $0x2d70] sm:$0xff]
        %v1888 = vld [vmem:[%s295 + $0x2d78] sm:$0xff]
        %v1889 = vld [vmem:[%s295 + $0x2d80] sm:$0xff]
        %v1890 = vld [vmem:[%s295 + $0x2d88] sm:$0xff]
        %v1891 = vld [vmem:[%s295 + $0x2d90] sm:$0xff]
        %v1892 = vld [vmem:[%s295 + $0x2d98] sm:$0xff]
        %v1893 = vld [vmem:[%s295 + $0x2da0] sm:$0xff]
        %v1894 = vld [vmem:[%s295 + $0x2da8] sm:$0xff]
        %v1895 = vld [vmem:[%s295 + $0x2db0] sm:$0xff]
        %v1896 = vld [vmem:[%s295 + $0x2db8] sm:$0xff]
        %v1897 = vld [vmem:[%s295 + $0x2dc0] sm:$0xff]
        %v1898 = vld [vmem:[%s295 + $0x2dc8] sm:$0xff]
        %v1899 = vld [vmem:[%s295 + $0x2dd0] sm:$0xff]
        %v1900 = vld [vmem:[%s295 + $0x2dd8] sm:$0xff]
        %v1901 = vld [vmem:[%s295 + $0x2de0] sm:$0xff]
        %v1902 = vld [vmem:[%s295 + $0x2de8] sm:$0xff]
        %v1903 = vld [vmem:[%s295 + $0x2df0] sm:$0xff]
        %v1904 = vld [vmem:[%s295 + $0x2df8] sm:$0xff]
        %v1905 = vld [vmem:[%s295 + $0x2e00] sm:$0xff]
        %v1906 = vld [vmem:[%s295 + $0x2e08] sm:$0xff]
        %v1907 = vld [vmem:[%s295 + $0x2e10] sm:$0xff]
        %v1908 = vld [vmem:[%s295 + $0x2e18] sm:$0xff]
        %v1909 = vld [vmem:[%s295 + $0x2e20] sm:$0xff]
        %v1910 = vld [vmem:[%s295 + $0x2e28] sm:$0xff]
        %v1911 = vld [vmem:[%s295 + $0x2e30] sm:$0xff]
        %v1912 = vld [vmem:[%s295 + $0x2e38] sm:$0xff]
        %v1913 = vld [vmem:[%s295 + $0x2e40] sm:$0xff]
        %v1914 = vld [vmem:[%s295 + $0x2e48] sm:$0xff]
        %v1915 = vld [vmem:[%s295 + $0x2e50] sm:$0xff]
        %v1916 = vld [vmem:[%s295 + $0x2e58] sm:$0xff]
        %v1917 = vld [vmem:[%s295 + $0x2e60] sm:$0xff]
        %v1918 = vld [vmem:[%s295 + $0x2e68] sm:$0xff]
        %v1919 = vld [vmem:[%s295 + $0x2e70] sm:$0xff]
        %v1920 = vld [vmem:[%s295 + $0x2e78] sm:$0xff]
        %v1921 = vld [vmem:[%s295 + $0x2e80] sm:$0xff]
        %v1922 = vld [vmem:[%s295 + $0x2e88] sm:$0xff]
        %v1923 = vld [vmem:[%s295 + $0x2e90] sm:$0xff]
        %v1924 = vld [vmem:[%s295 + $0x2e98] sm:$0xff]
        %v1925 = vld [vmem:[%s295 + $0x2ea0] sm:$0xff]
        %v1926 = vld [vmem:[%s295 + $0x2ea8] sm:$0xff]
        %v1927 = vld [vmem:[%s295 + $0x2eb0] sm:$0xff]
        %v1928 = vld [vmem:[%s295 + $0x2eb8] sm:$0xff]
        %v1929 = vld [vmem:[%s295 + $0x2ec0] sm:$0xff]
        %v1930 = vld [vmem:[%s295 + $0x2ec8] sm:$0xff]
        %v1931 = vld [vmem:[%s295 + $0x2ed0] sm:$0xff]
        %v1932 = vld [vmem:[%s295 + $0x2ed8] sm:$0xff]
        %v1933 = vld [vmem:[%s295 + $0x2ee0] sm:$0xff]
        %v1934 = vld [vmem:[%s295 + $0x2ee8] sm:$0xff]
        %v1935 = vld [vmem:[%s295 + $0x2ef0] sm:$0xff]
        %v1936 = vld [vmem:[%s295 + $0x2ef8] sm:$0xff]
        %v1937 = vld [vmem:[%s295 + $0x2f00] sm:$0xff]
        %v1938 = vld [vmem:[%s295 + $0x2f08] sm:$0xff]
        %v1939 = vld [vmem:[%s295 + $0x2f10] sm:$0xff]
        %v1940 = vld [vmem:[%s295 + $0x2f18] sm:$0xff]
        %v1941 = vld [vmem:[%s295 + $0x2f20] sm:$0xff]
        %v1942 = vld [vmem:[%s295 + $0x2f28] sm:$0xff]
        %v1943 = vld [vmem:[%s295 + $0x2f30] sm:$0xff]
        %v1944 = vld [vmem:[%s295 + $0x2f38] sm:$0xff]
        %v1945 = vld [vmem:[%s295 + $0x2f40] sm:$0xff]
        %v1946 = vld [vmem:[%s295 + $0x2f48] sm:$0xff]
        %v1947 = vld [vmem:[%s295 + $0x2f50] sm:$0xff]
        %v1948 = vld [vmem:[%s295 + $0x2f58] sm:$0xff]
        %v1949 = vld [vmem:[%s295 + $0x2f60] sm:$0xff]
        %v1950 = vld [vmem:[%s295 + $0x2f68] sm:$0xff]
        %v1951 = vld [vmem:[%s295 + $0x2f70] sm:$0xff]
        %v1952 = vld [vmem:[%s295 + $0x2f78] sm:$0xff]
        %v1953 = vld [vmem:[%s295 + $0x2f80] sm:$0xff]
        %v1954 = vld [vmem:[%s295 + $0x2f88] sm:$0xff]
        %v1955 = vld [vmem:[%s295 + $0x2f90] sm:$0xff]
        %v1956 = vld [vmem:[%s295 + $0x2f98] sm:$0xff]
        %v1957 = vld [vmem:[%s295 + $0x2fa0] sm:$0xff]
        %v1958 = vld [vmem:[%s295 + $0x2fa8] sm:$0xff]
        %v1959 = vld [vmem:[%s295 + $0x2fb0] sm:$0xff]
        %v1960 = vld [vmem:[%s295 + $0x2fb8] sm:$0xff]
        %v1961 = vld [vmem:[%s295 + $0x2fc0] sm:$0xff]
        %v1962 = vld [vmem:[%s295 + $0x2fc8] sm:$0xff]
        %v1963 = vld [vmem:[%s295 + $0x2fd0] sm:$0xff]
        %v1964 = vld [vmem:[%s295 + $0x2fd8] sm:$0xff]
        %v1965 = vld [vmem:[%s295 + $0x2fe0] sm:$0xff]
        %v1966 = vld [vmem:[%s295 + $0x2fe8] sm:$0xff]
        %v1967 = vld [vmem:[%s295 + $0x2ff0] sm:$0xff]
        %v1968 = vld [vmem:[%s295 + $0x2ff8] sm:$0xff]
        %v1969 = vld [vmem:[%s295 + $0x3000] sm:$0xff]
        %v1970 = vld [vmem:[%s295 + $0x3008] sm:$0xff]
        %v1971 = vld [vmem:[%s295 + $0x3010] sm:$0xff]
        %v1972 = vld [vmem:[%s295 + $0x3018] sm:$0xff]
        %v1973 = vld [vmem:[%s295 + $0x3020] sm:$0xff]
        %v1974 = vld [vmem:[%s295 + $0x3028] sm:$0xff]
        %v1975 = vld [vmem:[%s295 + $0x3030] sm:$0xff]
        %v1976 = vld [vmem:[%s295 + $0x3038] sm:$0xff]
        %v1977 = vld [vmem:[%s295 + $0x3040] sm:$0xff]
        %v1978 = vld [vmem:[%s295 + $0x3048] sm:$0xff]
        %v1979 = vld [vmem:[%s295 + $0x3050] sm:$0xff]
        %v1980 = vld [vmem:[%s295 + $0x3058] sm:$0xff]
        %v1981 = vld [vmem:[%s295 + $0x3060] sm:$0xff]
        %v1982 = vld [vmem:[%s295 + $0x3068] sm:$0xff]
        %v1983 = vld [vmem:[%s295 + $0x3070] sm:$0xff]
        %v1984 = vld [vmem:[%s295 + $0x3078] sm:$0xff]
        %v1985 = vld [vmem:[%s295 + $0x3080] sm:$0xff]
        %v1986 = vld [vmem:[%s295 + $0x3088] sm:$0xff]
        %v1987 = vld [vmem:[%s295 + $0x3090] sm:$0xff]
        %v1988 = vld [vmem:[%s295 + $0x3098] sm:$0xff]
        %v1989 = vld [vmem:[%s295 + $0x30a0] sm:$0xff]
        %v1990 = vld [vmem:[%s295 + $0x30a8] sm:$0xff]
        %v1991 = vld [vmem:[%s295 + $0x30b0] sm:$0xff]
        %v1992 = vld [vmem:[%s295 + $0x30b8] sm:$0xff]
        %v1993 = vld [vmem:[%s295 + $0x30c0] sm:$0xff]
        %v1994 = vld [vmem:[%s295 + $0x30c8] sm:$0xff]
        %v1995 = vld [vmem:[%s295 + $0x30d0] sm:$0xff]
        %v1996 = vld [vmem:[%s295 + $0x30d8] sm:$0xff]
        %v1997 = vld [vmem:[%s295 + $0x30e0] sm:$0xff]
        %v1998 = vld [vmem:[%s295 + $0x30e8] sm:$0xff]
        %v1999 = vld [vmem:[%s295 + $0x30f0] sm:$0xff]
        %v2000 = vld [vmem:[%s295 + $0x30f8] sm:$0xff]
        %v2001 = vld [vmem:[%s295 + $0x3100] sm:$0xff]
        %v2002 = vld [vmem:[%s295 + $0x3108] sm:$0xff]
        %v2003 = vld [vmem:[%s295 + $0x3110] sm:$0xff]
        %v2004 = vld [vmem:[%s295 + $0x3118] sm:$0xff]
        %v2005 = vld [vmem:[%s295 + $0x3120] sm:$0xff]
        %v2006 = vld [vmem:[%s295 + $0x3128] sm:$0xff]
        %v2007 = vld [vmem:[%s295 + $0x3130] sm:$0xff]
        %v2008 = vld [vmem:[%s295 + $0x3138] sm:$0xff]
        %v2009 = vld [vmem:[%s295 + $0x3140] sm:$0xff]
        %v2010 = vld [vmem:[%s295 + $0x3148] sm:$0xff]
        %v2011 = vld [vmem:[%s295 + $0x3150] sm:$0xff]
        %v2012 = vld [vmem:[%s295 + $0x3158] sm:$0xff]
        %v2013 = vld [vmem:[%s295 + $0x3160] sm:$0xff]
        %v2014 = vld [vmem:[%s295 + $0x3168] sm:$0xff]
        %v2015 = vld [vmem:[%s295 + $0x3170] sm:$0xff]
        %v2016 = vld [vmem:[%s295 + $0x3178] sm:$0xff]
        %v2017 = vld [vmem:[%s295 + $0x3180] sm:$0xff]
        %v2018 = vld [vmem:[%s295 + $0x3188] sm:$0xff]
        %v2019 = vld [vmem:[%s295 + $0x3190] sm:$0xff]
        %v2020 = vld [vmem:[%s295 + $0x3198] sm:$0xff]
        %v2021 = vld [vmem:[%s295 + $0x31a0] sm:$0xff]
        %v2022 = vld [vmem:[%s295 + $0x31a8] sm:$0xff]
        %v2023 = vld [vmem:[%s295 + $0x31b0] sm:$0xff]
        %v2024 = vld [vmem:[%s295 + $0x31b8] sm:$0xff]
        %v2025 = vld [vmem:[%s295 + $0x31c0] sm:$0xff]
        %v2026 = vld [vmem:[%s295 + $0x31c8] sm:$0xff]
        %v2027 = vld [vmem:[%s295 + $0x31d0] sm:$0xff]
        %v2028 = vld [vmem:[%s295 + $0x31d8] sm:$0xff]
        %v2029 = vld [vmem:[%s295 + $0x31e0] sm:$0xff]
        %v2030 = vld [vmem:[%s295 + $0x31e8] sm:$0xff]
        %v2031 = vld [vmem:[%s295 + $0x31f0] sm:$0xff]
        %v2032 = vld [vmem:[%s295 + $0x31f8] sm:$0xff]
        %v2033 = vld [vmem:[%s295 + $0x3200] sm:$0xff]
        %v2034 = vld [vmem:[%s295 + $0x3208] sm:$0xff]
        %v2035 = vld [vmem:[%s295 + $0x3210] sm:$0xff]
        %v2036 = vld [vmem:[%s295 + $0x3218] sm:$0xff]
        %v2037 = vld [vmem:[%s295 + $0x3220] sm:$0xff]
        %v2038 = vld [vmem:[%s295 + $0x3228] sm:$0xff]
        %v2039 = vld [vmem:[%s295 + $0x3230] sm:$0xff]
        %v2040 = vld [vmem:[%s295 + $0x3238] sm:$0xff]
        %v2041 = vld [vmem:[%s295 + $0x3240] sm:$0xff]
        %v2042 = vld [vmem:[%s295 + $0x3248] sm:$0xff]
        %v2043 = vld [vmem:[%s295 + $0x3250] sm:$0xff]
        %v2044 = vld [vmem:[%s295 + $0x3258] sm:$0xff]
        %v2045 = vld [vmem:[%s295 + $0x3260] sm:$0xff]
        %v2046 = vld [vmem:[%s295 + $0x3268] sm:$0xff]
        %v2047 = vld [vmem:[%s295 + $0x3270] sm:$0xff]
        %v2048 = vld [vmem:[%s295 + $0x3278] sm:$0xff]
        %v2049 = vld [vmem:[%s295 + $0x3280] sm:$0xff]
        %v2050 = vld [vmem:[%s295 + $0x3288] sm:$0xff]
        %v2051 = vld [vmem:[%s295 + $0x3290] sm:$0xff]
        %v2052 = vld [vmem:[%s295 + $0x3298] sm:$0xff]
        %v2053 = vld [vmem:[%s295 + $0x32a0] sm:$0xff]
        %v2054 = vld [vmem:[%s295 + $0x32a8] sm:$0xff]
        %v2055 = vld [vmem:[%s295 + $0x32b0] sm:$0xff]
        %v2056 = vld [vmem:[%s295 + $0x32b8] sm:$0xff]
        %v2057 = vld [vmem:[%s295 + $0x32c0] sm:$0xff]
        %v2058 = vld [vmem:[%s295 + $0x32c8] sm:$0xff]
        %v2059 = vld [vmem:[%s295 + $0x32d0] sm:$0xff]
        %v2060 = vld [vmem:[%s295 + $0x32d8] sm:$0xff]
        %v2061 = vld [vmem:[%s295 + $0x32e0] sm:$0xff]
        %v2062 = vld [vmem:[%s295 + $0x32e8] sm:$0xff]
        %v2063 = vld [vmem:[%s295 + $0x32f0] sm:$0xff]
        %v2064 = vld [vmem:[%s295 + $0x32f8] sm:$0xff]
        %v2065 = vld [vmem:[%s295 + $0x3300] sm:$0xff]
        %v2066 = vld [vmem:[%s295 + $0x3308] sm:$0xff]
        %v2067 = vld [vmem:[%s295 + $0x3310] sm:$0xff]
        %v2068 = vld [vmem:[%s295 + $0x3318] sm:$0xff]
        %v2069 = vld [vmem:[%s295 + $0x3320] sm:$0xff]
        %v2070 = vld [vmem:[%s295 + $0x3328] sm:$0xff]
        %v2071 = vld [vmem:[%s295 + $0x3330] sm:$0xff]
        %v2072 = vld [vmem:[%s295 + $0x3338] sm:$0xff]
        %v2073 = vld [vmem:[%s295 + $0x3340] sm:$0xff]
        %v2074 = vld [vmem:[%s295 + $0x3348] sm:$0xff]
        %v2075 = vld [vmem:[%s295 + $0x3350] sm:$0xff]
        %v2076 = vld [vmem:[%s295 + $0x3358] sm:$0xff]
        %v2077 = vld [vmem:[%s295 + $0x3360] sm:$0xff]
        %v2078 = vld [vmem:[%s295 + $0x3368] sm:$0xff]
        %v2079 = vld [vmem:[%s295 + $0x3370] sm:$0xff]
        %v2080 = vld [vmem:[%s295 + $0x3378] sm:$0xff]
        %v2081 = vld [vmem:[%s295 + $0x3380] sm:$0xff]
        %v2082 = vld [vmem:[%s295 + $0x3388] sm:$0xff]
        %v2083 = vld [vmem:[%s295 + $0x3390] sm:$0xff]
        %v2084 = vld [vmem:[%s295 + $0x3398] sm:$0xff]
        %v2085 = vld [vmem:[%s295 + $0x33a0] sm:$0xff]
        %v2086 = vld [vmem:[%s295 + $0x33a8] sm:$0xff]
        %v2087 = vld [vmem:[%s295 + $0x33b0] sm:$0xff]
        %v2088 = vld [vmem:[%s295 + $0x33b8] sm:$0xff]
        %v2089 = vld [vmem:[%s295 + $0x33c0] sm:$0xff]
        %v2090 = vld [vmem:[%s295 + $0x33c8] sm:$0xff]
        %v2091 = vld [vmem:[%s295 + $0x33d0] sm:$0xff]
        %v2092 = vld [vmem:[%s295 + $0x33d8] sm:$0xff]
        %v2093 = vld [vmem:[%s295 + $0x33e0] sm:$0xff]
        %v2094 = vld [vmem:[%s295 + $0x33e8] sm:$0xff]
        %v2095 = vld [vmem:[%s295 + $0x33f0] sm:$0xff]
        %v2096 = vld [vmem:[%s295 + $0x33f8] sm:$0xff]
        %v2097 = vld [vmem:[%s295 + $0x3400] sm:$0xff]
        %v2098 = vld [vmem:[%s295 + $0x3408] sm:$0xff]
        %v2099 = vld [vmem:[%s295 + $0x3410] sm:$0xff]
        %v2100 = vld [vmem:[%s295 + $0x3418] sm:$0xff]
        %v2101 = vld [vmem:[%s295 + $0x3420] sm:$0xff]
        %v2102 = vld [vmem:[%s295 + $0x3428] sm:$0xff]
        %v2103 = vld [vmem:[%s295 + $0x3430] sm:$0xff]
        %v2104 = vld [vmem:[%s295 + $0x3438] sm:$0xff]
        %v2105 = vld [vmem:[%s295 + $0x3440] sm:$0xff]
        %v2106 = vld [vmem:[%s295 + $0x3448] sm:$0xff]
        %v2107 = vld [vmem:[%s295 + $0x3450] sm:$0xff]
        %v2108 = vld [vmem:[%s295 + $0x3458] sm:$0xff]
        %v2109 = vld [vmem:[%s295 + $0x3460] sm:$0xff]
        %v2110 = vld [vmem:[%s295 + $0x3468] sm:$0xff]
        %v2111 = vld [vmem:[%s295 + $0x3470] sm:$0xff]
        %v2112 = vld [vmem:[%s295 + $0x3478] sm:$0xff]
        %v2113 = vld [vmem:[%s295 + $0x3480] sm:$0xff]
        %v2114 = vld [vmem:[%s295 + $0x3488] sm:$0xff]
        %v2115 = vld [vmem:[%s295 + $0x3490] sm:$0xff]
        %v2116 = vld [vmem:[%s295 + $0x3498] sm:$0xff]
        %v2117 = vld [vmem:[%s295 + $0x34a0] sm:$0xff]
        %v2118 = vld [vmem:[%s295 + $0x34a8] sm:$0xff]
        %v2119 = vld [vmem:[%s295 + $0x34b0] sm:$0xff]
        %v2120 = vld [vmem:[%s295 + $0x34b8] sm:$0xff]
        %v2121 = vld [vmem:[%s295 + $0x34c0] sm:$0xff]
        %v2122 = vld [vmem:[%s295 + $0x34c8] sm:$0xff]
        %v2123 = vld [vmem:[%s295 + $0x34d0] sm:$0xff]
        %v2124 = vld [vmem:[%s295 + $0x34d8] sm:$0xff]
        %v2125 = vld [vmem:[%s295 + $0x34e0] sm:$0xff]
        %v2126 = vld [vmem:[%s295 + $0x34e8] sm:$0xff]
        %v2127 = vld [vmem:[%s295 + $0x34f0] sm:$0xff]
        %v2128 = vld [vmem:[%s295 + $0x34f8] sm:$0xff]
        %v2129 = vld [vmem:[%s295 + $0x3500] sm:$0xff]
        %v2130 = vld [vmem:[%s295 + $0x3508] sm:$0xff]
        %v2131 = vld [vmem:[%s295 + $0x3510] sm:$0xff]
        %v2132 = vld [vmem:[%s295 + $0x3518] sm:$0xff]
        %v2133 = vld [vmem:[%s295 + $0x3520] sm:$0xff]
        %v2134 = vld [vmem:[%s295 + $0x3528] sm:$0xff]
        %v2135 = vld [vmem:[%s295 + $0x3530] sm:$0xff]
        %v2136 = vld [vmem:[%s295 + $0x3538] sm:$0xff]
        %v2137 = vld [vmem:[%s295 + $0x3540] sm:$0xff]
        %v2138 = vld [vmem:[%s295 + $0x3548] sm:$0xff]
        %v2139 = vld [vmem:[%s295 + $0x3550] sm:$0xff]
        %v2140 = vld [vmem:[%s295 + $0x3558] sm:$0xff]
        %v2141 = vld [vmem:[%s295 + $0x3560] sm:$0xff]
        %v2142 = vld [vmem:[%s295 + $0x3568] sm:$0xff]
        %v2143 = vld [vmem:[%s295 + $0x3570] sm:$0xff]
        %v2144 = vld [vmem:[%s295 + $0x3578] sm:$0xff]
        %v2145 = vld [vmem:[%s295 + $0x3580] sm:$0xff]
        %v2146 = vld [vmem:[%s295 + $0x3588] sm:$0xff]
        %v2147 = vld [vmem:[%s295 + $0x3590] sm:$0xff]
        %v2148 = vld [vmem:[%s295 + $0x3598] sm:$0xff]
        %v2149 = vld [vmem:[%s295 + $0x35a0] sm:$0xff]
        %v2150 = vld [vmem:[%s295 + $0x35a8] sm:$0xff]
        %v2151 = vld [vmem:[%s295 + $0x35b0] sm:$0xff]
        %v2152 = vld [vmem:[%s295 + $0x35b8] sm:$0xff]
        %v2153 = vld [vmem:[%s295 + $0x35c0] sm:$0xff]
        %v2154 = vld [vmem:[%s295 + $0x35c8] sm:$0xff]
        %v2155 = vld [vmem:[%s295 + $0x35d0] sm:$0xff]
        %v2156 = vld [vmem:[%s295 + $0x35d8] sm:$0xff]
        %v2157 = vld [vmem:[%s295 + $0x35e0] sm:$0xff]
        %v2158 = vld [vmem:[%s295 + $0x35e8] sm:$0xff]
        %v2159 = vld [vmem:[%s295 + $0x35f0] sm:$0xff]
        %v2160 = vld [vmem:[%s295 + $0x35f8] sm:$0xff]
        %v2161 = vld [vmem:[%s295 + $0x3600] sm:$0xff]
        %v2162 = vld [vmem:[%s295 + $0x3608] sm:$0xff]
        %v2163 = vld [vmem:[%s295 + $0x3610] sm:$0xff]
        %v2164 = vld [vmem:[%s295 + $0x3618] sm:$0xff]
        %v2165 = vld [vmem:[%s295 + $0x3620] sm:$0xff]
        %v2166 = vld [vmem:[%s295 + $0x3628] sm:$0xff]
        %v2167 = vld [vmem:[%s295 + $0x3630] sm:$0xff]
        %v2168 = vld [vmem:[%s295 + $0x3638] sm:$0xff]
        %v2169 = vld [vmem:[%s295 + $0x3640] sm:$0xff]
        %v2170 = vld [vmem:[%s295 + $0x3648] sm:$0xff]
        %v2171 = vld [vmem:[%s295 + $0x3650] sm:$0xff]
        %v2172 = vld [vmem:[%s295 + $0x3658] sm:$0xff]
        %v2173 = vld [vmem:[%s295 + $0x3660] sm:$0xff]
        %v2174 = vld [vmem:[%s295 + $0x3668] sm:$0xff]
        %v2175 = vld [vmem:[%s295 + $0x3670] sm:$0xff]
        %v2176 = vld [vmem:[%s295 + $0x3678] sm:$0xff]
        %v2177 = vld [vmem:[%s295 + $0x3680] sm:$0xff]
        %v2178 = vld [vmem:[%s295 + $0x3688] sm:$0xff]
        %v2179 = vld [vmem:[%s295 + $0x3690] sm:$0xff]
        %v2180 = vld [vmem:[%s295 + $0x3698] sm:$0xff]
        %v2181 = vld [vmem:[%s295 + $0x36a0] sm:$0xff]
        %v2182 = vld [vmem:[%s295 + $0x36a8] sm:$0xff]
        %v2183 = vld [vmem:[%s295 + $0x36b0] sm:$0xff]
        %v2184 = vld [vmem:[%s295 + $0x36b8] sm:$0xff]
        %v2185 = vld [vmem:[%s295 + $0x36c0] sm:$0xff]
        %v2186 = vld [vmem:[%s295 + $0x36c8] sm:$0xff]
        %v2187 = vld [vmem:[%s295 + $0x36d0] sm:$0xff]
        %v2188 = vld [vmem:[%s295 + $0x36d8] sm:$0xff]
        %v2189 = vld [vmem:[%s295 + $0x36e0] sm:$0xff]
        %v2190 = vld [vmem:[%s295 + $0x36e8] sm:$0xff]
        %v2191 = vld [vmem:[%s295 + $0x36f0] sm:$0xff]
        %v2192 = vld [vmem:[%s295 + $0x36f8] sm:$0xff]
        %v2193 = vld [vmem:[%s295 + $0x3700] sm:$0xff]
        %v2194 = vld [vmem:[%s295 + $0x3708] sm:$0xff]
        %v2195 = vld [vmem:[%s295 + $0x3710] sm:$0xff]
        %v2196 = vld [vmem:[%s295 + $0x3718] sm:$0xff]
        %v2197 = vld [vmem:[%s295 + $0x3720] sm:$0xff]
        %v2198 = vld [vmem:[%s295 + $0x3728] sm:$0xff]
        %v2199 = vld [vmem:[%s295 + $0x3730] sm:$0xff]
        %v2200 = vld [vmem:[%s295 + $0x3738] sm:$0xff]
        %v2201 = vld [vmem:[%s295 + $0x3740] sm:$0xff]
        %v2202 = vld [vmem:[%s295 + $0x3748] sm:$0xff]
        %v2203 = vld [vmem:[%s295 + $0x3750] sm:$0xff]
        %v2204 = vld [vmem:[%s295 + $0x3758] sm:$0xff]
        %v2205 = vld [vmem:[%s295 + $0x3760] sm:$0xff]
        %v2206 = vld [vmem:[%s295 + $0x3768] sm:$0xff]
        %v2207 = vld [vmem:[%s295 + $0x3770] sm:$0xff]
        %v2208 = vld [vmem:[%s295 + $0x3778] sm:$0xff]
        %v2209 = vld [vmem:[%s295 + $0x3780] sm:$0xff]
        %v2210 = vld [vmem:[%s295 + $0x3788] sm:$0xff]
        %v2211 = vld [vmem:[%s295 + $0x3790] sm:$0xff]
        %v2212 = vld [vmem:[%s295 + $0x3798] sm:$0xff]
        %v2213 = vld [vmem:[%s295 + $0x37a0] sm:$0xff]
        %v2214 = vld [vmem:[%s295 + $0x37a8] sm:$0xff]
        %v2215 = vld [vmem:[%s295 + $0x37b0] sm:$0xff]
        %v2216 = vld [vmem:[%s295 + $0x37b8] sm:$0xff]
        %v2217 = vld [vmem:[%s295 + $0x37c0] sm:$0xff]
        %v2218 = vld [vmem:[%s295 + $0x37c8] sm:$0xff]
        %v2219 = vld [vmem:[%s295 + $0x37d0] sm:$0xff]
        %v2220 = vld [vmem:[%s295 + $0x37d8] sm:$0xff]
        %v2221 = vld [vmem:[%s295 + $0x37e0] sm:$0xff]
        %v2222 = vld [vmem:[%s295 + $0x37e8] sm:$0xff]
        %v2223 = vld [vmem:[%s295 + $0x37f0] sm:$0xff]
        %v2224 = vld [vmem:[%s295 + $0x37f8] sm:$0xff]
        %v2225 = vld [vmem:[%s295 + $0x3800] sm:$0xff]
        %v2226 = vld [vmem:[%s295 + $0x3808] sm:$0xff]
        %v2227 = vld [vmem:[%s295 + $0x3810] sm:$0xff]
        %v2228 = vld [vmem:[%s295 + $0x3818] sm:$0xff]
        %v2229 = vld [vmem:[%s295 + $0x3820] sm:$0xff]
        %v2230 = vld [vmem:[%s295 + $0x3828] sm:$0xff]
        %v2231 = vld [vmem:[%s295 + $0x3830] sm:$0xff]
        %v2232 = vld [vmem:[%s295 + $0x3838] sm:$0xff]
        %v2233 = vld [vmem:[%s295 + $0x3840] sm:$0xff]
        %v2234 = vld [vmem:[%s295 + $0x3848] sm:$0xff]
        %v2235 = vld [vmem:[%s295 + $0x3850] sm:$0xff]
        %v2236 = vld [vmem:[%s295 + $0x3858] sm:$0xff]
        %v2237 = vld [vmem:[%s295 + $0x3860] sm:$0xff]
        %v2238 = vld [vmem:[%s295 + $0x3868] sm:$0xff]
        %v2239 = vld [vmem:[%s295 + $0x3870] sm:$0xff]
        %v2240 = vld [vmem:[%s295 + $0x3878] sm:$0xff]
        %v2241 = vld [vmem:[%s295 + $0x3880] sm:$0xff]
        %v2242 = vld [vmem:[%s295 + $0x3888] sm:$0xff]
        %v2243 = vld [vmem:[%s295 + $0x3890] sm:$0xff]
        %v2244 = vld [vmem:[%s295 + $0x3898] sm:$0xff]
        %v2245 = vld [vmem:[%s295 + $0x38a0] sm:$0xff]
        %v2246 = vld [vmem:[%s295 + $0x38a8] sm:$0xff]
        %v2247 = vld [vmem:[%s295 + $0x38b0] sm:$0xff]
        %v2248 = vld [vmem:[%s295 + $0x38b8] sm:$0xff]
        %v2249 = vld [vmem:[%s295 + $0x38c0] sm:$0xff]
        %v2250 = vld [vmem:[%s295 + $0x38c8] sm:$0xff]
        %v2251 = vld [vmem:[%s295 + $0x38d0] sm:$0xff]
        %v2252 = vld [vmem:[%s295 + $0x38d8] sm:$0xff]
        %v2253 = vld [vmem:[%s295 + $0x38e0] sm:$0xff]
        %v2254 = vld [vmem:[%s295 + $0x38e8] sm:$0xff]
        %v2255 = vld [vmem:[%s295 + $0x38f0] sm:$0xff]
        %v2256 = vld [vmem:[%s295 + $0x38f8] sm:$0xff]
        %v2257 = vld [vmem:[%s295 + $0x3900] sm:$0xff]
        %v2258 = vld [vmem:[%s295 + $0x3908] sm:$0xff]
        %v2259 = vld [vmem:[%s295 + $0x3910] sm:$0xff]
        %v2260 = vld [vmem:[%s295 + $0x3918] sm:$0xff]
        %v2261 = vld [vmem:[%s295 + $0x3920] sm:$0xff]
        %v2262 = vld [vmem:[%s295 + $0x3928] sm:$0xff]
        %v2263 = vld [vmem:[%s295 + $0x3930] sm:$0xff]
        %v2264 = vld [vmem:[%s295 + $0x3938] sm:$0xff]
        %v2265 = vld [vmem:[%s295 + $0x3940] sm:$0xff]
        %v2266 = vld [vmem:[%s295 + $0x3948] sm:$0xff]
        %v2267 = vld [vmem:[%s295 + $0x3950] sm:$0xff]
        %v2268 = vld [vmem:[%s295 + $0x3958] sm:$0xff]
        %v2269 = vld [vmem:[%s295 + $0x3960] sm:$0xff]
        %v2270 = vld [vmem:[%s295 + $0x3968] sm:$0xff]
        %v2271 = vld [vmem:[%s295 + $0x3970] sm:$0xff]
        %v2272 = vld [vmem:[%s295 + $0x3978] sm:$0xff]
        %v2273 = vld [vmem:[%s295 + $0x3980] sm:$0xff]
        %v2274 = vld [vmem:[%s295 + $0x3988] sm:$0xff]
        %v2275 = vld [vmem:[%s295 + $0x3990] sm:$0xff]
        %v2276 = vld [vmem:[%s295 + $0x3998] sm:$0xff]
        %v2277 = vld [vmem:[%s295 + $0x39a0] sm:$0xff]
        %v2278 = vld [vmem:[%s295 + $0x39a8] sm:$0xff]
        %v2279 = vld [vmem:[%s295 + $0x39b0] sm:$0xff]
        %v2280 = vld [vmem:[%s295 + $0x39b8] sm:$0xff]
        %v2281 = vld [vmem:[%s295 + $0x39c0] sm:$0xff]
        %v2282 = vld [vmem:[%s295 + $0x39c8] sm:$0xff]
        %v2283 = vld [vmem:[%s295 + $0x39d0] sm:$0xff]
        %v2284 = vld [vmem:[%s295 + $0x39d8] sm:$0xff]
        %v2285 = vld [vmem:[%s295 + $0x39e0] sm:$0xff]
        %v2286 = vld [vmem:[%s295 + $0x39e8] sm:$0xff]
        %v2287 = vld [vmem:[%s295 + $0x39f0] sm:$0xff]
        %v2288 = vld [vmem:[%s295 + $0x39f8] sm:$0xff]
        %v2289 = vld [vmem:[%s295 + $0x3a00] sm:$0xff]
        %v2290 = vld [vmem:[%s295 + $0x3a08] sm:$0xff]
        %v2291 = vld [vmem:[%s295 + $0x3a10] sm:$0xff]
        %v2292 = vld [vmem:[%s295 + $0x3a18] sm:$0xff]
        %v2293 = vld [vmem:[%s295 + $0x3a20] sm:$0xff]
        %v2294 = vld [vmem:[%s295 + $0x3a28] sm:$0xff]
        %v2295 = vld [vmem:[%s295 + $0x3a30] sm:$0xff]
        %v2296 = vld [vmem:[%s295 + $0x3a38] sm:$0xff]
        %v2297 = vld [vmem:[%s295 + $0x3a40] sm:$0xff]
        %v2298 = vld [vmem:[%s295 + $0x3a48] sm:$0xff]
        %v2299 = vld [vmem:[%s295 + $0x3a50] sm:$0xff]
        %v2300 = vld [vmem:[%s295 + $0x3a58] sm:$0xff]
        %v2301 = vld [vmem:[%s295 + $0x3a60] sm:$0xff]
        %v2302 = vld [vmem:[%s295 + $0x3a68] sm:$0xff]
        %v2303 = vld [vmem:[%s295 + $0x3a70] sm:$0xff]
        %v2304 = vld [vmem:[%s295 + $0x3a78] sm:$0xff]
        %v2305 = vld [vmem:[%s295 + $0x3a80] sm:$0xff]
        %v2306 = vld [vmem:[%s295 + $0x3a88] sm:$0xff]
        %v2307 = vld [vmem:[%s295 + $0x3a90] sm:$0xff]
        %v2308 = vld [vmem:[%s295 + $0x3a98] sm:$0xff]
        %v2309 = vld [vmem:[%s295 + $0x3aa0] sm:$0xff]
        %v2310 = vld [vmem:[%s295 + $0x3aa8] sm:$0xff]
        %v2311 = vld [vmem:[%s295 + $0x3ab0] sm:$0xff]
        %v2312 = vld [vmem:[%s295 + $0x3ab8] sm:$0xff]
        %v2313 = vld [vmem:[%s295 + $0x3ac0] sm:$0xff]
        %v2314 = vld [vmem:[%s295 + $0x3ac8] sm:$0xff]
        %v2315 = vld [vmem:[%s295 + $0x3ad0] sm:$0xff]
        %v2316 = vld [vmem:[%s295 + $0x3ad8] sm:$0xff]
        %v2317 = vld [vmem:[%s295 + $0x3ae0] sm:$0xff]
        %v2318 = vld [vmem:[%s295 + $0x3ae8] sm:$0xff]
        %v2319 = vld [vmem:[%s295 + $0x3af0] sm:$0xff]
        %v2320 = vld [vmem:[%s295 + $0x3af8] sm:$0xff]
        %v2321 = vld [vmem:[%s295 + $0x3b00] sm:$0xff]
        %v2322 = vld [vmem:[%s295 + $0x3b08] sm:$0xff]
        %v2323 = vld [vmem:[%s295 + $0x3b10] sm:$0xff]
        %v2324 = vld [vmem:[%s295 + $0x3b18] sm:$0xff]
        %v2325 = vld [vmem:[%s295 + $0x3b20] sm:$0xff]
        %v2326 = vld [vmem:[%s295 + $0x3b28] sm:$0xff]
        %v2327 = vld [vmem:[%s295 + $0x3b30] sm:$0xff]
        %v2328 = vld [vmem:[%s295 + $0x3b38] sm:$0xff]
        %v2329 = vld [vmem:[%s295 + $0x3b40] sm:$0xff]
        %v2330 = vld [vmem:[%s295 + $0x3b48] sm:$0xff]
        %v2331 = vld [vmem:[%s295 + $0x3b50] sm:$0xff]
        %v2332 = vld [vmem:[%s295 + $0x3b58] sm:$0xff]
        %v2333 = vld [vmem:[%s295 + $0x3b60] sm:$0xff]
        %v2334 = vld [vmem:[%s295 + $0x3b68] sm:$0xff]
        %v2335 = vld [vmem:[%s295 + $0x3b70] sm:$0xff]
        %v2336 = vld [vmem:[%s295 + $0x3b78] sm:$0xff]
        %v2337 = vld [vmem:[%s295 + $0x3b80] sm:$0xff]
        %v2338 = vld [vmem:[%s295 + $0x3b88] sm:$0xff]
        %v2339 = vld [vmem:[%s295 + $0x3b90] sm:$0xff]
        %v2340 = vld [vmem:[%s295 + $0x3b98] sm:$0xff]
        %v2341 = vld [vmem:[%s295 + $0x3ba0] sm:$0xff]
        %v2342 = vld [vmem:[%s295 + $0x3ba8] sm:$0xff]
        %v2343 = vld [vmem:[%s295 + $0x3bb0] sm:$0xff]
        %v2344 = vld [vmem:[%s295 + $0x3bb8] sm:$0xff]
        %v2345 = vld [vmem:[%s295 + $0x3bc0] sm:$0xff]
        %v2346 = vld [vmem:[%s295 + $0x3bc8] sm:$0xff]
        %v2347 = vld [vmem:[%s295 + $0x3bd0] sm:$0xff]
        %v2348 = vld [vmem:[%s295 + $0x3bd8] sm:$0xff]
        %v2349 = vld [vmem:[%s295 + $0x3be0] sm:$0xff]
        %v2350 = vld [vmem:[%s295 + $0x3be8] sm:$0xff]
        %v2351 = vld [vmem:[%s295 + $0x3bf0] sm:$0xff]
        %v2352 = vld [vmem:[%s295 + $0x3bf8] sm:$0xff]
        %v2353 = vld [vmem:[%s295 + $0x3c00] sm:$0xff]
        %v2354 = vld [vmem:[%s295 + $0x3c08] sm:$0xff]
        %v2355 = vld [vmem:[%s295 + $0x3c10] sm:$0xff]
        %v2356 = vld [vmem:[%s295 + $0x3c18] sm:$0xff]
        %v2357 = vld [vmem:[%s295 + $0x3c20] sm:$0xff]
        %v2358 = vld [vmem:[%s295 + $0x3c28] sm:$0xff]
        %v2359 = vld [vmem:[%s295 + $0x3c30] sm:$0xff]
        %v2360 = vld [vmem:[%s295 + $0x3c38] sm:$0xff]
        %v2361 = vld [vmem:[%s295 + $0x3c40] sm:$0xff]
        %v2362 = vld [vmem:[%s295 + $0x3c48] sm:$0xff]
        %v2363 = vld [vmem:[%s295 + $0x3c50] sm:$0xff]
        %v2364 = vld [vmem:[%s295 + $0x3c58] sm:$0xff]
        %v2365 = vld [vmem:[%s295 + $0x3c60] sm:$0xff]
        %v2366 = vld [vmem:[%s295 + $0x3c68] sm:$0xff]
        %v2367 = vld [vmem:[%s295 + $0x3c70] sm:$0xff]
        %v2368 = vld [vmem:[%s295 + $0x3c78] sm:$0xff]
        %v2369 = vld [vmem:[%s295 + $0x3c80] sm:$0xff]
        %v2370 = vld [vmem:[%s295 + $0x3c88] sm:$0xff]
        %v2371 = vld [vmem:[%s295 + $0x3c90] sm:$0xff]
        %v2372 = vld [vmem:[%s295 + $0x3c98] sm:$0xff]
        %v2373 = vld [vmem:[%s295 + $0x3ca0] sm:$0xff]
        %v2374 = vld [vmem:[%s295 + $0x3ca8] sm:$0xff]
        %v2375 = vld [vmem:[%s295 + $0x3cb0] sm:$0xff]
        %v2376 = vld [vmem:[%s295 + $0x3cb8] sm:$0xff]
        %v2377 = vld [vmem:[%s295 + $0x3cc0] sm:$0xff]
        %v2378 = vld [vmem:[%s295 + $0x3cc8] sm:$0xff]
        %v2379 = vld [vmem:[%s295 + $0x3cd0] sm:$0xff]
        %v2380 = vld [vmem:[%s295 + $0x3cd8] sm:$0xff]
        %v2381 = vld [vmem:[%s295 + $0x3ce0] sm:$0xff]
        %v2382 = vld [vmem:[%s295 + $0x3ce8] sm:$0xff]
        %v2383 = vld [vmem:[%s295 + $0x3cf0] sm:$0xff]
        %v2384 = vld [vmem:[%s295 + $0x3cf8] sm:$0xff]
        %v2385 = vld [vmem:[%s295 + $0x3d00] sm:$0xff]
        %v2386 = vld [vmem:[%s295 + $0x3d08] sm:$0xff]
        %v2387 = vld [vmem:[%s295 + $0x3d10] sm:$0xff]
        %v2388 = vld [vmem:[%s295 + $0x3d18] sm:$0xff]
        %v2389 = vld [vmem:[%s295 + $0x3d20] sm:$0xff]
        %v2390 = vld [vmem:[%s295 + $0x3d28] sm:$0xff]
        %v2391 = vld [vmem:[%s295 + $0x3d30] sm:$0xff]
        %v2392 = vld [vmem:[%s295 + $0x3d38] sm:$0xff]
        %v2393 = vld [vmem:[%s295 + $0x3d40] sm:$0xff]
        %v2394 = vld [vmem:[%s295 + $0x3d48] sm:$0xff]
        %v2395 = vld [vmem:[%s295 + $0x3d50] sm:$0xff]
        %v2396 = vld [vmem:[%s295 + $0x3d58] sm:$0xff]
        %v2397 = vld [vmem:[%s295 + $0x3d60] sm:$0xff]
        %v2398 = vld [vmem:[%s295 + $0x3d68] sm:$0xff]
        %v2399 = vld [vmem:[%s295 + $0x3d70] sm:$0xff]
        %v2400 = vld [vmem:[%s295 + $0x3d78] sm:$0xff]
        %v2401 = vld [vmem:[%s295 + $0x3d80] sm:$0xff]
        %v2402 = vld [vmem:[%s295 + $0x3d88] sm:$0xff]
        %v2403 = vld [vmem:[%s295 + $0x3d90] sm:$0xff]
        %v2404 = vld [vmem:[%s295 + $0x3d98] sm:$0xff]
        %v2405 = vld [vmem:[%s295 + $0x3da0] sm:$0xff]
        %v2406 = vld [vmem:[%s295 + $0x3da8] sm:$0xff]
        %v2407 = vld [vmem:[%s295 + $0x3db0] sm:$0xff]
        %v2408 = vld [vmem:[%s295 + $0x3db8] sm:$0xff]
        %v2409 = vld [vmem:[%s295 + $0x3dc0] sm:$0xff]
        %v2410 = vld [vmem:[%s295 + $0x3dc8] sm:$0xff]
        %v2411 = vld [vmem:[%s295 + $0x3dd0] sm:$0xff]
        %v2412 = vld [vmem:[%s295 + $0x3dd8] sm:$0xff]
        %v2413 = vld [vmem:[%s295 + $0x3de0] sm:$0xff]
        %v2414 = vld [vmem:[%s295 + $0x3de8] sm:$0xff]
        %v2415 = vld [vmem:[%s295 + $0x3df0] sm:$0xff]
        %v2416 = vld [vmem:[%s295 + $0x3df8] sm:$0xff]
        %v2417 = vld [vmem:[%s295 + $0x3e00] sm:$0xff]
        %v2418 = vld [vmem:[%s295 + $0x3e08] sm:$0xff]
        %v2419 = vld [vmem:[%s295 + $0x3e10] sm:$0xff]
        %v2420 = vld [vmem:[%s295 + $0x3e18] sm:$0xff]
        %v2421 = vld [vmem:[%s295 + $0x3e20] sm:$0xff]
        %v2422 = vld [vmem:[%s295 + $0x3e28] sm:$0xff]
        %v2423 = vld [vmem:[%s295 + $0x3e30] sm:$0xff]
        %v2424 = vld [vmem:[%s295 + $0x3e38] sm:$0xff]
        %v2425 = vld [vmem:[%s295 + $0x3e40] sm:$0xff]
        %v2426 = vld [vmem:[%s295 + $0x3e48] sm:$0xff]
        %v2427 = vld [vmem:[%s295 + $0x3e50] sm:$0xff]
        %v2428 = vld [vmem:[%s295 + $0x3e58] sm:$0xff]
        %v2429 = vld [vmem:[%s295 + $0x3e60] sm:$0xff]
        %v2430 = vld [vmem:[%s295 + $0x3e68] sm:$0xff]
        %v2431 = vld [vmem:[%s295 + $0x3e70] sm:$0xff]
        %v2432 = vld [vmem:[%s295 + $0x3e78] sm:$0xff]
        %v2433 = vld [vmem:[%s295 + $0x3e80] sm:$0xff]
        %v2434 = vld [vmem:[%s295 + $0x3e88] sm:$0xff]
        %v2435 = vld [vmem:[%s295 + $0x3e90] sm:$0xff]
        %v2436 = vld [vmem:[%s295 + $0x3e98] sm:$0xff]
        %v2437 = vld [vmem:[%s295 + $0x3ea0] sm:$0xff]
        %v2438 = vld [vmem:[%s295 + $0x3ea8] sm:$0xff]
        %v2439 = vld [vmem:[%s295 + $0x3eb0] sm:$0xff]
        %v2440 = vld [vmem:[%s295 + $0x3eb8] sm:$0xff]
        %v2441 = vld [vmem:[%s295 + $0x3ec0] sm:$0xff]
        %v2442 = vld [vmem:[%s295 + $0x3ec8] sm:$0xff]
        %v2443 = vld [vmem:[%s295 + $0x3ed0] sm:$0xff]
        %v2444 = vld [vmem:[%s295 + $0x3ed8] sm:$0xff]
        %v2445 = vld [vmem:[%s295 + $0x3ee0] sm:$0xff]
        %v2446 = vld [vmem:[%s295 + $0x3ee8] sm:$0xff]
        %v2447 = vld [vmem:[%s295 + $0x3ef0] sm:$0xff]
        %v2448 = vld [vmem:[%s295 + $0x3ef8] sm:$0xff]
        %v2449 = vld [vmem:[%s295 + $0x3f00] sm:$0xff]
        %v2450 = vld [vmem:[%s295 + $0x3f08] sm:$0xff]
        %v2451 = vld [vmem:[%s295 + $0x3f10] sm:$0xff]
        %v2452 = vld [vmem:[%s295 + $0x3f18] sm:$0xff]
        %v2453 = vld [vmem:[%s295 + $0x3f20] sm:$0xff]
        %v2454 = vld [vmem:[%s295 + $0x3f28] sm:$0xff]
        %v2455 = vld [vmem:[%s295 + $0x3f30] sm:$0xff]
        %v2456 = vld [vmem:[%s295 + $0x3f38] sm:$0xff]
        %v2457 = vld [vmem:[%s295 + $0x3f40] sm:$0xff]
        %v2458 = vld [vmem:[%s295 + $0x3f48] sm:$0xff]
        %v2459 = vld [vmem:[%s295 + $0x3f50] sm:$0xff]
        %v2460 = vld [vmem:[%s295 + $0x3f58] sm:$0xff]
        %v2461 = vld [vmem:[%s295 + $0x3f60] sm:$0xff]
        %v2462 = vld [vmem:[%s295 + $0x3f68] sm:$0xff]
        %v2463 = vld [vmem:[%s295 + $0x3f70] sm:$0xff]
        %v2464 = vld [vmem:[%s295 + $0x3f78] sm:$0xff]
        %v2465 = vld [vmem:[%s295 + $0x3f80] sm:$0xff]
        %v2466 = vld [vmem:[%s295 + $0x3f88] sm:$0xff]
        %v2467 = vld [vmem:[%s295 + $0x3f90] sm:$0xff]
        %v2468 = vld [vmem:[%s295 + $0x3f98] sm:$0xff]
        %v2469 = vld [vmem:[%s295 + $0x3fa0] sm:$0xff]
        %v2470 = vld [vmem:[%s295 + $0x3fa8] sm:$0xff]
        %v2471 = vld [vmem:[%s295 + $0x3fb0] sm:$0xff]
        %v2472 = vld [vmem:[%s295 + $0x3fb8] sm:$0xff]
        %v2473 = vld [vmem:[%s295 + $0x3fc0] sm:$0xff]
        %v2474 = vld [vmem:[%s295 + $0x3fc8] sm:$0xff]
        %v2475 = vld [vmem:[%s295 + $0x3fd0] sm:$0xff]
        %v2476 = vld [vmem:[%s295 + $0x3fd8] sm:$0xff]
        %v2477 = vld [vmem:[%s295 + $0x3fe0] sm:$0xff]
        %v2478 = vld [vmem:[%s295 + $0x3fe8] sm:$0xff]
        %v2479 = vld [vmem:[%s295 + $0x3ff0] sm:$0xff]
        %v2480 = vld [vmem:[%s295 + $0x3ff8] sm:$0xff]
        %v2481 = vld [vmem:[%s304] sm:$0x3]
        %v2483 = vlaneseq
        %v2484 = vshrl.u32 %v2483, 7
        %v2485 = vsub.s32 0, %v2484
        %v2486 = vrot.slane %v2481, %v2485
        %v2487 = vlaneseq
        %v2488 = vshrl.u32 %v2487, 7
        %v2489 = vsub.s32 1, %v2488
        %v2490 = vrot.slane %v2481, %v2489
        %2493 = vmatprep.subr.mxu0 %v464
        %2494 = vmatpush1.msra.mxu0 %v463
        %2495 = vmatprep.subr.mxu0 %v462
        %2496 = vmatpush1.msra.mxu0 %v461
        %2497 = vmatprep.subr.mxu0 %v460
        %2498 = vmatpush1.msra.mxu0 %v459
        %2499 = vmatprep.subr.mxu0 %v458
        %2500 = vmatpush1.msra.mxu0 %v457
        %2501 = vmatprep.subr.mxu0 %v456
        %2502 = vmatpush1.msra.mxu0 %v455
        %2503 = vmatprep.subr.mxu0 %v454
        %2504 = vmatpush1.msra.mxu0 %v453
        %2505 = vmatprep.subr.mxu0 %v452
        %2506 = vmatpush1.msra.mxu0 %v451
        %2507 = vmatprep.subr.mxu0 %v450
        %2508 = vmatpush1.msra.mxu0 %v449
        %2509 = vmatprep.subr.mxu0 %v448
        %2510 = vmatpush1.msra.mxu0 %v447
        %2511 = vmatprep.subr.mxu0 %v446
        %2512 = vmatpush1.msra.mxu0 %v445
        %2513 = vmatprep.subr.mxu0 %v444
        %2514 = vmatpush1.msra.mxu0 %v443
        %2515 = vmatprep.subr.mxu0 %v442
        %2516 = vmatpush1.msra.mxu0 %v441
        %2517 = vmatprep.subr.mxu0 %v440
        %2518 = vmatpush1.msra.mxu0 %v439
        %2519 = vmatprep.subr.mxu0 %v438
        %2520 = vmatpush1.msra.mxu0 %v437
        %2521 = vmatprep.subr.mxu0 %v436
        %2522 = vmatpush1.msra.mxu0 %v435
        %2523 = vmatprep.subr.mxu0 %v434
        %2524 = vmatpush1.msra.mxu0 %v433
        %2525 = vmatprep.subr.mxu0 %v496
        %2526 = vmatpush2.msra.mxu0 %v495
        %2527 = vmatprep.subr.mxu0 %v494
        %2528 = vmatpush2.msra.mxu0 %v493
        %2529 = vmatprep.subr.mxu0 %v492
        %2530 = vmatpush2.msra.mxu0 %v491
        %2531 = vmatprep.subr.mxu0 %v490
        %2532 = vmatpush2.msra.mxu0 %v489
        %2533 = vmatprep.subr.mxu0 %v488
        %2534 = vmatpush2.msra.mxu0 %v487
        %2535 = vmatprep.subr.mxu0 %v486
        %2536 = vmatpush2.msra.mxu0 %v485
        %2537 = vmatprep.subr.mxu0 %v484
        %2538 = vmatpush2.msra.mxu0 %v483
        %2539 = vmatprep.subr.mxu0 %v482
        %2540 = vmatpush2.msra.mxu0 %v481
        %2541 = vmatprep.subr.mxu0 %v480
        %2542 = vmatpush2.msra.mxu0 %v479
        %2543 = vmatprep.subr.mxu0 %v478
        %2544 = vmatpush2.msra.mxu0 %v477
        %2545 = vmatprep.subr.mxu0 %v476
        %2546 = vmatpush2.msra.mxu0 %v475
        %2547 = vmatprep.subr.mxu0 %v474
        %2548 = vmatpush2.msra.mxu0 %v473
        %2549 = vmatprep.subr.mxu0 %v472
        %2550 = vmatpush2.msra.mxu0 %v471
        %2551 = vmatprep.subr.mxu0 %v470
        %2552 = vmatpush2.msra.mxu0 %v469
        %2553 = vmatprep.subr.mxu0 %v468
        %2554 = vmatpush2.msra.mxu0 %v467
        %2555 = vmatprep.subr.mxu0 %v466
        %2556 = vmatpush2.msra.mxu0 %v465
        %2557 = vmatprep.mubr.f32.mxu0 %v370
        %2558 = vmatmul.mubr.f32.gmra.mxu0 %v369
        %v2559 = vpop.f32.mrf.mxu0
        %v2560 = vadd.f32 %v2486, %v2559
        %v2561 = vpop.f32.mrf.mxu0
        %v2562 = vadd.f32 %v2490, %v2561
        %2563 = vdwg.mxu0
        %2564 = vmatprep.subr.mxu0 %v528
        %2565 = vmatpush1.msra.mxu0 %v527
        %2566 = vmatprep.subr.mxu0 %v526
        %2567 = vmatpush1.msra.mxu0 %v525
        %2568 = vmatprep.subr.mxu0 %v524
        %2569 = vmatpush1.msra.mxu0 %v523
        %2570 = vmatprep.subr.mxu0 %v522
        %2571 = vmatpush1.msra.mxu0 %v521
        %2572 = vmatprep.subr.mxu0 %v520
        %2573 = vmatpush1.msra.mxu0 %v519
        %2574 = vmatprep.subr.mxu0 %v518
        %2575 = vmatpush1.msra.mxu0 %v517
        %2576 = vmatprep.subr.mxu0 %v516
        %2577 = vmatpush1.msra.mxu0 %v515
        %2578 = vmatprep.subr.mxu0 %v514
        %2579 = vmatpush1.msra.mxu0 %v513
        %2580 = vmatprep.subr.mxu0 %v512
        %2581 = vmatpush1.msra.mxu0 %v511
        %2582 = vmatprep.subr.mxu0 %v510
        %2583 = vmatpush1.msra.mxu0 %v509
        %2584 = vmatprep.subr.mxu0 %v508
        %2585 = vmatpush1.msra.mxu0 %v507
        %2586 = vmatprep.subr.mxu0 %v506
        %2587 = vmatpush1.msra.mxu0 %v505
        %2588 = vmatprep.subr.mxu0 %v504
        %2589 = vmatpush1.msra.mxu0 %v503
        %2590 = vmatprep.subr.mxu0 %v502
        %2591 = vmatpush1.msra.mxu0 %v501
        %2592 = vmatprep.subr.mxu0 %v500
        %2593 = vmatpush1.msra.mxu0 %v499
        %2594 = vmatprep.subr.mxu0 %v498
        %2595 = vmatpush1.msra.mxu0 %v497
        %2596 = vmatprep.subr.mxu0 %v560
        %2597 = vmatpush2.msra.mxu0 %v559
        %2598 = vmatprep.subr.mxu0 %v558
        %2599 = vmatpush2.msra.mxu0 %v557
        %2600 = vmatprep.subr.mxu0 %v556
        %2601 = vmatpush2.msra.mxu0 %v555
        %2602 = vmatprep.subr.mxu0 %v554
        %2603 = vmatpush2.msra.mxu0 %v553
        %2604 = vmatprep.subr.mxu0 %v552
        %2605 = vmatpush2.msra.mxu0 %v551
        %2606 = vmatprep.subr.mxu0 %v550
        %2607 = vmatpush2.msra.mxu0 %v549
        %2608 = vmatprep.subr.mxu0 %v548
        %2609 = vmatpush2.msra.mxu0 %v547
        %2610 = vmatprep.subr.mxu0 %v546
        %2611 = vmatpush2.msra.mxu0 %v545
        %2612 = vmatprep.subr.mxu0 %v544
        %2613 = vmatpush2.msra.mxu0 %v543
        %2614 = vmatprep.subr.mxu0 %v542
        %2615 = vmatpush2.msra.mxu0 %v541
        %2616 = vmatprep.subr.mxu0 %v540
        %2617 = vmatpush2.msra.mxu0 %v539
        %2618 = vmatprep.subr.mxu0 %v538
        %2619 = vmatpush2.msra.mxu0 %v537
        %2620 = vmatprep.subr.mxu0 %v536
        %2621 = vmatpush2.msra.mxu0 %v535
        %2622 = vmatprep.subr.mxu0 %v534
        %2623 = vmatpush2.msra.mxu0 %v533
        %2624 = vmatprep.subr.mxu0 %v532
        %2625 = vmatpush2.msra.mxu0 %v531
        %2626 = vmatprep.subr.mxu0 %v530
        %2627 = vmatpush2.msra.mxu0 %v529
        %2628 = vmatprep.mubr.f32.mxu0 %v372
        %2629 = vmatmul.mubr.f32.gmra.mxu0 %v371
        %v2630 = vpop.f32.mrf.mxu0
        %v2631 = vadd.f32 %v2560, %v2630
        %v2632 = vpop.f32.mrf.mxu0
        %v2633 = vadd.f32 %v2562, %v2632
        %2634 = vdwg.mxu0
        %2635 = vmatprep.subr.mxu0 %v592
        %2636 = vmatpush1.msra.mxu0 %v591
        %2637 = vmatprep.subr.mxu0 %v590
        %2638 = vmatpush1.msra.mxu0 %v589
        %2639 = vmatprep.subr.mxu0 %v588
        %2640 = vmatpush1.msra.mxu0 %v587
        %2641 = vmatprep.subr.mxu0 %v586
        %2642 = vmatpush1.msra.mxu0 %v585
        %2643 = vmatprep.subr.mxu0 %v584
        %2644 = vmatpush1.msra.mxu0 %v583
        %2645 = vmatprep.subr.mxu0 %v582
        %2646 = vmatpush1.msra.mxu0 %v581
        %2647 = vmatprep.subr.mxu0 %v580
        %2648 = vmatpush1.msra.mxu0 %v579
        %2649 = vmatprep.subr.mxu0 %v578
        %2650 = vmatpush1.msra.mxu0 %v577
        %2651 = vmatprep.subr.mxu0 %v576
        %2652 = vmatpush1.msra.mxu0 %v575
        %2653 = vmatprep.subr.mxu0 %v574
        %2654 = vmatpush1.msra.mxu0 %v573
        %2655 = vmatprep.subr.mxu0 %v572
        %2656 = vmatpush1.msra.mxu0 %v571
        %2657 = vmatprep.subr.mxu0 %v570
        %2658 = vmatpush1.msra.mxu0 %v569
        %2659 = vmatprep.subr.mxu0 %v568
        %2660 = vmatpush1.msra.mxu0 %v567
        %2661 = vmatprep.subr.mxu0 %v566
        %2662 = vmatpush1.msra.mxu0 %v565
        %2663 = vmatprep.subr.mxu0 %v564
        %2664 = vmatpush1.msra.mxu0 %v563
        %2665 = vmatprep.subr.mxu0 %v562
        %2666 = vmatpush1.msra.mxu0 %v561
        %2667 = vmatprep.subr.mxu0 %v624
        %2668 = vmatpush2.msra.mxu0 %v623
        %2669 = vmatprep.subr.mxu0 %v622
        %2670 = vmatpush2.msra.mxu0 %v621
        %2671 = vmatprep.subr.mxu0 %v620
        %2672 = vmatpush2.msra.mxu0 %v619
        %2673 = vmatprep.subr.mxu0 %v618
        %2674 = vmatpush2.msra.mxu0 %v617
        %2675 = vmatprep.subr.mxu0 %v616
        %2676 = vmatpush2.msra.mxu0 %v615
        %2677 = vmatprep.subr.mxu0 %v614
        %2678 = vmatpush2.msra.mxu0 %v613
        %2679 = vmatprep.subr.mxu0 %v612
        %2680 = vmatpush2.msra.mxu0 %v611
        %2681 = vmatprep.subr.mxu0 %v610
        %2682 = vmatpush2.msra.mxu0 %v609
        %2683 = vmatprep.subr.mxu0 %v608
        %2684 = vmatpush2.msra.mxu0 %v607
        %2685 = vmatprep.subr.mxu0 %v606
        %2686 = vmatpush2.msra.mxu0 %v605
        %2687 = vmatprep.subr.mxu0 %v604
        %2688 = vmatpush2.msra.mxu0 %v603
        %2689 = vmatprep.subr.mxu0 %v602
        %2690 = vmatpush2.msra.mxu0 %v601
        %2691 = vmatprep.subr.mxu0 %v600
        %2692 = vmatpush2.msra.mxu0 %v599
        %2693 = vmatprep.subr.mxu0 %v598
        %2694 = vmatpush2.msra.mxu0 %v597
        %2695 = vmatprep.subr.mxu0 %v596
        %2696 = vmatpush2.msra.mxu0 %v595
        %2697 = vmatprep.subr.mxu0 %v594
        %2698 = vmatpush2.msra.mxu0 %v593
        %2699 = vmatprep.mubr.f32.mxu0 %v374
        %2700 = vmatmul.mubr.f32.gmra.mxu0 %v373
        %v2701 = vpop.f32.mrf.mxu0
        %v2702 = vadd.f32 %v2631, %v2701
        %v2703 = vpop.f32.mrf.mxu0
        %v2704 = vadd.f32 %v2633, %v2703
        %2705 = vdwg.mxu0
        %2706 = vmatprep.subr.mxu0 %v656
        %2707 = vmatpush1.msra.mxu0 %v655
        %2708 = vmatprep.subr.mxu0 %v654
        %2709 = vmatpush1.msra.mxu0 %v653
        %2710 = vmatprep.subr.mxu0 %v652
        %2711 = vmatpush1.msra.mxu0 %v651
        %2712 = vmatprep.subr.mxu0 %v650
        %2713 = vmatpush1.msra.mxu0 %v649
        %2714 = vmatprep.subr.mxu0 %v648
        %2715 = vmatpush1.msra.mxu0 %v647
        %2716 = vmatprep.subr.mxu0 %v646
        %2717 = vmatpush1.msra.mxu0 %v645
        %2718 = vmatprep.subr.mxu0 %v644
        %2719 = vmatpush1.msra.mxu0 %v643
        %2720 = vmatprep.subr.mxu0 %v642
        %2721 = vmatpush1.msra.mxu0 %v641
        %2722 = vmatprep.subr.mxu0 %v640
        %2723 = vmatpush1.msra.mxu0 %v639
        %2724 = vmatprep.subr.mxu0 %v638
        %2725 = vmatpush1.msra.mxu0 %v637
        %2726 = vmatprep.subr.mxu0 %v636
        %2727 = vmatpush1.msra.mxu0 %v635
        %2728 = vmatprep.subr.mxu0 %v634
        %2729 = vmatpush1.msra.mxu0 %v633
        %2730 = vmatprep.subr.mxu0 %v632
        %2731 = vmatpush1.msra.mxu0 %v631
        %2732 = vmatprep.subr.mxu0 %v630
        %2733 = vmatpush1.msra.mxu0 %v629
        %2734 = vmatprep.subr.mxu0 %v628
        %2735 = vmatpush1.msra.mxu0 %v627
        %2736 = vmatprep.subr.mxu0 %v626
        %2737 = vmatpush1.msra.mxu0 %v625
        %2738 = vmatprep.subr.mxu0 %v688
        %2739 = vmatpush2.msra.mxu0 %v687
        %2740 = vmatprep.subr.mxu0 %v686
        %2741 = vmatpush2.msra.mxu0 %v685
        %2742 = vmatprep.subr.mxu0 %v684
        %2743 = vmatpush2.msra.mxu0 %v683
        %2744 = vmatprep.subr.mxu0 %v682
        %2745 = vmatpush2.msra.mxu0 %v681
        %2746 = vmatprep.subr.mxu0 %v680
        %2747 = vmatpush2.msra.mxu0 %v679
        %2748 = vmatprep.subr.mxu0 %v678
        %2749 = vmatpush2.msra.mxu0 %v677
        %2750 = vmatprep.subr.mxu0 %v676
        %2751 = vmatpush2.msra.mxu0 %v675
        %2752 = vmatprep.subr.mxu0 %v674
        %2753 = vmatpush2.msra.mxu0 %v673
        %2754 = vmatprep.subr.mxu0 %v672
        %2755 = vmatpush2.msra.mxu0 %v671
        %2756 = vmatprep.subr.mxu0 %v670
        %2757 = vmatpush2.msra.mxu0 %v669
        %2758 = vmatprep.subr.mxu0 %v668
        %2759 = vmatpush2.msra.mxu0 %v667
        %2760 = vmatprep.subr.mxu0 %v666
        %2761 = vmatpush2.msra.mxu0 %v665
        %2762 = vmatprep.subr.mxu0 %v664
        %2763 = vmatpush2.msra.mxu0 %v663
        %2764 = vmatprep.subr.mxu0 %v662
        %2765 = vmatpush2.msra.mxu0 %v661
        %2766 = vmatprep.subr.mxu0 %v660
        %2767 = vmatpush2.msra.mxu0 %v659
        %2768 = vmatprep.subr.mxu0 %v658
        %2769 = vmatpush2.msra.mxu0 %v657
        %2770 = vmatprep.mubr.f32.mxu0 %v376
        %2771 = vmatmul.mubr.f32.gmra.mxu0 %v375
        %v2772 = vpop.f32.mrf.mxu0
        %v2773 = vadd.f32 %v2702, %v2772
        %v2774 = vpop.f32.mrf.mxu0
        %v2775 = vadd.f32 %v2704, %v2774
        %2776 = vdwg.mxu0
        %2777 = vmatprep.subr.mxu0 %v720
        %2778 = vmatpush1.msra.mxu0 %v719
        %2779 = vmatprep.subr.mxu0 %v718
        %2780 = vmatpush1.msra.mxu0 %v717
        %2781 = vmatprep.subr.mxu0 %v716
        %2782 = vmatpush1.msra.mxu0 %v715
        %2783 = vmatprep.subr.mxu0 %v714
        %2784 = vmatpush1.msra.mxu0 %v713
        %2785 = vmatprep.subr.mxu0 %v712
        %2786 = vmatpush1.msra.mxu0 %v711
        %2787 = vmatprep.subr.mxu0 %v710
        %2788 = vmatpush1.msra.mxu0 %v709
        %2789 = vmatprep.subr.mxu0 %v708
        %2790 = vmatpush1.msra.mxu0 %v707
        %2791 = vmatprep.subr.mxu0 %v706
        %2792 = vmatpush1.msra.mxu0 %v705
        %2793 = vmatprep.subr.mxu0 %v704
        %2794 = vmatpush1.msra.mxu0 %v703
        %2795 = vmatprep.subr.mxu0 %v702
        %2796 = vmatpush1.msra.mxu0 %v701
        %2797 = vmatprep.subr.mxu0 %v700
        %2798 = vmatpush1.msra.mxu0 %v699
        %2799 = vmatprep.subr.mxu0 %v698
        %2800 = vmatpush1.msra.mxu0 %v697
        %2801 = vmatprep.subr.mxu0 %v696
        %2802 = vmatpush1.msra.mxu0 %v695
        %2803 = vmatprep.subr.mxu0 %v694
        %2804 = vmatpush1.msra.mxu0 %v693
        %2805 = vmatprep.subr.mxu0 %v692
        %2806 = vmatpush1.msra.mxu0 %v691
        %2807 = vmatprep.subr.mxu0 %v690
        %2808 = vmatpush1.msra.mxu0 %v689
        %2809 = vmatprep.subr.mxu0 %v752
        %2810 = vmatpush2.msra.mxu0 %v751
        %2811 = vmatprep.subr.mxu0 %v750
        %2812 = vmatpush2.msra.mxu0 %v749
        %2813 = vmatprep.subr.mxu0 %v748
        %2814 = vmatpush2.msra.mxu0 %v747
        %2815 = vmatprep.subr.mxu0 %v746
        %2816 = vmatpush2.msra.mxu0 %v745
        %2817 = vmatprep.subr.mxu0 %v744
        %2818 = vmatpush2.msra.mxu0 %v743
        %2819 = vmatprep.subr.mxu0 %v742
        %2820 = vmatpush2.msra.mxu0 %v741
        %2821 = vmatprep.subr.mxu0 %v740
        %2822 = vmatpush2.msra.mxu0 %v739
        %2823 = vmatprep.subr.mxu0 %v738
        %2824 = vmatpush2.msra.mxu0 %v737
        %2825 = vmatprep.subr.mxu0 %v736
        %2826 = vmatpush2.msra.mxu0 %v735
        %2827 = vmatprep.subr.mxu0 %v734
        %2828 = vmatpush2.msra.mxu0 %v733
        %2829 = vmatprep.subr.mxu0 %v732
        %2830 = vmatpush2.msra.mxu0 %v731
        %2831 = vmatprep.subr.mxu0 %v730
        %2832 = vmatpush2.msra.mxu0 %v729
        %2833 = vmatprep.subr.mxu0 %v728
        %2834 = vmatpush2.msra.mxu0 %v727
        %2835 = vmatprep.subr.mxu0 %v726
        %2836 = vmatpush2.msra.mxu0 %v725
        %2837 = vmatprep.subr.mxu0 %v724
        %2838 = vmatpush2.msra.mxu0 %v723
        %2839 = vmatprep.subr.mxu0 %v722
        %2840 = vmatpush2.msra.mxu0 %v721
        %2841 = vmatprep.mubr.f32.mxu0 %v378
        %2842 = vmatmul.mubr.f32.gmra.mxu0 %v377
        %v2843 = vpop.f32.mrf.mxu0
        %v2844 = vadd.f32 %v2773, %v2843
        %v2845 = vpop.f32.mrf.mxu0
        %v2846 = vadd.f32 %v2775, %v2845
        %2847 = vdwg.mxu0
        %2848 = vmatprep.subr.mxu0 %v784
        %2849 = vmatpush1.msra.mxu0 %v783
        %2850 = vmatprep.subr.mxu0 %v782
        %2851 = vmatpush1.msra.mxu0 %v781
        %2852 = vmatprep.subr.mxu0 %v780
        %2853 = vmatpush1.msra.mxu0 %v779
        %2854 = vmatprep.subr.mxu0 %v778
        %2855 = vmatpush1.msra.mxu0 %v777
        %2856 = vmatprep.subr.mxu0 %v776
        %2857 = vmatpush1.msra.mxu0 %v775
        %2858 = vmatprep.subr.mxu0 %v774
        %2859 = vmatpush1.msra.mxu0 %v773
        %2860 = vmatprep.subr.mxu0 %v772
        %2861 = vmatpush1.msra.mxu0 %v771
        %2862 = vmatprep.subr.mxu0 %v770
        %2863 = vmatpush1.msra.mxu0 %v769
        %2864 = vmatprep.subr.mxu0 %v768
        %2865 = vmatpush1.msra.mxu0 %v767
        %2866 = vmatprep.subr.mxu0 %v766
        %2867 = vmatpush1.msra.mxu0 %v765
        %2868 = vmatprep.subr.mxu0 %v764
        %2869 = vmatpush1.msra.mxu0 %v763
        %2870 = vmatprep.subr.mxu0 %v762
        %2871 = vmatpush1.msra.mxu0 %v761
        %2872 = vmatprep.subr.mxu0 %v760
        %2873 = vmatpush1.msra.mxu0 %v759
        %2874 = vmatprep.subr.mxu0 %v758
        %2875 = vmatpush1.msra.mxu0 %v757
        %2876 = vmatprep.subr.mxu0 %v756
        %2877 = vmatpush1.msra.mxu0 %v755
        %2878 = vmatprep.subr.mxu0 %v754
        %2879 = vmatpush1.msra.mxu0 %v753
        %2880 = vmatprep.subr.mxu0 %v816
        %2881 = vmatpush2.msra.mxu0 %v815
        %2882 = vmatprep.subr.mxu0 %v814
        %2883 = vmatpush2.msra.mxu0 %v813
        %2884 = vmatprep.subr.mxu0 %v812
        %2885 = vmatpush2.msra.mxu0 %v811
        %2886 = vmatprep.subr.mxu0 %v810
        %2887 = vmatpush2.msra.mxu0 %v809
        %2888 = vmatprep.subr.mxu0 %v808
        %2889 = vmatpush2.msra.mxu0 %v807
        %2890 = vmatprep.subr.mxu0 %v806
        %2891 = vmatpush2.msra.mxu0 %v805
        %2892 = vmatprep.subr.mxu0 %v804
        %2893 = vmatpush2.msra.mxu0 %v803
        %2894 = vmatprep.subr.mxu0 %v802
        %2895 = vmatpush2.msra.mxu0 %v801
        %2896 = vmatprep.subr.mxu0 %v800
        %2897 = vmatpush2.msra.mxu0 %v799
        %2898 = vmatprep.subr.mxu0 %v798
        %2899 = vmatpush2.msra.mxu0 %v797
        %2900 = vmatprep.subr.mxu0 %v796
        %2901 = vmatpush2.msra.mxu0 %v795
        %2902 = vmatprep.subr.mxu0 %v794
        %2903 = vmatpush2.msra.mxu0 %v793
        %2904 = vmatprep.subr.mxu0 %v792
        %2905 = vmatpush2.msra.mxu0 %v791
        %2906 = vmatprep.subr.mxu0 %v790
        %2907 = vmatpush2.msra.mxu0 %v789
        %2908 = vmatprep.subr.mxu0 %v788
        %2909 = vmatpush2.msra.mxu0 %v787
        %2910 = vmatprep.subr.mxu0 %v786
        %2911 = vmatpush2.msra.mxu0 %v785
        %2912 = vmatprep.mubr.f32.mxu0 %v380
        %2913 = vmatmul.mubr.f32.gmra.mxu0 %v379
        %v2914 = vpop.f32.mrf.mxu0
        %v2915 = vadd.f32 %v2844, %v2914
        %v2916 = vpop.f32.mrf.mxu0
        %v2917 = vadd.f32 %v2846, %v2916
        %2918 = vdwg.mxu0
        %2919 = vmatprep.subr.mxu0 %v848
        %2920 = vmatpush1.msra.mxu0 %v847
        %2921 = vmatprep.subr.mxu0 %v846
        %2922 = vmatpush1.msra.mxu0 %v845
        %2923 = vmatprep.subr.mxu0 %v844
        %2924 = vmatpush1.msra.mxu0 %v843
        %2925 = vmatprep.subr.mxu0 %v842
        %2926 = vmatpush1.msra.mxu0 %v841
        %2927 = vmatprep.subr.mxu0 %v840
        %2928 = vmatpush1.msra.mxu0 %v839
        %2929 = vmatprep.subr.mxu0 %v838
        %2930 = vmatpush1.msra.mxu0 %v837
        %2931 = vmatprep.subr.mxu0 %v836
        %2932 = vmatpush1.msra.mxu0 %v835
        %2933 = vmatprep.subr.mxu0 %v834
        %2934 = vmatpush1.msra.mxu0 %v833
        %2935 = vmatprep.subr.mxu0 %v832
        %2936 = vmatpush1.msra.mxu0 %v831
        %2937 = vmatprep.subr.mxu0 %v830
        %2938 = vmatpush1.msra.mxu0 %v829
        %2939 = vmatprep.subr.mxu0 %v828
        %2940 = vmatpush1.msra.mxu0 %v827
        %2941 = vmatprep.subr.mxu0 %v826
        %2942 = vmatpush1.msra.mxu0 %v825
        %2943 = vmatprep.subr.mxu0 %v824
        %2944 = vmatpush1.msra.mxu0 %v823
        %2945 = vmatprep.subr.mxu0 %v822
        %2946 = vmatpush1.msra.mxu0 %v821
        %2947 = vmatprep.subr.mxu0 %v820
        %2948 = vmatpush1.msra.mxu0 %v819
        %2949 = vmatprep.subr.mxu0 %v818
        %2950 = vmatpush1.msra.mxu0 %v817
        %2951 = vmatprep.subr.mxu0 %v880
        %2952 = vmatpush2.msra.mxu0 %v879
        %2953 = vmatprep.subr.mxu0 %v878
        %2954 = vmatpush2.msra.mxu0 %v877
        %2955 = vmatprep.subr.mxu0 %v876
        %2956 = vmatpush2.msra.mxu0 %v875
        %2957 = vmatprep.subr.mxu0 %v874
        %2958 = vmatpush2.msra.mxu0 %v873
        %2959 = vmatprep.subr.mxu0 %v872
        %2960 = vmatpush2.msra.mxu0 %v871
        %2961 = vmatprep.subr.mxu0 %v870
        %2962 = vmatpush2.msra.mxu0 %v869
        %2963 = vmatprep.subr.mxu0 %v868
        %2964 = vmatpush2.msra.mxu0 %v867
        %2965 = vmatprep.subr.mxu0 %v866
        %2966 = vmatpush2.msra.mxu0 %v865
        %2967 = vmatprep.subr.mxu0 %v864
        %2968 = vmatpush2.msra.mxu0 %v863
        %2969 = vmatprep.subr.mxu0 %v862
        %2970 = vmatpush2.msra.mxu0 %v861
        %2971 = vmatprep.subr.mxu0 %v860
        %2972 = vmatpush2.msra.mxu0 %v859
        %2973 = vmatprep.subr.mxu0 %v858
        %2974 = vmatpush2.msra.mxu0 %v857
        %2975 = vmatprep.subr.mxu0 %v856
        %2976 = vmatpush2.msra.mxu0 %v855
        %2977 = vmatprep.subr.mxu0 %v854
        %2978 = vmatpush2.msra.mxu0 %v853
        %2979 = vmatprep.subr.mxu0 %v852
        %2980 = vmatpush2.msra.mxu0 %v851
        %2981 = vmatprep.subr.mxu0 %v850
        %2982 = vmatpush2.msra.mxu0 %v849
        %2983 = vmatprep.mubr.f32.mxu0 %v382
        %2984 = vmatmul.mubr.f32.gmra.mxu0 %v381
        %v2985 = vpop.f32.mrf.mxu0
        %v2986 = vadd.f32 %v2915, %v2985
        %v2987 = vpop.f32.mrf.mxu0
        %v2988 = vadd.f32 %v2917, %v2987
        %2989 = vdwg.mxu0
        %2990 = vmatprep.subr.mxu0 %v912
        %2991 = vmatpush1.msra.mxu0 %v911
        %2992 = vmatprep.subr.mxu0 %v910
        %2993 = vmatpush1.msra.mxu0 %v909
        %2994 = vmatprep.subr.mxu0 %v908
        %2995 = vmatpush1.msra.mxu0 %v907
        %2996 = vmatprep.subr.mxu0 %v906
        %2997 = vmatpush1.msra.mxu0 %v905
        %2998 = vmatprep.subr.mxu0 %v904
        %2999 = vmatpush1.msra.mxu0 %v903
        %3000 = vmatprep.subr.mxu0 %v902
        %3001 = vmatpush1.msra.mxu0 %v901
        %3002 = vmatprep.subr.mxu0 %v900
        %3003 = vmatpush1.msra.mxu0 %v899
        %3004 = vmatprep.subr.mxu0 %v898
        %3005 = vmatpush1.msra.mxu0 %v897
        %3006 = vmatprep.subr.mxu0 %v896
        %3007 = vmatpush1.msra.mxu0 %v895
        %3008 = vmatprep.subr.mxu0 %v894
        %3009 = vmatpush1.msra.mxu0 %v893
        %3010 = vmatprep.subr.mxu0 %v892
        %3011 = vmatpush1.msra.mxu0 %v891
        %3012 = vmatprep.subr.mxu0 %v890
        %3013 = vmatpush1.msra.mxu0 %v889
        %3014 = vmatprep.subr.mxu0 %v888
        %3015 = vmatpush1.msra.mxu0 %v887
        %3016 = vmatprep.subr.mxu0 %v886
        %3017 = vmatpush1.msra.mxu0 %v885
        %3018 = vmatprep.subr.mxu0 %v884
        %3019 = vmatpush1.msra.mxu0 %v883
        %3020 = vmatprep.subr.mxu0 %v882
        %3021 = vmatpush1.msra.mxu0 %v881
        %3022 = vmatprep.subr.mxu0 %v944
        %3023 = vmatpush2.msra.mxu0 %v943
        %3024 = vmatprep.subr.mxu0 %v942
        %3025 = vmatpush2.msra.mxu0 %v941
        %3026 = vmatprep.subr.mxu0 %v940
        %3027 = vmatpush2.msra.mxu0 %v939
        %3028 = vmatprep.subr.mxu0 %v938
        %3029 = vmatpush2.msra.mxu0 %v937
        %3030 = vmatprep.subr.mxu0 %v936
        %3031 = vmatpush2.msra.mxu0 %v935
        %3032 = vmatprep.subr.mxu0 %v934
        %3033 = vmatpush2.msra.mxu0 %v933
        %3034 = vmatprep.subr.mxu0 %v932
        %3035 = vmatpush2.msra.mxu0 %v931
        %3036 = vmatprep.subr.mxu0 %v930
        %3037 = vmatpush2.msra.mxu0 %v929
        %3038 = vmatprep.subr.mxu0 %v928
        %3039 = vmatpush2.msra.mxu0 %v927
        %3040 = vmatprep.subr.mxu0 %v926
        %3041 = vmatpush2.msra.mxu0 %v925
        %3042 = vmatprep.subr.mxu0 %v924
        %3043 = vmatpush2.msra.mxu0 %v923
        %3044 = vmatprep.subr.mxu0 %v922
        %3045 = vmatpush2.msra.mxu0 %v921
        %3046 = vmatprep.subr.mxu0 %v920
        %3047 = vmatpush2.msra.mxu0 %v919
        %3048 = vmatprep.subr.mxu0 %v918
        %3049 = vmatpush2.msra.mxu0 %v917
        %3050 = vmatprep.subr.mxu0 %v916
        %3051 = vmatpush2.msra.mxu0 %v915
        %3052 = vmatprep.subr.mxu0 %v914
        %3053 = vmatpush2.msra.mxu0 %v913
        %3054 = vmatprep.mubr.f32.mxu0 %v384
        %3055 = vmatmul.mubr.f32.gmra.mxu0 %v383
        %v3056 = vpop.f32.mrf.mxu0
        %v3057 = vadd.f32 %v2986, %v3056
        %v3058 = vpop.f32.mrf.mxu0
        %v3059 = vadd.f32 %v2988, %v3058
        %3060 = vdwg.mxu0
        %3061 = vmatprep.subr.mxu0 %v976
        %3062 = vmatpush1.msra.mxu0 %v975
        %3063 = vmatprep.subr.mxu0 %v974
        %3064 = vmatpush1.msra.mxu0 %v973
        %3065 = vmatprep.subr.mxu0 %v972
        %3066 = vmatpush1.msra.mxu0 %v971
        %3067 = vmatprep.subr.mxu0 %v970
        %3068 = vmatpush1.msra.mxu0 %v969
        %3069 = vmatprep.subr.mxu0 %v968
        %3070 = vmatpush1.msra.mxu0 %v967
        %3071 = vmatprep.subr.mxu0 %v966
        %3072 = vmatpush1.msra.mxu0 %v965
        %3073 = vmatprep.subr.mxu0 %v964
        %3074 = vmatpush1.msra.mxu0 %v963
        %3075 = vmatprep.subr.mxu0 %v962
        %3076 = vmatpush1.msra.mxu0 %v961
        %3077 = vmatprep.subr.mxu0 %v960
        %3078 = vmatpush1.msra.mxu0 %v959
        %3079 = vmatprep.subr.mxu0 %v958
        %3080 = vmatpush1.msra.mxu0 %v957
        %3081 = vmatprep.subr.mxu0 %v956
        %3082 = vmatpush1.msra.mxu0 %v955
        %3083 = vmatprep.subr.mxu0 %v954
        %3084 = vmatpush1.msra.mxu0 %v953
        %3085 = vmatprep.subr.mxu0 %v952
        %3086 = vmatpush1.msra.mxu0 %v951
        %3087 = vmatprep.subr.mxu0 %v950
        %3088 = vmatpush1.msra.mxu0 %v949
        %3089 = vmatprep.subr.mxu0 %v948
        %3090 = vmatpush1.msra.mxu0 %v947
        %3091 = vmatprep.subr.mxu0 %v946
        %3092 = vmatpush1.msra.mxu0 %v945
        %3093 = vmatprep.subr.mxu0 %v1008
        %3094 = vmatpush2.msra.mxu0 %v1007
        %3095 = vmatprep.subr.mxu0 %v1006
        %3096 = vmatpush2.msra.mxu0 %v1005
        %3097 = vmatprep.subr.mxu0 %v1004
        %3098 = vmatpush2.msra.mxu0 %v1003
        %3099 = vmatprep.subr.mxu0 %v1002
        %3100 = vmatpush2.msra.mxu0 %v1001
        %3101 = vmatprep.subr.mxu0 %v1000
        %3102 = vmatpush2.msra.mxu0 %v999
        %3103 = vmatprep.subr.mxu0 %v998
        %3104 = vmatpush2.msra.mxu0 %v997
        %3105 = vmatprep.subr.mxu0 %v996
        %3106 = vmatpush2.msra.mxu0 %v995
        %3107 = vmatprep.subr.mxu0 %v994
        %3108 = vmatpush2.msra.mxu0 %v993
        %3109 = vmatprep.subr.mxu0 %v992
        %3110 = vmatpush2.msra.mxu0 %v991
        %3111 = vmatprep.subr.mxu0 %v990
        %3112 = vmatpush2.msra.mxu0 %v989
        %3113 = vmatprep.subr.mxu0 %v988
        %3114 = vmatpush2.msra.mxu0 %v987
        %3115 = vmatprep.subr.mxu0 %v986
        %3116 = vmatpush2.msra.mxu0 %v985
        %3117 = vmatprep.subr.mxu0 %v984
        %3118 = vmatpush2.msra.mxu0 %v983
        %3119 = vmatprep.subr.mxu0 %v982
        %3120 = vmatpush2.msra.mxu0 %v981
        %3121 = vmatprep.subr.mxu0 %v980
        %3122 = vmatpush2.msra.mxu0 %v979
        %3123 = vmatprep.subr.mxu0 %v978
        %3124 = vmatpush2.msra.mxu0 %v977
        %3125 = vmatprep.mubr.f32.mxu0 %v386
        %3126 = vmatmul.mubr.f32.gmra.mxu0 %v385
        %v3127 = vpop.f32.mrf.mxu0
        %v3128 = vadd.f32 %v3057, %v3127
        %v3129 = vpop.f32.mrf.mxu0
        %v3130 = vadd.f32 %v3059, %v3129
        %3131 = vdwg.mxu0
        %3132 = vmatprep.subr.mxu0 %v1040
        %3133 = vmatpush1.msra.mxu0 %v1039
        %3134 = vmatprep.subr.mxu0 %v1038
        %3135 = vmatpush1.msra.mxu0 %v1037
        %3136 = vmatprep.subr.mxu0 %v1036
        %3137 = vmatpush1.msra.mxu0 %v1035
        %3138 = vmatprep.subr.mxu0 %v1034
        %3139 = vmatpush1.msra.mxu0 %v1033
        %3140 = vmatprep.subr.mxu0 %v1032
        %3141 = vmatpush1.msra.mxu0 %v1031
        %3142 = vmatprep.subr.mxu0 %v1030
        %3143 = vmatpush1.msra.mxu0 %v1029
        %3144 = vmatprep.subr.mxu0 %v1028
        %3145 = vmatpush1.msra.mxu0 %v1027
        %3146 = vmatprep.subr.mxu0 %v1026
        %3147 = vmatpush1.msra.mxu0 %v1025
        %3148 = vmatprep.subr.mxu0 %v1024
        %3149 = vmatpush1.msra.mxu0 %v1023
        %3150 = vmatprep.subr.mxu0 %v1022
        %3151 = vmatpush1.msra.mxu0 %v1021
        %3152 = vmatprep.subr.mxu0 %v1020
        %3153 = vmatpush1.msra.mxu0 %v1019
        %3154 = vmatprep.subr.mxu0 %v1018
        %3155 = vmatpush1.msra.mxu0 %v1017
        %3156 = vmatprep.subr.mxu0 %v1016
        %3157 = vmatpush1.msra.mxu0 %v1015
        %3158 = vmatprep.subr.mxu0 %v1014
        %3159 = vmatpush1.msra.mxu0 %v1013
        %3160 = vmatprep.subr.mxu0 %v1012
        %3161 = vmatpush1.msra.mxu0 %v1011
        %3162 = vmatprep.subr.mxu0 %v1010
        %3163 = vmatpush1.msra.mxu0 %v1009
        %3164 = vmatprep.subr.mxu0 %v1072
        %3165 = vmatpush2.msra.mxu0 %v1071
        %3166 = vmatprep.subr.mxu0 %v1070
        %3167 = vmatpush2.msra.mxu0 %v1069
        %3168 = vmatprep.subr.mxu0 %v1068
        %3169 = vmatpush2.msra.mxu0 %v1067
        %3170 = vmatprep.subr.mxu0 %v1066
        %3171 = vmatpush2.msra.mxu0 %v1065
        %3172 = vmatprep.subr.mxu0 %v1064
        %3173 = vmatpush2.msra.mxu0 %v1063
        %3174 = vmatprep.subr.mxu0 %v1062
        %3175 = vmatpush2.msra.mxu0 %v1061
        %3176 = vmatprep.subr.mxu0 %v1060
        %3177 = vmatpush2.msra.mxu0 %v1059
        %3178 = vmatprep.subr.mxu0 %v1058
        %3179 = vmatpush2.msra.mxu0 %v1057
        %3180 = vmatprep.subr.mxu0 %v1056
        %3181 = vmatpush2.msra.mxu0 %v1055
        %3182 = vmatprep.subr.mxu0 %v1054
        %3183 = vmatpush2.msra.mxu0 %v1053
        %3184 = vmatprep.subr.mxu0 %v1052
        %3185 = vmatpush2.msra.mxu0 %v1051
        %3186 = vmatprep.subr.mxu0 %v1050
        %3187 = vmatpush2.msra.mxu0 %v1049
        %3188 = vmatprep.subr.mxu0 %v1048
        %3189 = vmatpush2.msra.mxu0 %v1047
        %3190 = vmatprep.subr.mxu0 %v1046
        %3191 = vmatpush2.msra.mxu0 %v1045
        %3192 = vmatprep.subr.mxu0 %v1044
        %3193 = vmatpush2.msra.mxu0 %v1043
        %3194 = vmatprep.subr.mxu0 %v1042
        %3195 = vmatpush2.msra.mxu0 %v1041
        %3196 = vmatprep.mubr.f32.mxu0 %v388
        %3197 = vmatmul.mubr.f32.gmra.mxu0 %v387
        %v3198 = vpop.f32.mrf.mxu0
        %v3199 = vadd.f32 %v3128, %v3198
        %v3200 = vpop.f32.mrf.mxu0
        %v3201 = vadd.f32 %v3130, %v3200
        %3202 = vdwg.mxu0
        %3203 = vmatprep.subr.mxu0 %v1104
        %3204 = vmatpush1.msra.mxu0 %v1103
        %3205 = vmatprep.subr.mxu0 %v1102
        %3206 = vmatpush1.msra.mxu0 %v1101
        %3207 = vmatprep.subr.mxu0 %v1100
        %3208 = vmatpush1.msra.mxu0 %v1099
        %3209 = vmatprep.subr.mxu0 %v1098
        %3210 = vmatpush1.msra.mxu0 %v1097
        %3211 = vmatprep.subr.mxu0 %v1096
        %3212 = vmatpush1.msra.mxu0 %v1095
        %3213 = vmatprep.subr.mxu0 %v1094
        %3214 = vmatpush1.msra.mxu0 %v1093
        %3215 = vmatprep.subr.mxu0 %v1092
        %3216 = vmatpush1.msra.mxu0 %v1091
        %3217 = vmatprep.subr.mxu0 %v1090
        %3218 = vmatpush1.msra.mxu0 %v1089
        %3219 = vmatprep.subr.mxu0 %v1088
        %3220 = vmatpush1.msra.mxu0 %v1087
        %3221 = vmatprep.subr.mxu0 %v1086
        %3222 = vmatpush1.msra.mxu0 %v1085
        %3223 = vmatprep.subr.mxu0 %v1084
        %3224 = vmatpush1.msra.mxu0 %v1083
        %3225 = vmatprep.subr.mxu0 %v1082
        %3226 = vmatpush1.msra.mxu0 %v1081
        %3227 = vmatprep.subr.mxu0 %v1080
        %3228 = vmatpush1.msra.mxu0 %v1079
        %3229 = vmatprep.subr.mxu0 %v1078
        %3230 = vmatpush1.msra.mxu0 %v1077
        %3231 = vmatprep.subr.mxu0 %v1076
        %3232 = vmatpush1.msra.mxu0 %v1075
        %3233 = vmatprep.subr.mxu0 %v1074
        %3234 = vmatpush1.msra.mxu0 %v1073
        %3235 = vmatprep.subr.mxu0 %v1136
        %3236 = vmatpush2.msra.mxu0 %v1135
        %3237 = vmatprep.subr.mxu0 %v1134
        %3238 = vmatpush2.msra.mxu0 %v1133
        %3239 = vmatprep.subr.mxu0 %v1132
        %3240 = vmatpush2.msra.mxu0 %v1131
        %3241 = vmatprep.subr.mxu0 %v1130
        %3242 = vmatpush2.msra.mxu0 %v1129
        %3243 = vmatprep.subr.mxu0 %v1128
        %3244 = vmatpush2.msra.mxu0 %v1127
        %3245 = vmatprep.subr.mxu0 %v1126
        %3246 = vmatpush2.msra.mxu0 %v1125
        %3247 = vmatprep.subr.mxu0 %v1124
        %3248 = vmatpush2.msra.mxu0 %v1123
        %3249 = vmatprep.subr.mxu0 %v1122
        %3250 = vmatpush2.msra.mxu0 %v1121
        %3251 = vmatprep.subr.mxu0 %v1120
        %3252 = vmatpush2.msra.mxu0 %v1119
        %3253 = vmatprep.subr.mxu0 %v1118
        %3254 = vmatpush2.msra.mxu0 %v1117
        %3255 = vmatprep.subr.mxu0 %v1116
        %3256 = vmatpush2.msra.mxu0 %v1115
        %3257 = vmatprep.subr.mxu0 %v1114
        %3258 = vmatpush2.msra.mxu0 %v1113
        %3259 = vmatprep.subr.mxu0 %v1112
        %3260 = vmatpush2.msra.mxu0 %v1111
        %3261 = vmatprep.subr.mxu0 %v1110
        %3262 = vmatpush2.msra.mxu0 %v1109
        %3263 = vmatprep.subr.mxu0 %v1108
        %3264 = vmatpush2.msra.mxu0 %v1107
        %3265 = vmatprep.subr.mxu0 %v1106
        %3266 = vmatpush2.msra.mxu0 %v1105
        %3267 = vmatprep.mubr.f32.mxu0 %v390
        %3268 = vmatmul.mubr.f32.gmra.mxu0 %v389
        %v3269 = vpop.f32.mrf.mxu0
        %v3270 = vadd.f32 %v3199, %v3269
        %v3271 = vpop.f32.mrf.mxu0
        %v3272 = vadd.f32 %v3201, %v3271
        %3273 = vdwg.mxu0
        %3274 = vmatprep.subr.mxu0 %v1168
        %3275 = vmatpush1.msra.mxu0 %v1167
        %3276 = vmatprep.subr.mxu0 %v1166
        %3277 = vmatpush1.msra.mxu0 %v1165
        %3278 = vmatprep.subr.mxu0 %v1164
        %3279 = vmatpush1.msra.mxu0 %v1163
        %3280 = vmatprep.subr.mxu0 %v1162
        %3281 = vmatpush1.msra.mxu0 %v1161
        %3282 = vmatprep.subr.mxu0 %v1160
        %3283 = vmatpush1.msra.mxu0 %v1159
        %3284 = vmatprep.subr.mxu0 %v1158
        %3285 = vmatpush1.msra.mxu0 %v1157
        %3286 = vmatprep.subr.mxu0 %v1156
        %3287 = vmatpush1.msra.mxu0 %v1155
        %3288 = vmatprep.subr.mxu0 %v1154
        %3289 = vmatpush1.msra.mxu0 %v1153
        %3290 = vmatprep.subr.mxu0 %v1152
        %3291 = vmatpush1.msra.mxu0 %v1151
        %3292 = vmatprep.subr.mxu0 %v1150
        %3293 = vmatpush1.msra.mxu0 %v1149
        %3294 = vmatprep.subr.mxu0 %v1148
        %3295 = vmatpush1.msra.mxu0 %v1147
        %3296 = vmatprep.subr.mxu0 %v1146
        %3297 = vmatpush1.msra.mxu0 %v1145
        %3298 = vmatprep.subr.mxu0 %v1144
        %3299 = vmatpush1.msra.mxu0 %v1143
        %3300 = vmatprep.subr.mxu0 %v1142
        %3301 = vmatpush1.msra.mxu0 %v1141
        %3302 = vmatprep.subr.mxu0 %v1140
        %3303 = vmatpush1.msra.mxu0 %v1139
        %3304 = vmatprep.subr.mxu0 %v1138
        %3305 = vmatpush1.msra.mxu0 %v1137
        %3306 = vmatprep.subr.mxu0 %v1200
        %3307 = vmatpush2.msra.mxu0 %v1199
        %3308 = vmatprep.subr.mxu0 %v1198
        %3309 = vmatpush2.msra.mxu0 %v1197
        %3310 = vmatprep.subr.mxu0 %v1196
        %3311 = vmatpush2.msra.mxu0 %v1195
        %3312 = vmatprep.subr.mxu0 %v1194
        %3313 = vmatpush2.msra.mxu0 %v1193
        %3314 = vmatprep.subr.mxu0 %v1192
        %3315 = vmatpush2.msra.mxu0 %v1191
        %3316 = vmatprep.subr.mxu0 %v1190
        %3317 = vmatpush2.msra.mxu0 %v1189
        %3318 = vmatprep.subr.mxu0 %v1188
        %3319 = vmatpush2.msra.mxu0 %v1187
        %3320 = vmatprep.subr.mxu0 %v1186
        %3321 = vmatpush2.msra.mxu0 %v1185
        %3322 = vmatprep.subr.mxu0 %v1184
        %3323 = vmatpush2.msra.mxu0 %v1183
        %3324 = vmatprep.subr.mxu0 %v1182
        %3325 = vmatpush2.msra.mxu0 %v1181
        %3326 = vmatprep.subr.mxu0 %v1180
        %3327 = vmatpush2.msra.mxu0 %v1179
        %3328 = vmatprep.subr.mxu0 %v1178
        %3329 = vmatpush2.msra.mxu0 %v1177
        %3330 = vmatprep.subr.mxu0 %v1176
        %3331 = vmatpush2.msra.mxu0 %v1175
        %3332 = vmatprep.subr.mxu0 %v1174
        %3333 = vmatpush2.msra.mxu0 %v1173
        %3334 = vmatprep.subr.mxu0 %v1172
        %3335 = vmatpush2.msra.mxu0 %v1171
        %3336 = vmatprep.subr.mxu0 %v1170
        %3337 = vmatpush2.msra.mxu0 %v1169
        %3338 = vmatprep.mubr.f32.mxu0 %v392
        %3339 = vmatmul.mubr.f32.gmra.mxu0 %v391
        %v3340 = vpop.f32.mrf.mxu0
        %v3341 = vadd.f32 %v3270, %v3340
        %v3342 = vpop.f32.mrf.mxu0
        %v3343 = vadd.f32 %v3272, %v3342
        %3344 = vdwg.mxu0
        %3345 = vmatprep.subr.mxu0 %v1232
        %3346 = vmatpush1.msra.mxu0 %v1231
        %3347 = vmatprep.subr.mxu0 %v1230
        %3348 = vmatpush1.msra.mxu0 %v1229
        %3349 = vmatprep.subr.mxu0 %v1228
        %3350 = vmatpush1.msra.mxu0 %v1227
        %3351 = vmatprep.subr.mxu0 %v1226
        %3352 = vmatpush1.msra.mxu0 %v1225
        %3353 = vmatprep.subr.mxu0 %v1224
        %3354 = vmatpush1.msra.mxu0 %v1223
        %3355 = vmatprep.subr.mxu0 %v1222
        %3356 = vmatpush1.msra.mxu0 %v1221
        %3357 = vmatprep.subr.mxu0 %v1220
        %3358 = vmatpush1.msra.mxu0 %v1219
        %3359 = vmatprep.subr.mxu0 %v1218
        %3360 = vmatpush1.msra.mxu0 %v1217
        %3361 = vmatprep.subr.mxu0 %v1216
        %3362 = vmatpush1.msra.mxu0 %v1215
        %3363 = vmatprep.subr.mxu0 %v1214
        %3364 = vmatpush1.msra.mxu0 %v1213
        %3365 = vmatprep.subr.mxu0 %v1212
        %3366 = vmatpush1.msra.mxu0 %v1211
        %3367 = vmatprep.subr.mxu0 %v1210
        %3368 = vmatpush1.msra.mxu0 %v1209
        %3369 = vmatprep.subr.mxu0 %v1208
        %3370 = vmatpush1.msra.mxu0 %v1207
        %3371 = vmatprep.subr.mxu0 %v1206
        %3372 = vmatpush1.msra.mxu0 %v1205
        %3373 = vmatprep.subr.mxu0 %v1204
        %3374 = vmatpush1.msra.mxu0 %v1203
        %3375 = vmatprep.subr.mxu0 %v1202
        %3376 = vmatpush1.msra.mxu0 %v1201
        %3377 = vmatprep.subr.mxu0 %v1264
        %3378 = vmatpush2.msra.mxu0 %v1263
        %3379 = vmatprep.subr.mxu0 %v1262
        %3380 = vmatpush2.msra.mxu0 %v1261
        %3381 = vmatprep.subr.mxu0 %v1260
        %3382 = vmatpush2.msra.mxu0 %v1259
        %3383 = vmatprep.subr.mxu0 %v1258
        %3384 = vmatpush2.msra.mxu0 %v1257
        %3385 = vmatprep.subr.mxu0 %v1256
        %3386 = vmatpush2.msra.mxu0 %v1255
        %3387 = vmatprep.subr.mxu0 %v1254
        %3388 = vmatpush2.msra.mxu0 %v1253
        %3389 = vmatprep.subr.mxu0 %v1252
        %3390 = vmatpush2.msra.mxu0 %v1251
        %3391 = vmatprep.subr.mxu0 %v1250
        %3392 = vmatpush2.msra.mxu0 %v1249
        %3393 = vmatprep.subr.mxu0 %v1248
        %3394 = vmatpush2.msra.mxu0 %v1247
        %3395 = vmatprep.subr.mxu0 %v1246
        %3396 = vmatpush2.msra.mxu0 %v1245
        %3397 = vmatprep.subr.mxu0 %v1244
        %3398 = vmatpush2.msra.mxu0 %v1243
        %3399 = vmatprep.subr.mxu0 %v1242
        %3400 = vmatpush2.msra.mxu0 %v1241
        %3401 = vmatprep.subr.mxu0 %v1240
        %3402 = vmatpush2.msra.mxu0 %v1239
        %3403 = vmatprep.subr.mxu0 %v1238
        %3404 = vmatpush2.msra.mxu0 %v1237
        %3405 = vmatprep.subr.mxu0 %v1236
        %3406 = vmatpush2.msra.mxu0 %v1235
        %3407 = vmatprep.subr.mxu0 %v1234
        %3408 = vmatpush2.msra.mxu0 %v1233
        %3409 = vmatprep.mubr.f32.mxu0 %v394
        %3410 = vmatmul.mubr.f32.gmra.mxu0 %v393
        %v3411 = vpop.f32.mrf.mxu0
        %v3412 = vadd.f32 %v3341, %v3411
        %v3413 = vpop.f32.mrf.mxu0
        %v3414 = vadd.f32 %v3343, %v3413
        %3415 = vdwg.mxu0
        %3416 = vmatprep.subr.mxu0 %v1296
        %3417 = vmatpush1.msra.mxu0 %v1295
        %3418 = vmatprep.subr.mxu0 %v1294
        %3419 = vmatpush1.msra.mxu0 %v1293
        %3420 = vmatprep.subr.mxu0 %v1292
        %3421 = vmatpush1.msra.mxu0 %v1291
        %3422 = vmatprep.subr.mxu0 %v1290
        %3423 = vmatpush1.msra.mxu0 %v1289
        %3424 = vmatprep.subr.mxu0 %v1288
        %3425 = vmatpush1.msra.mxu0 %v1287
        %3426 = vmatprep.subr.mxu0 %v1286
        %3427 = vmatpush1.msra.mxu0 %v1285
        %3428 = vmatprep.subr.mxu0 %v1284
        %3429 = vmatpush1.msra.mxu0 %v1283
        %3430 = vmatprep.subr.mxu0 %v1282
        %3431 = vmatpush1.msra.mxu0 %v1281
        %3432 = vmatprep.subr.mxu0 %v1280
        %3433 = vmatpush1.msra.mxu0 %v1279
        %3434 = vmatprep.subr.mxu0 %v1278
        %3435 = vmatpush1.msra.mxu0 %v1277
        %3436 = vmatprep.subr.mxu0 %v1276
        %3437 = vmatpush1.msra.mxu0 %v1275
        %3438 = vmatprep.subr.mxu0 %v1274
        %3439 = vmatpush1.msra.mxu0 %v1273
        %3440 = vmatprep.subr.mxu0 %v1272
        %3441 = vmatpush1.msra.mxu0 %v1271
        %3442 = vmatprep.subr.mxu0 %v1270
        %3443 = vmatpush1.msra.mxu0 %v1269
        %3444 = vmatprep.subr.mxu0 %v1268
        %3445 = vmatpush1.msra.mxu0 %v1267
        %3446 = vmatprep.subr.mxu0 %v1266
        %3447 = vmatpush1.msra.mxu0 %v1265
        %3448 = vmatprep.subr.mxu0 %v1328
        %3449 = vmatpush2.msra.mxu0 %v1327
        %3450 = vmatprep.subr.mxu0 %v1326
        %3451 = vmatpush2.msra.mxu0 %v1325
        %3452 = vmatprep.subr.mxu0 %v1324
        %3453 = vmatpush2.msra.mxu0 %v1323
        %3454 = vmatprep.subr.mxu0 %v1322
        %3455 = vmatpush2.msra.mxu0 %v1321
        %3456 = vmatprep.subr.mxu0 %v1320
        %3457 = vmatpush2.msra.mxu0 %v1319
        %3458 = vmatprep.subr.mxu0 %v1318
        %3459 = vmatpush2.msra.mxu0 %v1317
        %3460 = vmatprep.subr.mxu0 %v1316
        %3461 = vmatpush2.msra.mxu0 %v1315
        %3462 = vmatprep.subr.mxu0 %v1314
        %3463 = vmatpush2.msra.mxu0 %v1313
        %3464 = vmatprep.subr.mxu0 %v1312
        %3465 = vmatpush2.msra.mxu0 %v1311
        %3466 = vmatprep.subr.mxu0 %v1310
        %3467 = vmatpush2.msra.mxu0 %v1309
        %3468 = vmatprep.subr.mxu0 %v1308
        %3469 = vmatpush2.msra.mxu0 %v1307
        %3470 = vmatprep.subr.mxu0 %v1306
        %3471 = vmatpush2.msra.mxu0 %v1305
        %3472 = vmatprep.subr.mxu0 %v1304
        %3473 = vmatpush2.msra.mxu0 %v1303
        %3474 = vmatprep.subr.mxu0 %v1302
        %3475 = vmatpush2.msra.mxu0 %v1301
        %3476 = vmatprep.subr.mxu0 %v1300
        %3477 = vmatpush2.msra.mxu0 %v1299
        %3478 = vmatprep.subr.mxu0 %v1298
        %3479 = vmatpush2.msra.mxu0 %v1297
        %3480 = vmatprep.mubr.f32.mxu0 %v396
        %3481 = vmatmul.mubr.f32.gmra.mxu0 %v395
        %v3482 = vpop.f32.mrf.mxu0
        %v3483 = vadd.f32 %v3412, %v3482
        %v3484 = vpop.f32.mrf.mxu0
        %v3485 = vadd.f32 %v3414, %v3484
        %3486 = vdwg.mxu0
        %3487 = vmatprep.subr.mxu0 %v1360
        %3488 = vmatpush1.msra.mxu0 %v1359
        %3489 = vmatprep.subr.mxu0 %v1358
        %3490 = vmatpush1.msra.mxu0 %v1357
        %3491 = vmatprep.subr.mxu0 %v1356
        %3492 = vmatpush1.msra.mxu0 %v1355
        %3493 = vmatprep.subr.mxu0 %v1354
        %3494 = vmatpush1.msra.mxu0 %v1353
        %3495 = vmatprep.subr.mxu0 %v1352
        %3496 = vmatpush1.msra.mxu0 %v1351
        %3497 = vmatprep.subr.mxu0 %v1350
        %3498 = vmatpush1.msra.mxu0 %v1349
        %3499 = vmatprep.subr.mxu0 %v1348
        %3500 = vmatpush1.msra.mxu0 %v1347
        %3501 = vmatprep.subr.mxu0 %v1346
        %3502 = vmatpush1.msra.mxu0 %v1345
        %3503 = vmatprep.subr.mxu0 %v1344
        %3504 = vmatpush1.msra.mxu0 %v1343
        %3505 = vmatprep.subr.mxu0 %v1342
        %3506 = vmatpush1.msra.mxu0 %v1341
        %3507 = vmatprep.subr.mxu0 %v1340
        %3508 = vmatpush1.msra.mxu0 %v1339
        %3509 = vmatprep.subr.mxu0 %v1338
        %3510 = vmatpush1.msra.mxu0 %v1337
        %3511 = vmatprep.subr.mxu0 %v1336
        %3512 = vmatpush1.msra.mxu0 %v1335
        %3513 = vmatprep.subr.mxu0 %v1334
        %3514 = vmatpush1.msra.mxu0 %v1333
        %3515 = vmatprep.subr.mxu0 %v1332
        %3516 = vmatpush1.msra.mxu0 %v1331
        %3517 = vmatprep.subr.mxu0 %v1330
        %3518 = vmatpush1.msra.mxu0 %v1329
        %3519 = vmatprep.subr.mxu0 %v1392
        %3520 = vmatpush2.msra.mxu0 %v1391
        %3521 = vmatprep.subr.mxu0 %v1390
        %3522 = vmatpush2.msra.mxu0 %v1389
        %3523 = vmatprep.subr.mxu0 %v1388
        %3524 = vmatpush2.msra.mxu0 %v1387
        %3525 = vmatprep.subr.mxu0 %v1386
        %3526 = vmatpush2.msra.mxu0 %v1385
        %3527 = vmatprep.subr.mxu0 %v1384
        %3528 = vmatpush2.msra.mxu0 %v1383
        %3529 = vmatprep.subr.mxu0 %v1382
        %3530 = vmatpush2.msra.mxu0 %v1381
        %3531 = vmatprep.subr.mxu0 %v1380
        %3532 = vmatpush2.msra.mxu0 %v1379
        %3533 = vmatprep.subr.mxu0 %v1378
        %3534 = vmatpush2.msra.mxu0 %v1377
        %3535 = vmatprep.subr.mxu0 %v1376
        %3536 = vmatpush2.msra.mxu0 %v1375
        %3537 = vmatprep.subr.mxu0 %v1374
        %3538 = vmatpush2.msra.mxu0 %v1373
        %3539 = vmatprep.subr.mxu0 %v1372
        %3540 = vmatpush2.msra.mxu0 %v1371
        %3541 = vmatprep.subr.mxu0 %v1370
        %3542 = vmatpush2.msra.mxu0 %v1369
        %3543 = vmatprep.subr.mxu0 %v1368
        %3544 = vmatpush2.msra.mxu0 %v1367
        %3545 = vmatprep.subr.mxu0 %v1366
        %3546 = vmatpush2.msra.mxu0 %v1365
        %3547 = vmatprep.subr.mxu0 %v1364
        %3548 = vmatpush2.msra.mxu0 %v1363
        %3549 = vmatprep.subr.mxu0 %v1362
        %3550 = vmatpush2.msra.mxu0 %v1361
        %3551 = vmatprep.mubr.f32.mxu0 %v398
        %3552 = vmatmul.mubr.f32.gmra.mxu0 %v397
        %v3553 = vpop.f32.mrf.mxu0
        %v3554 = vadd.f32 %v3483, %v3553
        %v3555 = vpop.f32.mrf.mxu0
        %v3556 = vadd.f32 %v3485, %v3555
        %3557 = vdwg.mxu0
        %3558 = vmatprep.subr.mxu0 %v1424
        %3559 = vmatpush1.msra.mxu0 %v1423
        %3560 = vmatprep.subr.mxu0 %v1422
        %3561 = vmatpush1.msra.mxu0 %v1421
        %3562 = vmatprep.subr.mxu0 %v1420
        %3563 = vmatpush1.msra.mxu0 %v1419
        %3564 = vmatprep.subr.mxu0 %v1418
        %3565 = vmatpush1.msra.mxu0 %v1417
        %3566 = vmatprep.subr.mxu0 %v1416
        %3567 = vmatpush1.msra.mxu0 %v1415
        %3568 = vmatprep.subr.mxu0 %v1414
        %3569 = vmatpush1.msra.mxu0 %v1413
        %3570 = vmatprep.subr.mxu0 %v1412
        %3571 = vmatpush1.msra.mxu0 %v1411
        %3572 = vmatprep.subr.mxu0 %v1410
        %3573 = vmatpush1.msra.mxu0 %v1409
        %3574 = vmatprep.subr.mxu0 %v1408
        %3575 = vmatpush1.msra.mxu0 %v1407
        %3576 = vmatprep.subr.mxu0 %v1406
        %3577 = vmatpush1.msra.mxu0 %v1405
        %3578 = vmatprep.subr.mxu0 %v1404
        %3579 = vmatpush1.msra.mxu0 %v1403
        %3580 = vmatprep.subr.mxu0 %v1402
        %3581 = vmatpush1.msra.mxu0 %v1401
        %3582 = vmatprep.subr.mxu0 %v1400
        %3583 = vmatpush1.msra.mxu0 %v1399
        %3584 = vmatprep.subr.mxu0 %v1398
        %3585 = vmatpush1.msra.mxu0 %v1397
        %3586 = vmatprep.subr.mxu0 %v1396
        %3587 = vmatpush1.msra.mxu0 %v1395
        %3588 = vmatprep.subr.mxu0 %v1394
        %3589 = vmatpush1.msra.mxu0 %v1393
        %3590 = vmatprep.subr.mxu0 %v1456
        %3591 = vmatpush2.msra.mxu0 %v1455
        %3592 = vmatprep.subr.mxu0 %v1454
        %3593 = vmatpush2.msra.mxu0 %v1453
        %3594 = vmatprep.subr.mxu0 %v1452
        %3595 = vmatpush2.msra.mxu0 %v1451
        %3596 = vmatprep.subr.mxu0 %v1450
        %3597 = vmatpush2.msra.mxu0 %v1449
        %3598 = vmatprep.subr.mxu0 %v1448
        %3599 = vmatpush2.msra.mxu0 %v1447
        %3600 = vmatprep.subr.mxu0 %v1446
        %3601 = vmatpush2.msra.mxu0 %v1445
        %3602 = vmatprep.subr.mxu0 %v1444
        %3603 = vmatpush2.msra.mxu0 %v1443
        %3604 = vmatprep.subr.mxu0 %v1442
        %3605 = vmatpush2.msra.mxu0 %v1441
        %3606 = vmatprep.subr.mxu0 %v1440
        %3607 = vmatpush2.msra.mxu0 %v1439
        %3608 = vmatprep.subr.mxu0 %v1438
        %3609 = vmatpush2.msra.mxu0 %v1437
        %3610 = vmatprep.subr.mxu0 %v1436
        %3611 = vmatpush2.msra.mxu0 %v1435
        %3612 = vmatprep.subr.mxu0 %v1434
        %3613 = vmatpush2.msra.mxu0 %v1433
        %3614 = vmatprep.subr.mxu0 %v1432
        %3615 = vmatpush2.msra.mxu0 %v1431
        %3616 = vmatprep.subr.mxu0 %v1430
        %3617 = vmatpush2.msra.mxu0 %v1429
        %3618 = vmatprep.subr.mxu0 %v1428
        %3619 = vmatpush2.msra.mxu0 %v1427
        %3620 = vmatprep.subr.mxu0 %v1426
        %3621 = vmatpush2.msra.mxu0 %v1425
        %3622 = vmatprep.mubr.f32.mxu0 %v400
        %3623 = vmatmul.mubr.f32.gmra.mxu0 %v399
        %v3624 = vpop.f32.mrf.mxu0
        %v3625 = vadd.f32 %v3554, %v3624
        %v3626 = vpop.f32.mrf.mxu0
        %v3627 = vadd.f32 %v3556, %v3626
        %3628 = vdwg.mxu0
        %3629 = vmatprep.subr.mxu0 %v1488
        %3630 = vmatpush1.msra.mxu0 %v1487
        %3631 = vmatprep.subr.mxu0 %v1486
        %3632 = vmatpush1.msra.mxu0 %v1485
        %3633 = vmatprep.subr.mxu0 %v1484
        %3634 = vmatpush1.msra.mxu0 %v1483
        %3635 = vmatprep.subr.mxu0 %v1482
        %3636 = vmatpush1.msra.mxu0 %v1481
        %3637 = vmatprep.subr.mxu0 %v1480
        %3638 = vmatpush1.msra.mxu0 %v1479
        %3639 = vmatprep.subr.mxu0 %v1478
        %3640 = vmatpush1.msra.mxu0 %v1477
        %3641 = vmatprep.subr.mxu0 %v1476
        %3642 = vmatpush1.msra.mxu0 %v1475
        %3643 = vmatprep.subr.mxu0 %v1474
        %3644 = vmatpush1.msra.mxu0 %v1473
        %3645 = vmatprep.subr.mxu0 %v1472
        %3646 = vmatpush1.msra.mxu0 %v1471
        %3647 = vmatprep.subr.mxu0 %v1470
        %3648 = vmatpush1.msra.mxu0 %v1469
        %3649 = vmatprep.subr.mxu0 %v1468
        %3650 = vmatpush1.msra.mxu0 %v1467
        %3651 = vmatprep.subr.mxu0 %v1466
        %3652 = vmatpush1.msra.mxu0 %v1465
        %3653 = vmatprep.subr.mxu0 %v1464
        %3654 = vmatpush1.msra.mxu0 %v1463
        %3655 = vmatprep.subr.mxu0 %v1462
        %3656 = vmatpush1.msra.mxu0 %v1461
        %3657 = vmatprep.subr.mxu0 %v1460
        %3658 = vmatpush1.msra.mxu0 %v1459
        %3659 = vmatprep.subr.mxu0 %v1458
        %3660 = vmatpush1.msra.mxu0 %v1457
        %3661 = vmatprep.subr.mxu0 %v1520
        %3662 = vmatpush2.msra.mxu0 %v1519
        %3663 = vmatprep.subr.mxu0 %v1518
        %3664 = vmatpush2.msra.mxu0 %v1517
        %3665 = vmatprep.subr.mxu0 %v1516
        %3666 = vmatpush2.msra.mxu0 %v1515
        %3667 = vmatprep.subr.mxu0 %v1514
        %3668 = vmatpush2.msra.mxu0 %v1513
        %3669 = vmatprep.subr.mxu0 %v1512
        %3670 = vmatpush2.msra.mxu0 %v1511
        %3671 = vmatprep.subr.mxu0 %v1510
        %3672 = vmatpush2.msra.mxu0 %v1509
        %3673 = vmatprep.subr.mxu0 %v1508
        %3674 = vmatpush2.msra.mxu0 %v1507
        %3675 = vmatprep.subr.mxu0 %v1506
        %3676 = vmatpush2.msra.mxu0 %v1505
        %3677 = vmatprep.subr.mxu0 %v1504
        %3678 = vmatpush2.msra.mxu0 %v1503
        %3679 = vmatprep.subr.mxu0 %v1502
        %3680 = vmatpush2.msra.mxu0 %v1501
        %3681 = vmatprep.subr.mxu0 %v1500
        %3682 = vmatpush2.msra.mxu0 %v1499
        %3683 = vmatprep.subr.mxu0 %v1498
        %3684 = vmatpush2.msra.mxu0 %v1497
        %3685 = vmatprep.subr.mxu0 %v1496
        %3686 = vmatpush2.msra.mxu0 %v1495
        %3687 = vmatprep.subr.mxu0 %v1494
        %3688 = vmatpush2.msra.mxu0 %v1493
        %3689 = vmatprep.subr.mxu0 %v1492
        %3690 = vmatpush2.msra.mxu0 %v1491
        %3691 = vmatprep.subr.mxu0 %v1490
        %3692 = vmatpush2.msra.mxu0 %v1489
        %3693 = vmatprep.mubr.f32.mxu0 %v402
        %3694 = vmatmul.mubr.f32.gmra.mxu0 %v401
        %v3695 = vpop.f32.mrf.mxu0
        %v3696 = vadd.f32 %v3625, %v3695
        %v3697 = vpop.f32.mrf.mxu0
        %v3698 = vadd.f32 %v3627, %v3697
        %3699 = vdwg.mxu0
        %3700 = vmatprep.subr.mxu0 %v1552
        %3701 = vmatpush1.msra.mxu0 %v1551
        %3702 = vmatprep.subr.mxu0 %v1550
        %3703 = vmatpush1.msra.mxu0 %v1549
        %3704 = vmatprep.subr.mxu0 %v1548
        %3705 = vmatpush1.msra.mxu0 %v1547
        %3706 = vmatprep.subr.mxu0 %v1546
        %3707 = vmatpush1.msra.mxu0 %v1545
        %3708 = vmatprep.subr.mxu0 %v1544
        %3709 = vmatpush1.msra.mxu0 %v1543
        %3710 = vmatprep.subr.mxu0 %v1542
        %3711 = vmatpush1.msra.mxu0 %v1541
        %3712 = vmatprep.subr.mxu0 %v1540
        %3713 = vmatpush1.msra.mxu0 %v1539
        %3714 = vmatprep.subr.mxu0 %v1538
        %3715 = vmatpush1.msra.mxu0 %v1537
        %3716 = vmatprep.subr.mxu0 %v1536
        %3717 = vmatpush1.msra.mxu0 %v1535
        %3718 = vmatprep.subr.mxu0 %v1534
        %3719 = vmatpush1.msra.mxu0 %v1533
        %3720 = vmatprep.subr.mxu0 %v1532
        %3721 = vmatpush1.msra.mxu0 %v1531
        %3722 = vmatprep.subr.mxu0 %v1530
        %3723 = vmatpush1.msra.mxu0 %v1529
        %3724 = vmatprep.subr.mxu0 %v1528
        %3725 = vmatpush1.msra.mxu0 %v1527
        %3726 = vmatprep.subr.mxu0 %v1526
        %3727 = vmatpush1.msra.mxu0 %v1525
        %3728 = vmatprep.subr.mxu0 %v1524
        %3729 = vmatpush1.msra.mxu0 %v1523
        %3730 = vmatprep.subr.mxu0 %v1522
        %3731 = vmatpush1.msra.mxu0 %v1521
        %3732 = vmatprep.subr.mxu0 %v1584
        %3733 = vmatpush2.msra.mxu0 %v1583
        %3734 = vmatprep.subr.mxu0 %v1582
        %3735 = vmatpush2.msra.mxu0 %v1581
        %3736 = vmatprep.subr.mxu0 %v1580
        %3737 = vmatpush2.msra.mxu0 %v1579
        %3738 = vmatprep.subr.mxu0 %v1578
        %3739 = vmatpush2.msra.mxu0 %v1577
        %3740 = vmatprep.subr.mxu0 %v1576
        %3741 = vmatpush2.msra.mxu0 %v1575
        %3742 = vmatprep.subr.mxu0 %v1574
        %3743 = vmatpush2.msra.mxu0 %v1573
        %3744 = vmatprep.subr.mxu0 %v1572
        %3745 = vmatpush2.msra.mxu0 %v1571
        %3746 = vmatprep.subr.mxu0 %v1570
        %3747 = vmatpush2.msra.mxu0 %v1569
        %3748 = vmatprep.subr.mxu0 %v1568
        %3749 = vmatpush2.msra.mxu0 %v1567
        %3750 = vmatprep.subr.mxu0 %v1566
        %3751 = vmatpush2.msra.mxu0 %v1565
        %3752 = vmatprep.subr.mxu0 %v1564
        %3753 = vmatpush2.msra.mxu0 %v1563
        %3754 = vmatprep.subr.mxu0 %v1562
        %3755 = vmatpush2.msra.mxu0 %v1561
        %3756 = vmatprep.subr.mxu0 %v1560
        %3757 = vmatpush2.msra.mxu0 %v1559
        %3758 = vmatprep.subr.mxu0 %v1558
        %3759 = vmatpush2.msra.mxu0 %v1557
        %3760 = vmatprep.subr.mxu0 %v1556
        %3761 = vmatpush2.msra.mxu0 %v1555
        %3762 = vmatprep.subr.mxu0 %v1554
        %3763 = vmatpush2.msra.mxu0 %v1553
        %3764 = vmatprep.mubr.f32.mxu0 %v404
        %3765 = vmatmul.mubr.f32.gmra.mxu0 %v403
        %v3766 = vpop.f32.mrf.mxu0
        %v3767 = vadd.f32 %v3696, %v3766
        %v3768 = vpop.f32.mrf.mxu0
        %v3769 = vadd.f32 %v3698, %v3768
        %3770 = vdwg.mxu0
        %3771 = vmatprep.subr.mxu0 %v1616
        %3772 = vmatpush1.msra.mxu0 %v1615
        %3773 = vmatprep.subr.mxu0 %v1614
        %3774 = vmatpush1.msra.mxu0 %v1613
        %3775 = vmatprep.subr.mxu0 %v1612
        %3776 = vmatpush1.msra.mxu0 %v1611
        %3777 = vmatprep.subr.mxu0 %v1610
        %3778 = vmatpush1.msra.mxu0 %v1609
        %3779 = vmatprep.subr.mxu0 %v1608
        %3780 = vmatpush1.msra.mxu0 %v1607
        %3781 = vmatprep.subr.mxu0 %v1606
        %3782 = vmatpush1.msra.mxu0 %v1605
        %3783 = vmatprep.subr.mxu0 %v1604
        %3784 = vmatpush1.msra.mxu0 %v1603
        %3785 = vmatprep.subr.mxu0 %v1602
        %3786 = vmatpush1.msra.mxu0 %v1601
        %3787 = vmatprep.subr.mxu0 %v1600
        %3788 = vmatpush1.msra.mxu0 %v1599
        %3789 = vmatprep.subr.mxu0 %v1598
        %3790 = vmatpush1.msra.mxu0 %v1597
        %3791 = vmatprep.subr.mxu0 %v1596
        %3792 = vmatpush1.msra.mxu0 %v1595
        %3793 = vmatprep.subr.mxu0 %v1594
        %3794 = vmatpush1.msra.mxu0 %v1593
        %3795 = vmatprep.subr.mxu0 %v1592
        %3796 = vmatpush1.msra.mxu0 %v1591
        %3797 = vmatprep.subr.mxu0 %v1590
        %3798 = vmatpush1.msra.mxu0 %v1589
        %3799 = vmatprep.subr.mxu0 %v1588
        %3800 = vmatpush1.msra.mxu0 %v1587
        %3801 = vmatprep.subr.mxu0 %v1586
        %3802 = vmatpush1.msra.mxu0 %v1585
        %3803 = vmatprep.subr.mxu0 %v1648
        %3804 = vmatpush2.msra.mxu0 %v1647
        %3805 = vmatprep.subr.mxu0 %v1646
        %3806 = vmatpush2.msra.mxu0 %v1645
        %3807 = vmatprep.subr.mxu0 %v1644
        %3808 = vmatpush2.msra.mxu0 %v1643
        %3809 = vmatprep.subr.mxu0 %v1642
        %3810 = vmatpush2.msra.mxu0 %v1641
        %3811 = vmatprep.subr.mxu0 %v1640
        %3812 = vmatpush2.msra.mxu0 %v1639
        %3813 = vmatprep.subr.mxu0 %v1638
        %3814 = vmatpush2.msra.mxu0 %v1637
        %3815 = vmatprep.subr.mxu0 %v1636
        %3816 = vmatpush2.msra.mxu0 %v1635
        %3817 = vmatprep.subr.mxu0 %v1634
        %3818 = vmatpush2.msra.mxu0 %v1633
        %3819 = vmatprep.subr.mxu0 %v1632
        %3820 = vmatpush2.msra.mxu0 %v1631
        %3821 = vmatprep.subr.mxu0 %v1630
        %3822 = vmatpush2.msra.mxu0 %v1629
        %3823 = vmatprep.subr.mxu0 %v1628
        %3824 = vmatpush2.msra.mxu0 %v1627
        %3825 = vmatprep.subr.mxu0 %v1626
        %3826 = vmatpush2.msra.mxu0 %v1625
        %3827 = vmatprep.subr.mxu0 %v1624
        %3828 = vmatpush2.msra.mxu0 %v1623
        %3829 = vmatprep.subr.mxu0 %v1622
        %3830 = vmatpush2.msra.mxu0 %v1621
        %3831 = vmatprep.subr.mxu0 %v1620
        %3832 = vmatpush2.msra.mxu0 %v1619
        %3833 = vmatprep.subr.mxu0 %v1618
        %3834 = vmatpush2.msra.mxu0 %v1617
        %3835 = vmatprep.mubr.f32.mxu0 %v406
        %3836 = vmatmul.mubr.f32.gmra.mxu0 %v405
        %v3837 = vpop.f32.mrf.mxu0
        %v3838 = vadd.f32 %v3767, %v3837
        %v3839 = vpop.f32.mrf.mxu0
        %v3840 = vadd.f32 %v3769, %v3839
        %3841 = vdwg.mxu0
        %3842 = vmatprep.subr.mxu0 %v1680
        %3843 = vmatpush1.msra.mxu0 %v1679
        %3844 = vmatprep.subr.mxu0 %v1678
        %3845 = vmatpush1.msra.mxu0 %v1677
        %3846 = vmatprep.subr.mxu0 %v1676
        %3847 = vmatpush1.msra.mxu0 %v1675
        %3848 = vmatprep.subr.mxu0 %v1674
        %3849 = vmatpush1.msra.mxu0 %v1673
        %3850 = vmatprep.subr.mxu0 %v1672
        %3851 = vmatpush1.msra.mxu0 %v1671
        %3852 = vmatprep.subr.mxu0 %v1670
        %3853 = vmatpush1.msra.mxu0 %v1669
        %3854 = vmatprep.subr.mxu0 %v1668
        %3855 = vmatpush1.msra.mxu0 %v1667
        %3856 = vmatprep.subr.mxu0 %v1666
        %3857 = vmatpush1.msra.mxu0 %v1665
        %3858 = vmatprep.subr.mxu0 %v1664
        %3859 = vmatpush1.msra.mxu0 %v1663
        %3860 = vmatprep.subr.mxu0 %v1662
        %3861 = vmatpush1.msra.mxu0 %v1661
        %3862 = vmatprep.subr.mxu0 %v1660
        %3863 = vmatpush1.msra.mxu0 %v1659
        %3864 = vmatprep.subr.mxu0 %v1658
        %3865 = vmatpush1.msra.mxu0 %v1657
        %3866 = vmatprep.subr.mxu0 %v1656
        %3867 = vmatpush1.msra.mxu0 %v1655
        %3868 = vmatprep.subr.mxu0 %v1654
        %3869 = vmatpush1.msra.mxu0 %v1653
        %3870 = vmatprep.subr.mxu0 %v1652
        %3871 = vmatpush1.msra.mxu0 %v1651
        %3872 = vmatprep.subr.mxu0 %v1650
        %3873 = vmatpush1.msra.mxu0 %v1649
        %3874 = vmatprep.subr.mxu0 %v1712
        %3875 = vmatpush2.msra.mxu0 %v1711
        %3876 = vmatprep.subr.mxu0 %v1710
        %3877 = vmatpush2.msra.mxu0 %v1709
        %3878 = vmatprep.subr.mxu0 %v1708
        %3879 = vmatpush2.msra.mxu0 %v1707
        %3880 = vmatprep.subr.mxu0 %v1706
        %3881 = vmatpush2.msra.mxu0 %v1705
        %3882 = vmatprep.subr.mxu0 %v1704
        %3883 = vmatpush2.msra.mxu0 %v1703
        %3884 = vmatprep.subr.mxu0 %v1702
        %3885 = vmatpush2.msra.mxu0 %v1701
        %3886 = vmatprep.subr.mxu0 %v1700
        %3887 = vmatpush2.msra.mxu0 %v1699
        %3888 = vmatprep.subr.mxu0 %v1698
        %3889 = vmatpush2.msra.mxu0 %v1697
        %3890 = vmatprep.subr.mxu0 %v1696
        %3891 = vmatpush2.msra.mxu0 %v1695
        %3892 = vmatprep.subr.mxu0 %v1694
        %3893 = vmatpush2.msra.mxu0 %v1693
        %3894 = vmatprep.subr.mxu0 %v1692
        %3895 = vmatpush2.msra.mxu0 %v1691
        %3896 = vmatprep.subr.mxu0 %v1690
        %3897 = vmatpush2.msra.mxu0 %v1689
        %3898 = vmatprep.subr.mxu0 %v1688
        %3899 = vmatpush2.msra.mxu0 %v1687
        %3900 = vmatprep.subr.mxu0 %v1686
        %3901 = vmatpush2.msra.mxu0 %v1685
        %3902 = vmatprep.subr.mxu0 %v1684
        %3903 = vmatpush2.msra.mxu0 %v1683
        %3904 = vmatprep.subr.mxu0 %v1682
        %3905 = vmatpush2.msra.mxu0 %v1681
        %3906 = vmatprep.mubr.f32.mxu0 %v408
        %3907 = vmatmul.mubr.f32.gmra.mxu0 %v407
        %v3908 = vpop.f32.mrf.mxu0
        %v3909 = vadd.f32 %v3838, %v3908
        %v3910 = vpop.f32.mrf.mxu0
        %v3911 = vadd.f32 %v3840, %v3910
        %3912 = vdwg.mxu0
        %3913 = vmatprep.subr.mxu0 %v1744
        %3914 = vmatpush1.msra.mxu0 %v1743
        %3915 = vmatprep.subr.mxu0 %v1742
        %3916 = vmatpush1.msra.mxu0 %v1741
        %3917 = vmatprep.subr.mxu0 %v1740
        %3918 = vmatpush1.msra.mxu0 %v1739
        %3919 = vmatprep.subr.mxu0 %v1738
        %3920 = vmatpush1.msra.mxu0 %v1737
        %3921 = vmatprep.subr.mxu0 %v1736
        %3922 = vmatpush1.msra.mxu0 %v1735
        %3923 = vmatprep.subr.mxu0 %v1734
        %3924 = vmatpush1.msra.mxu0 %v1733
        %3925 = vmatprep.subr.mxu0 %v1732
        %3926 = vmatpush1.msra.mxu0 %v1731
        %3927 = vmatprep.subr.mxu0 %v1730
        %3928 = vmatpush1.msra.mxu0 %v1729
        %3929 = vmatprep.subr.mxu0 %v1728
        %3930 = vmatpush1.msra.mxu0 %v1727
        %3931 = vmatprep.subr.mxu0 %v1726
        %3932 = vmatpush1.msra.mxu0 %v1725
        %3933 = vmatprep.subr.mxu0 %v1724
        %3934 = vmatpush1.msra.mxu0 %v1723
        %3935 = vmatprep.subr.mxu0 %v1722
        %3936 = vmatpush1.msra.mxu0 %v1721
        %3937 = vmatprep.subr.mxu0 %v1720
        %3938 = vmatpush1.msra.mxu0 %v1719
        %3939 = vmatprep.subr.mxu0 %v1718
        %3940 = vmatpush1.msra.mxu0 %v1717
        %3941 = vmatprep.subr.mxu0 %v1716
        %3942 = vmatpush1.msra.mxu0 %v1715
        %3943 = vmatprep.subr.mxu0 %v1714
        %3944 = vmatpush1.msra.mxu0 %v1713
        %3945 = vmatprep.subr.mxu0 %v1776
        %3946 = vmatpush2.msra.mxu0 %v1775
        %3947 = vmatprep.subr.mxu0 %v1774
        %3948 = vmatpush2.msra.mxu0 %v1773
        %3949 = vmatprep.subr.mxu0 %v1772
        %3950 = vmatpush2.msra.mxu0 %v1771
        %3951 = vmatprep.subr.mxu0 %v1770
        %3952 = vmatpush2.msra.mxu0 %v1769
        %3953 = vmatprep.subr.mxu0 %v1768
        %3954 = vmatpush2.msra.mxu0 %v1767
        %3955 = vmatprep.subr.mxu0 %v1766
        %3956 = vmatpush2.msra.mxu0 %v1765
        %3957 = vmatprep.subr.mxu0 %v1764
        %3958 = vmatpush2.msra.mxu0 %v1763
        %3959 = vmatprep.subr.mxu0 %v1762
        %3960 = vmatpush2.msra.mxu0 %v1761
        %3961 = vmatprep.subr.mxu0 %v1760
        %3962 = vmatpush2.msra.mxu0 %v1759
        %3963 = vmatprep.subr.mxu0 %v1758
        %3964 = vmatpush2.msra.mxu0 %v1757
        %3965 = vmatprep.subr.mxu0 %v1756
        %3966 = vmatpush2.msra.mxu0 %v1755
        %3967 = vmatprep.subr.mxu0 %v1754
        %3968 = vmatpush2.msra.mxu0 %v1753
        %3969 = vmatprep.subr.mxu0 %v1752
        %3970 = vmatpush2.msra.mxu0 %v1751
        %3971 = vmatprep.subr.mxu0 %v1750
        %3972 = vmatpush2.msra.mxu0 %v1749
        %3973 = vmatprep.subr.mxu0 %v1748
        %3974 = vmatpush2.msra.mxu0 %v1747
        %3975 = vmatprep.subr.mxu0 %v1746
        %3976 = vmatpush2.msra.mxu0 %v1745
        %3977 = vmatprep.mubr.f32.mxu0 %v410
        %3978 = vmatmul.mubr.f32.gmra.mxu0 %v409
        %v3979 = vpop.f32.mrf.mxu0
        %v3980 = vadd.f32 %v3909, %v3979
        %v3981 = vpop.f32.mrf.mxu0
        %v3982 = vadd.f32 %v3911, %v3981
        %3983 = vdwg.mxu0
        %3984 = vmatprep.subr.mxu0 %v1808
        %3985 = vmatpush1.msra.mxu0 %v1807
        %3986 = vmatprep.subr.mxu0 %v1806
        %3987 = vmatpush1.msra.mxu0 %v1805
        %3988 = vmatprep.subr.mxu0 %v1804
        %3989 = vmatpush1.msra.mxu0 %v1803
        %3990 = vmatprep.subr.mxu0 %v1802
        %3991 = vmatpush1.msra.mxu0 %v1801
        %3992 = vmatprep.subr.mxu0 %v1800
        %3993 = vmatpush1.msra.mxu0 %v1799
        %3994 = vmatprep.subr.mxu0 %v1798
        %3995 = vmatpush1.msra.mxu0 %v1797
        %3996 = vmatprep.subr.mxu0 %v1796
        %3997 = vmatpush1.msra.mxu0 %v1795
        %3998 = vmatprep.subr.mxu0 %v1794
        %3999 = vmatpush1.msra.mxu0 %v1793
        %4000 = vmatprep.subr.mxu0 %v1792
        %4001 = vmatpush1.msra.mxu0 %v1791
        %4002 = vmatprep.subr.mxu0 %v1790
        %4003 = vmatpush1.msra.mxu0 %v1789
        %4004 = vmatprep.subr.mxu0 %v1788
        %4005 = vmatpush1.msra.mxu0 %v1787
        %4006 = vmatprep.subr.mxu0 %v1786
        %4007 = vmatpush1.msra.mxu0 %v1785
        %4008 = vmatprep.subr.mxu0 %v1784
        %4009 = vmatpush1.msra.mxu0 %v1783
        %4010 = vmatprep.subr.mxu0 %v1782
        %4011 = vmatpush1.msra.mxu0 %v1781
        %4012 = vmatprep.subr.mxu0 %v1780
        %4013 = vmatpush1.msra.mxu0 %v1779
        %4014 = vmatprep.subr.mxu0 %v1778
        %4015 = vmatpush1.msra.mxu0 %v1777
        %4016 = vmatprep.subr.mxu0 %v1840
        %4017 = vmatpush2.msra.mxu0 %v1839
        %4018 = vmatprep.subr.mxu0 %v1838
        %4019 = vmatpush2.msra.mxu0 %v1837
        %4020 = vmatprep.subr.mxu0 %v1836
        %4021 = vmatpush2.msra.mxu0 %v1835
        %4022 = vmatprep.subr.mxu0 %v1834
        %4023 = vmatpush2.msra.mxu0 %v1833
        %4024 = vmatprep.subr.mxu0 %v1832
        %4025 = vmatpush2.msra.mxu0 %v1831
        %4026 = vmatprep.subr.mxu0 %v1830
        %4027 = vmatpush2.msra.mxu0 %v1829
        %4028 = vmatprep.subr.mxu0 %v1828
        %4029 = vmatpush2.msra.mxu0 %v1827
        %4030 = vmatprep.subr.mxu0 %v1826
        %4031 = vmatpush2.msra.mxu0 %v1825
        %4032 = vmatprep.subr.mxu0 %v1824
        %4033 = vmatpush2.msra.mxu0 %v1823
        %4034 = vmatprep.subr.mxu0 %v1822
        %4035 = vmatpush2.msra.mxu0 %v1821
        %4036 = vmatprep.subr.mxu0 %v1820
        %4037 = vmatpush2.msra.mxu0 %v1819
        %4038 = vmatprep.subr.mxu0 %v1818
        %4039 = vmatpush2.msra.mxu0 %v1817
        %4040 = vmatprep.subr.mxu0 %v1816
        %4041 = vmatpush2.msra.mxu0 %v1815
        %4042 = vmatprep.subr.mxu0 %v1814
        %4043 = vmatpush2.msra.mxu0 %v1813
        %4044 = vmatprep.subr.mxu0 %v1812
        %4045 = vmatpush2.msra.mxu0 %v1811
        %4046 = vmatprep.subr.mxu0 %v1810
        %4047 = vmatpush2.msra.mxu0 %v1809
        %4048 = vmatprep.mubr.f32.mxu0 %v412
        %4049 = vmatmul.mubr.f32.gmra.mxu0 %v411
        %v4050 = vpop.f32.mrf.mxu0
        %v4051 = vadd.f32 %v3980, %v4050
        %v4052 = vpop.f32.mrf.mxu0
        %v4053 = vadd.f32 %v3982, %v4052
        %4054 = vdwg.mxu0
        %4055 = vmatprep.subr.mxu0 %v1872
        %4056 = vmatpush1.msra.mxu0 %v1871
        %4057 = vmatprep.subr.mxu0 %v1870
        %4058 = vmatpush1.msra.mxu0 %v1869
        %4059 = vmatprep.subr.mxu0 %v1868
        %4060 = vmatpush1.msra.mxu0 %v1867
        %4061 = vmatprep.subr.mxu0 %v1866
        %4062 = vmatpush1.msra.mxu0 %v1865
        %4063 = vmatprep.subr.mxu0 %v1864
        %4064 = vmatpush1.msra.mxu0 %v1863
        %4065 = vmatprep.subr.mxu0 %v1862
        %4066 = vmatpush1.msra.mxu0 %v1861
        %4067 = vmatprep.subr.mxu0 %v1860
        %4068 = vmatpush1.msra.mxu0 %v1859
        %4069 = vmatprep.subr.mxu0 %v1858
        %4070 = vmatpush1.msra.mxu0 %v1857
        %4071 = vmatprep.subr.mxu0 %v1856
        %4072 = vmatpush1.msra.mxu0 %v1855
        %4073 = vmatprep.subr.mxu0 %v1854
        %4074 = vmatpush1.msra.mxu0 %v1853
        %4075 = vmatprep.subr.mxu0 %v1852
        %4076 = vmatpush1.msra.mxu0 %v1851
        %4077 = vmatprep.subr.mxu0 %v1850
        %4078 = vmatpush1.msra.mxu0 %v1849
        %4079 = vmatprep.subr.mxu0 %v1848
        %4080 = vmatpush1.msra.mxu0 %v1847
        %4081 = vmatprep.subr.mxu0 %v1846
        %4082 = vmatpush1.msra.mxu0 %v1845
        %4083 = vmatprep.subr.mxu0 %v1844
        %4084 = vmatpush1.msra.mxu0 %v1843
        %4085 = vmatprep.subr.mxu0 %v1842
        %4086 = vmatpush1.msra.mxu0 %v1841
        %4087 = vmatprep.subr.mxu0 %v1904
        %4088 = vmatpush2.msra.mxu0 %v1903
        %4089 = vmatprep.subr.mxu0 %v1902
        %4090 = vmatpush2.msra.mxu0 %v1901
        %4091 = vmatprep.subr.mxu0 %v1900
        %4092 = vmatpush2.msra.mxu0 %v1899
        %4093 = vmatprep.subr.mxu0 %v1898
        %4094 = vmatpush2.msra.mxu0 %v1897
        %4095 = vmatprep.subr.mxu0 %v1896
        %4096 = vmatpush2.msra.mxu0 %v1895
        %4097 = vmatprep.subr.mxu0 %v1894
        %4098 = vmatpush2.msra.mxu0 %v1893
        %4099 = vmatprep.subr.mxu0 %v1892
        %4100 = vmatpush2.msra.mxu0 %v1891
        %4101 = vmatprep.subr.mxu0 %v1890
        %4102 = vmatpush2.msra.mxu0 %v1889
        %4103 = vmatprep.subr.mxu0 %v1888
        %4104 = vmatpush2.msra.mxu0 %v1887
        %4105 = vmatprep.subr.mxu0 %v1886
        %4106 = vmatpush2.msra.mxu0 %v1885
        %4107 = vmatprep.subr.mxu0 %v1884
        %4108 = vmatpush2.msra.mxu0 %v1883
        %4109 = vmatprep.subr.mxu0 %v1882
        %4110 = vmatpush2.msra.mxu0 %v1881
        %4111 = vmatprep.subr.mxu0 %v1880
        %4112 = vmatpush2.msra.mxu0 %v1879
        %4113 = vmatprep.subr.mxu0 %v1878
        %4114 = vmatpush2.msra.mxu0 %v1877
        %4115 = vmatprep.subr.mxu0 %v1876
        %4116 = vmatpush2.msra.mxu0 %v1875
        %4117 = vmatprep.subr.mxu0 %v1874
        %4118 = vmatpush2.msra.mxu0 %v1873
        %4119 = vmatprep.mubr.f32.mxu0 %v414
        %4120 = vmatmul.mubr.f32.gmra.mxu0 %v413
        %v4121 = vpop.f32.mrf.mxu0
        %v4122 = vadd.f32 %v4051, %v4121
        %v4123 = vpop.f32.mrf.mxu0
        %v4124 = vadd.f32 %v4053, %v4123
        %4125 = vdwg.mxu0
        %4126 = vmatprep.subr.mxu0 %v1936
        %4127 = vmatpush1.msra.mxu0 %v1935
        %4128 = vmatprep.subr.mxu0 %v1934
        %4129 = vmatpush1.msra.mxu0 %v1933
        %4130 = vmatprep.subr.mxu0 %v1932
        %4131 = vmatpush1.msra.mxu0 %v1931
        %4132 = vmatprep.subr.mxu0 %v1930
        %4133 = vmatpush1.msra.mxu0 %v1929
        %4134 = vmatprep.subr.mxu0 %v1928
        %4135 = vmatpush1.msra.mxu0 %v1927
        %4136 = vmatprep.subr.mxu0 %v1926
        %4137 = vmatpush1.msra.mxu0 %v1925
        %4138 = vmatprep.subr.mxu0 %v1924
        %4139 = vmatpush1.msra.mxu0 %v1923
        %4140 = vmatprep.subr.mxu0 %v1922
        %4141 = vmatpush1.msra.mxu0 %v1921
        %4142 = vmatprep.subr.mxu0 %v1920
        %4143 = vmatpush1.msra.mxu0 %v1919
        %4144 = vmatprep.subr.mxu0 %v1918
        %4145 = vmatpush1.msra.mxu0 %v1917
        %4146 = vmatprep.subr.mxu0 %v1916
        %4147 = vmatpush1.msra.mxu0 %v1915
        %4148 = vmatprep.subr.mxu0 %v1914
        %4149 = vmatpush1.msra.mxu0 %v1913
        %4150 = vmatprep.subr.mxu0 %v1912
        %4151 = vmatpush1.msra.mxu0 %v1911
        %4152 = vmatprep.subr.mxu0 %v1910
        %4153 = vmatpush1.msra.mxu0 %v1909
        %4154 = vmatprep.subr.mxu0 %v1908
        %4155 = vmatpush1.msra.mxu0 %v1907
        %4156 = vmatprep.subr.mxu0 %v1906
        %4157 = vmatpush1.msra.mxu0 %v1905
        %4158 = vmatprep.subr.mxu0 %v1968
        %4159 = vmatpush2.msra.mxu0 %v1967
        %4160 = vmatprep.subr.mxu0 %v1966
        %4161 = vmatpush2.msra.mxu0 %v1965
        %4162 = vmatprep.subr.mxu0 %v1964
        %4163 = vmatpush2.msra.mxu0 %v1963
        %4164 = vmatprep.subr.mxu0 %v1962
        %4165 = vmatpush2.msra.mxu0 %v1961
        %4166 = vmatprep.subr.mxu0 %v1960
        %4167 = vmatpush2.msra.mxu0 %v1959
        %4168 = vmatprep.subr.mxu0 %v1958
        %4169 = vmatpush2.msra.mxu0 %v1957
        %4170 = vmatprep.subr.mxu0 %v1956
        %4171 = vmatpush2.msra.mxu0 %v1955
        %4172 = vmatprep.subr.mxu0 %v1954
        %4173 = vmatpush2.msra.mxu0 %v1953
        %4174 = vmatprep.subr.mxu0 %v1952
        %4175 = vmatpush2.msra.mxu0 %v1951
        %4176 = vmatprep.subr.mxu0 %v1950
        %4177 = vmatpush2.msra.mxu0 %v1949
        %4178 = vmatprep.subr.mxu0 %v1948
        %4179 = vmatpush2.msra.mxu0 %v1947
        %4180 = vmatprep.subr.mxu0 %v1946
        %4181 = vmatpush2.msra.mxu0 %v1945
        %4182 = vmatprep.subr.mxu0 %v1944
        %4183 = vmatpush2.msra.mxu0 %v1943
        %4184 = vmatprep.subr.mxu0 %v1942
        %4185 = vmatpush2.msra.mxu0 %v1941
        %4186 = vmatprep.subr.mxu0 %v1940
        %4187 = vmatpush2.msra.mxu0 %v1939
        %4188 = vmatprep.subr.mxu0 %v1938
        %4189 = vmatpush2.msra.mxu0 %v1937
        %4190 = vmatprep.mubr.f32.mxu0 %v416
        %4191 = vmatmul.mubr.f32.gmra.mxu0 %v415
        %v4192 = vpop.f32.mrf.mxu0
        %v4193 = vadd.f32 %v4122, %v4192
        %v4194 = vpop.f32.mrf.mxu0
        %v4195 = vadd.f32 %v4124, %v4194
        %4196 = vdwg.mxu0
        %4197 = vmatprep.subr.mxu0 %v2000
        %4198 = vmatpush1.msra.mxu0 %v1999
        %4199 = vmatprep.subr.mxu0 %v1998
        %4200 = vmatpush1.msra.mxu0 %v1997
        %4201 = vmatprep.subr.mxu0 %v1996
        %4202 = vmatpush1.msra.mxu0 %v1995
        %4203 = vmatprep.subr.mxu0 %v1994
        %4204 = vmatpush1.msra.mxu0 %v1993
        %4205 = vmatprep.subr.mxu0 %v1992
        %4206 = vmatpush1.msra.mxu0 %v1991
        %4207 = vmatprep.subr.mxu0 %v1990
        %4208 = vmatpush1.msra.mxu0 %v1989
        %4209 = vmatprep.subr.mxu0 %v1988
        %4210 = vmatpush1.msra.mxu0 %v1987
        %4211 = vmatprep.subr.mxu0 %v1986
        %4212 = vmatpush1.msra.mxu0 %v1985
        %4213 = vmatprep.subr.mxu0 %v1984
        %4214 = vmatpush1.msra.mxu0 %v1983
        %4215 = vmatprep.subr.mxu0 %v1982
        %4216 = vmatpush1.msra.mxu0 %v1981
        %4217 = vmatprep.subr.mxu0 %v1980
        %4218 = vmatpush1.msra.mxu0 %v1979
        %4219 = vmatprep.subr.mxu0 %v1978
        %4220 = vmatpush1.msra.mxu0 %v1977
        %4221 = vmatprep.subr.mxu0 %v1976
        %4222 = vmatpush1.msra.mxu0 %v1975
        %4223 = vmatprep.subr.mxu0 %v1974
        %4224 = vmatpush1.msra.mxu0 %v1973
        %4225 = vmatprep.subr.mxu0 %v1972
        %4226 = vmatpush1.msra.mxu0 %v1971
        %4227 = vmatprep.subr.mxu0 %v1970
        %4228 = vmatpush1.msra.mxu0 %v1969
        %4229 = vmatprep.subr.mxu0 %v2032
        %4230 = vmatpush2.msra.mxu0 %v2031
        %4231 = vmatprep.subr.mxu0 %v2030
        %4232 = vmatpush2.msra.mxu0 %v2029
        %4233 = vmatprep.subr.mxu0 %v2028
        %4234 = vmatpush2.msra.mxu0 %v2027
        %4235 = vmatprep.subr.mxu0 %v2026
        %4236 = vmatpush2.msra.mxu0 %v2025
        %4237 = vmatprep.subr.mxu0 %v2024
        %4238 = vmatpush2.msra.mxu0 %v2023
        %4239 = vmatprep.subr.mxu0 %v2022
        %4240 = vmatpush2.msra.mxu0 %v2021
        %4241 = vmatprep.subr.mxu0 %v2020
        %4242 = vmatpush2.msra.mxu0 %v2019
        %4243 = vmatprep.subr.mxu0 %v2018
        %4244 = vmatpush2.msra.mxu0 %v2017
        %4245 = vmatprep.subr.mxu0 %v2016
        %4246 = vmatpush2.msra.mxu0 %v2015
        %4247 = vmatprep.subr.mxu0 %v2014
        %4248 = vmatpush2.msra.mxu0 %v2013
        %4249 = vmatprep.subr.mxu0 %v2012
        %4250 = vmatpush2.msra.mxu0 %v2011
        %4251 = vmatprep.subr.mxu0 %v2010
        %4252 = vmatpush2.msra.mxu0 %v2009
        %4253 = vmatprep.subr.mxu0 %v2008
        %4254 = vmatpush2.msra.mxu0 %v2007
        %4255 = vmatprep.subr.mxu0 %v2006
        %4256 = vmatpush2.msra.mxu0 %v2005
        %4257 = vmatprep.subr.mxu0 %v2004
        %4258 = vmatpush2.msra.mxu0 %v2003
        %4259 = vmatprep.subr.mxu0 %v2002
        %4260 = vmatpush2.msra.mxu0 %v2001
        %4261 = vmatprep.mubr.f32.mxu0 %v418
        %4262 = vmatmul.mubr.f32.gmra.mxu0 %v417
        %v4263 = vpop.f32.mrf.mxu0
        %v4264 = vadd.f32 %v4193, %v4263
        %v4265 = vpop.f32.mrf.mxu0
        %v4266 = vadd.f32 %v4195, %v4265
        %4267 = vdwg.mxu0
        %4268 = vmatprep.subr.mxu0 %v2064
        %4269 = vmatpush1.msra.mxu0 %v2063
        %4270 = vmatprep.subr.mxu0 %v2062
        %4271 = vmatpush1.msra.mxu0 %v2061
        %4272 = vmatprep.subr.mxu0 %v2060
        %4273 = vmatpush1.msra.mxu0 %v2059
        %4274 = vmatprep.subr.mxu0 %v2058
        %4275 = vmatpush1.msra.mxu0 %v2057
        %4276 = vmatprep.subr.mxu0 %v2056
        %4277 = vmatpush1.msra.mxu0 %v2055
        %4278 = vmatprep.subr.mxu0 %v2054
        %4279 = vmatpush1.msra.mxu0 %v2053
        %4280 = vmatprep.subr.mxu0 %v2052
        %4281 = vmatpush1.msra.mxu0 %v2051
        %4282 = vmatprep.subr.mxu0 %v2050
        %4283 = vmatpush1.msra.mxu0 %v2049
        %4284 = vmatprep.subr.mxu0 %v2048
        %4285 = vmatpush1.msra.mxu0 %v2047
        %4286 = vmatprep.subr.mxu0 %v2046
        %4287 = vmatpush1.msra.mxu0 %v2045
        %4288 = vmatprep.subr.mxu0 %v2044
        %4289 = vmatpush1.msra.mxu0 %v2043
        %4290 = vmatprep.subr.mxu0 %v2042
        %4291 = vmatpush1.msra.mxu0 %v2041
        %4292 = vmatprep.subr.mxu0 %v2040
        %4293 = vmatpush1.msra.mxu0 %v2039
        %4294 = vmatprep.subr.mxu0 %v2038
        %4295 = vmatpush1.msra.mxu0 %v2037
        %4296 = vmatprep.subr.mxu0 %v2036
        %4297 = vmatpush1.msra.mxu0 %v2035
        %4298 = vmatprep.subr.mxu0 %v2034
        %4299 = vmatpush1.msra.mxu0 %v2033
        %4300 = vmatprep.subr.mxu0 %v2096
        %4301 = vmatpush2.msra.mxu0 %v2095
        %4302 = vmatprep.subr.mxu0 %v2094
        %4303 = vmatpush2.msra.mxu0 %v2093
        %4304 = vmatprep.subr.mxu0 %v2092
        %4305 = vmatpush2.msra.mxu0 %v2091
        %4306 = vmatprep.subr.mxu0 %v2090
        %4307 = vmatpush2.msra.mxu0 %v2089
        %4308 = vmatprep.subr.mxu0 %v2088
        %4309 = vmatpush2.msra.mxu0 %v2087
        %4310 = vmatprep.subr.mxu0 %v2086
        %4311 = vmatpush2.msra.mxu0 %v2085
        %4312 = vmatprep.subr.mxu0 %v2084
        %4313 = vmatpush2.msra.mxu0 %v2083
        %4314 = vmatprep.subr.mxu0 %v2082
        %4315 = vmatpush2.msra.mxu0 %v2081
        %4316 = vmatprep.subr.mxu0 %v2080
        %4317 = vmatpush2.msra.mxu0 %v2079
        %4318 = vmatprep.subr.mxu0 %v2078
        %4319 = vmatpush2.msra.mxu0 %v2077
        %4320 = vmatprep.subr.mxu0 %v2076
        %4321 = vmatpush2.msra.mxu0 %v2075
        %4322 = vmatprep.subr.mxu0 %v2074
        %4323 = vmatpush2.msra.mxu0 %v2073
        %4324 = vmatprep.subr.mxu0 %v2072
        %4325 = vmatpush2.msra.mxu0 %v2071
        %4326 = vmatprep.subr.mxu0 %v2070
        %4327 = vmatpush2.msra.mxu0 %v2069
        %4328 = vmatprep.subr.mxu0 %v2068
        %4329 = vmatpush2.msra.mxu0 %v2067
        %4330 = vmatprep.subr.mxu0 %v2066
        %4331 = vmatpush2.msra.mxu0 %v2065
        %4332 = vmatprep.mubr.f32.mxu0 %v420
        %4333 = vmatmul.mubr.f32.gmra.mxu0 %v419
        %v4334 = vpop.f32.mrf.mxu0
        %v4335 = vadd.f32 %v4264, %v4334
        %v4336 = vpop.f32.mrf.mxu0
        %v4337 = vadd.f32 %v4266, %v4336
        %4338 = vdwg.mxu0
        %4339 = vmatprep.subr.mxu0 %v2128
        %4340 = vmatpush1.msra.mxu0 %v2127
        %4341 = vmatprep.subr.mxu0 %v2126
        %4342 = vmatpush1.msra.mxu0 %v2125
        %4343 = vmatprep.subr.mxu0 %v2124
        %4344 = vmatpush1.msra.mxu0 %v2123
        %4345 = vmatprep.subr.mxu0 %v2122
        %4346 = vmatpush1.msra.mxu0 %v2121
        %4347 = vmatprep.subr.mxu0 %v2120
        %4348 = vmatpush1.msra.mxu0 %v2119
        %4349 = vmatprep.subr.mxu0 %v2118
        %4350 = vmatpush1.msra.mxu0 %v2117
        %4351 = vmatprep.subr.mxu0 %v2116
        %4352 = vmatpush1.msra.mxu0 %v2115
        %4353 = vmatprep.subr.mxu0 %v2114
        %4354 = vmatpush1.msra.mxu0 %v2113
        %4355 = vmatprep.subr.mxu0 %v2112
        %4356 = vmatpush1.msra.mxu0 %v2111
        %4357 = vmatprep.subr.mxu0 %v2110
        %4358 = vmatpush1.msra.mxu0 %v2109
        %4359 = vmatprep.subr.mxu0 %v2108
        %4360 = vmatpush1.msra.mxu0 %v2107
        %4361 = vmatprep.subr.mxu0 %v2106
        %4362 = vmatpush1.msra.mxu0 %v2105
        %4363 = vmatprep.subr.mxu0 %v2104
        %4364 = vmatpush1.msra.mxu0 %v2103
        %4365 = vmatprep.subr.mxu0 %v2102
        %4366 = vmatpush1.msra.mxu0 %v2101
        %4367 = vmatprep.subr.mxu0 %v2100
        %4368 = vmatpush1.msra.mxu0 %v2099
        %4369 = vmatprep.subr.mxu0 %v2098
        %4370 = vmatpush1.msra.mxu0 %v2097
        %4371 = vmatprep.subr.mxu0 %v2160
        %4372 = vmatpush2.msra.mxu0 %v2159
        %4373 = vmatprep.subr.mxu0 %v2158
        %4374 = vmatpush2.msra.mxu0 %v2157
        %4375 = vmatprep.subr.mxu0 %v2156
        %4376 = vmatpush2.msra.mxu0 %v2155
        %4377 = vmatprep.subr.mxu0 %v2154
        %4378 = vmatpush2.msra.mxu0 %v2153
        %4379 = vmatprep.subr.mxu0 %v2152
        %4380 = vmatpush2.msra.mxu0 %v2151
        %4381 = vmatprep.subr.mxu0 %v2150
        %4382 = vmatpush2.msra.mxu0 %v2149
        %4383 = vmatprep.subr.mxu0 %v2148
        %4384 = vmatpush2.msra.mxu0 %v2147
        %4385 = vmatprep.subr.mxu0 %v2146
        %4386 = vmatpush2.msra.mxu0 %v2145
        %4387 = vmatprep.subr.mxu0 %v2144
        %4388 = vmatpush2.msra.mxu0 %v2143
        %4389 = vmatprep.subr.mxu0 %v2142
        %4390 = vmatpush2.msra.mxu0 %v2141
        %4391 = vmatprep.subr.mxu0 %v2140
        %4392 = vmatpush2.msra.mxu0 %v2139
        %4393 = vmatprep.subr.mxu0 %v2138
        %4394 = vmatpush2.msra.mxu0 %v2137
        %4395 = vmatprep.subr.mxu0 %v2136
        %4396 = vmatpush2.msra.mxu0 %v2135
        %4397 = vmatprep.subr.mxu0 %v2134
        %4398 = vmatpush2.msra.mxu0 %v2133
        %4399 = vmatprep.subr.mxu0 %v2132
        %4400 = vmatpush2.msra.mxu0 %v2131
        %4401 = vmatprep.subr.mxu0 %v2130
        %4402 = vmatpush2.msra.mxu0 %v2129
        %4403 = vmatprep.mubr.f32.mxu0 %v422
        %4404 = vmatmul.mubr.f32.gmra.mxu0 %v421
        %v4405 = vpop.f32.mrf.mxu0
        %v4406 = vadd.f32 %v4335, %v4405
        %v4407 = vpop.f32.mrf.mxu0
        %v4408 = vadd.f32 %v4337, %v4407
        %4409 = vdwg.mxu0
        %4410 = vmatprep.subr.mxu0 %v2192
        %4411 = vmatpush1.msra.mxu0 %v2191
        %4412 = vmatprep.subr.mxu0 %v2190
        %4413 = vmatpush1.msra.mxu0 %v2189
        %4414 = vmatprep.subr.mxu0 %v2188
        %4415 = vmatpush1.msra.mxu0 %v2187
        %4416 = vmatprep.subr.mxu0 %v2186
        %4417 = vmatpush1.msra.mxu0 %v2185
        %4418 = vmatprep.subr.mxu0 %v2184
        %4419 = vmatpush1.msra.mxu0 %v2183
        %4420 = vmatprep.subr.mxu0 %v2182
        %4421 = vmatpush1.msra.mxu0 %v2181
        %4422 = vmatprep.subr.mxu0 %v2180
        %4423 = vmatpush1.msra.mxu0 %v2179
        %4424 = vmatprep.subr.mxu0 %v2178
        %4425 = vmatpush1.msra.mxu0 %v2177
        %4426 = vmatprep.subr.mxu0 %v2176
        %4427 = vmatpush1.msra.mxu0 %v2175
        %4428 = vmatprep.subr.mxu0 %v2174
        %4429 = vmatpush1.msra.mxu0 %v2173
        %4430 = vmatprep.subr.mxu0 %v2172
        %4431 = vmatpush1.msra.mxu0 %v2171
        %4432 = vmatprep.subr.mxu0 %v2170
        %4433 = vmatpush1.msra.mxu0 %v2169
        %4434 = vmatprep.subr.mxu0 %v2168
        %4435 = vmatpush1.msra.mxu0 %v2167
        %4436 = vmatprep.subr.mxu0 %v2166
        %4437 = vmatpush1.msra.mxu0 %v2165
        %4438 = vmatprep.subr.mxu0 %v2164
        %4439 = vmatpush1.msra.mxu0 %v2163
        %4440 = vmatprep.subr.mxu0 %v2162
        %4441 = vmatpush1.msra.mxu0 %v2161
        %4442 = vmatprep.subr.mxu0 %v2224
        %4443 = vmatpush2.msra.mxu0 %v2223
        %4444 = vmatprep.subr.mxu0 %v2222
        %4445 = vmatpush2.msra.mxu0 %v2221
        %4446 = vmatprep.subr.mxu0 %v2220
        %4447 = vmatpush2.msra.mxu0 %v2219
        %4448 = vmatprep.subr.mxu0 %v2218
        %4449 = vmatpush2.msra.mxu0 %v2217
        %4450 = vmatprep.subr.mxu0 %v2216
        %4451 = vmatpush2.msra.mxu0 %v2215
        %4452 = vmatprep.subr.mxu0 %v2214
        %4453 = vmatpush2.msra.mxu0 %v2213
        %4454 = vmatprep.subr.mxu0 %v2212
        %4455 = vmatpush2.msra.mxu0 %v2211
        %4456 = vmatprep.subr.mxu0 %v2210
        %4457 = vmatpush2.msra.mxu0 %v2209
        %4458 = vmatprep.subr.mxu0 %v2208
        %4459 = vmatpush2.msra.mxu0 %v2207
        %4460 = vmatprep.subr.mxu0 %v2206
        %4461 = vmatpush2.msra.mxu0 %v2205
        %4462 = vmatprep.subr.mxu0 %v2204
        %4463 = vmatpush2.msra.mxu0 %v2203
        %4464 = vmatprep.subr.mxu0 %v2202
        %4465 = vmatpush2.msra.mxu0 %v2201
        %4466 = vmatprep.subr.mxu0 %v2200
        %4467 = vmatpush2.msra.mxu0 %v2199
        %4468 = vmatprep.subr.mxu0 %v2198
        %4469 = vmatpush2.msra.mxu0 %v2197
        %4470 = vmatprep.subr.mxu0 %v2196
        %4471 = vmatpush2.msra.mxu0 %v2195
        %4472 = vmatprep.subr.mxu0 %v2194
        %4473 = vmatpush2.msra.mxu0 %v2193
        %4474 = vmatprep.mubr.f32.mxu0 %v424
        %4475 = vmatmul.mubr.f32.gmra.mxu0 %v423
        %v4476 = vpop.f32.mrf.mxu0
        %v4477 = vadd.f32 %v4406, %v4476
        %v4478 = vpop.f32.mrf.mxu0
        %v4479 = vadd.f32 %v4408, %v4478
        %4480 = vdwg.mxu0
        %4481 = vmatprep.subr.mxu0 %v2256
        %4482 = vmatpush1.msra.mxu0 %v2255
        %4483 = vmatprep.subr.mxu0 %v2254
        %4484 = vmatpush1.msra.mxu0 %v2253
        %4485 = vmatprep.subr.mxu0 %v2252
        %4486 = vmatpush1.msra.mxu0 %v2251
        %4487 = vmatprep.subr.mxu0 %v2250
        %4488 = vmatpush1.msra.mxu0 %v2249
        %4489 = vmatprep.subr.mxu0 %v2248
        %4490 = vmatpush1.msra.mxu0 %v2247
        %4491 = vmatprep.subr.mxu0 %v2246
        %4492 = vmatpush1.msra.mxu0 %v2245
        %4493 = vmatprep.subr.mxu0 %v2244
        %4494 = vmatpush1.msra.mxu0 %v2243
        %4495 = vmatprep.subr.mxu0 %v2242
        %4496 = vmatpush1.msra.mxu0 %v2241
        %4497 = vmatprep.subr.mxu0 %v2240
        %4498 = vmatpush1.msra.mxu0 %v2239
        %4499 = vmatprep.subr.mxu0 %v2238
        %4500 = vmatpush1.msra.mxu0 %v2237
        %4501 = vmatprep.subr.mxu0 %v2236
        %4502 = vmatpush1.msra.mxu0 %v2235
        %4503 = vmatprep.subr.mxu0 %v2234
        %4504 = vmatpush1.msra.mxu0 %v2233
        %4505 = vmatprep.subr.mxu0 %v2232
        %4506 = vmatpush1.msra.mxu0 %v2231
        %4507 = vmatprep.subr.mxu0 %v2230
        %4508 = vmatpush1.msra.mxu0 %v2229
        %4509 = vmatprep.subr.mxu0 %v2228
        %4510 = vmatpush1.msra.mxu0 %v2227
        %4511 = vmatprep.subr.mxu0 %v2226
        %4512 = vmatpush1.msra.mxu0 %v2225
        %4513 = vmatprep.subr.mxu0 %v2288
        %4514 = vmatpush2.msra.mxu0 %v2287
        %4515 = vmatprep.subr.mxu0 %v2286
        %4516 = vmatpush2.msra.mxu0 %v2285
        %4517 = vmatprep.subr.mxu0 %v2284
        %4518 = vmatpush2.msra.mxu0 %v2283
        %4519 = vmatprep.subr.mxu0 %v2282
        %4520 = vmatpush2.msra.mxu0 %v2281
        %4521 = vmatprep.subr.mxu0 %v2280
        %4522 = vmatpush2.msra.mxu0 %v2279
        %4523 = vmatprep.subr.mxu0 %v2278
        %4524 = vmatpush2.msra.mxu0 %v2277
        %4525 = vmatprep.subr.mxu0 %v2276
        %4526 = vmatpush2.msra.mxu0 %v2275
        %4527 = vmatprep.subr.mxu0 %v2274
        %4528 = vmatpush2.msra.mxu0 %v2273
        %4529 = vmatprep.subr.mxu0 %v2272
        %4530 = vmatpush2.msra.mxu0 %v2271
        %4531 = vmatprep.subr.mxu0 %v2270
        %4532 = vmatpush2.msra.mxu0 %v2269
        %4533 = vmatprep.subr.mxu0 %v2268
        %4534 = vmatpush2.msra.mxu0 %v2267
        %4535 = vmatprep.subr.mxu0 %v2266
        %4536 = vmatpush2.msra.mxu0 %v2265
        %4537 = vmatprep.subr.mxu0 %v2264
        %4538 = vmatpush2.msra.mxu0 %v2263
        %4539 = vmatprep.subr.mxu0 %v2262
        %4540 = vmatpush2.msra.mxu0 %v2261
        %4541 = vmatprep.subr.mxu0 %v2260
        %4542 = vmatpush2.msra.mxu0 %v2259
        %4543 = vmatprep.subr.mxu0 %v2258
        %4544 = vmatpush2.msra.mxu0 %v2257
        %4545 = vmatprep.mubr.f32.mxu0 %v426
        %4546 = vmatmul.mubr.f32.gmra.mxu0 %v425
        %v4547 = vpop.f32.mrf.mxu0
        %v4548 = vadd.f32 %v4477, %v4547
        %v4549 = vpop.f32.mrf.mxu0
        %v4550 = vadd.f32 %v4479, %v4549
        %4551 = vdwg.mxu0
        %4552 = vmatprep.subr.mxu0 %v2320
        %4553 = vmatpush1.msra.mxu0 %v2319
        %4554 = vmatprep.subr.mxu0 %v2318
        %4555 = vmatpush1.msra.mxu0 %v2317
        %4556 = vmatprep.subr.mxu0 %v2316
        %4557 = vmatpush1.msra.mxu0 %v2315
        %4558 = vmatprep.subr.mxu0 %v2314
        %4559 = vmatpush1.msra.mxu0 %v2313
        %4560 = vmatprep.subr.mxu0 %v2312
        %4561 = vmatpush1.msra.mxu0 %v2311
        %4562 = vmatprep.subr.mxu0 %v2310
        %4563 = vmatpush1.msra.mxu0 %v2309
        %4564 = vmatprep.subr.mxu0 %v2308
        %4565 = vmatpush1.msra.mxu0 %v2307
        %4566 = vmatprep.subr.mxu0 %v2306
        %4567 = vmatpush1.msra.mxu0 %v2305
        %4568 = vmatprep.subr.mxu0 %v2304
        %4569 = vmatpush1.msra.mxu0 %v2303
        %4570 = vmatprep.subr.mxu0 %v2302
        %4571 = vmatpush1.msra.mxu0 %v2301
        %4572 = vmatprep.subr.mxu0 %v2300
        %4573 = vmatpush1.msra.mxu0 %v2299
        %4574 = vmatprep.subr.mxu0 %v2298
        %4575 = vmatpush1.msra.mxu0 %v2297
        %4576 = vmatprep.subr.mxu0 %v2296
        %4577 = vmatpush1.msra.mxu0 %v2295
        %4578 = vmatprep.subr.mxu0 %v2294
        %4579 = vmatpush1.msra.mxu0 %v2293
        %4580 = vmatprep.subr.mxu0 %v2292
        %4581 = vmatpush1.msra.mxu0 %v2291
        %4582 = vmatprep.subr.mxu0 %v2290
        %4583 = vmatpush1.msra.mxu0 %v2289
        %4584 = vmatprep.subr.mxu0 %v2352
        %4585 = vmatpush2.msra.mxu0 %v2351
        %4586 = vmatprep.subr.mxu0 %v2350
        %4587 = vmatpush2.msra.mxu0 %v2349
        %4588 = vmatprep.subr.mxu0 %v2348
        %4589 = vmatpush2.msra.mxu0 %v2347
        %4590 = vmatprep.subr.mxu0 %v2346
        %4591 = vmatpush2.msra.mxu0 %v2345
        %4592 = vmatprep.subr.mxu0 %v2344
        %4593 = vmatpush2.msra.mxu0 %v2343
        %4594 = vmatprep.subr.mxu0 %v2342
        %4595 = vmatpush2.msra.mxu0 %v2341
        %4596 = vmatprep.subr.mxu0 %v2340
        %4597 = vmatpush2.msra.mxu0 %v2339
        %4598 = vmatprep.subr.mxu0 %v2338
        %4599 = vmatpush2.msra.mxu0 %v2337
        %4600 = vmatprep.subr.mxu0 %v2336
        %4601 = vmatpush2.msra.mxu0 %v2335
        %4602 = vmatprep.subr.mxu0 %v2334
        %4603 = vmatpush2.msra.mxu0 %v2333
        %4604 = vmatprep.subr.mxu0 %v2332
        %4605 = vmatpush2.msra.mxu0 %v2331
        %4606 = vmatprep.subr.mxu0 %v2330
        %4607 = vmatpush2.msra.mxu0 %v2329
        %4608 = vmatprep.subr.mxu0 %v2328
        %4609 = vmatpush2.msra.mxu0 %v2327
        %4610 = vmatprep.subr.mxu0 %v2326
        %4611 = vmatpush2.msra.mxu0 %v2325
        %4612 = vmatprep.subr.mxu0 %v2324
        %4613 = vmatpush2.msra.mxu0 %v2323
        %4614 = vmatprep.subr.mxu0 %v2322
        %4615 = vmatpush2.msra.mxu0 %v2321
        %4616 = vmatprep.mubr.f32.mxu0 %v428
        %4617 = vmatmul.mubr.f32.gmra.mxu0 %v427
        %v4618 = vpop.f32.mrf.mxu0
        %v4619 = vadd.f32 %v4548, %v4618
        %v4620 = vpop.f32.mrf.mxu0
        %v4621 = vadd.f32 %v4550, %v4620
        %4622 = vdwg.mxu0
        %4623 = vmatprep.subr.mxu0 %v2384
        %4624 = vmatpush1.msra.mxu0 %v2383
        %4625 = vmatprep.subr.mxu0 %v2382
        %4626 = vmatpush1.msra.mxu0 %v2381
        %4627 = vmatprep.subr.mxu0 %v2380
        %4628 = vmatpush1.msra.mxu0 %v2379
        %4629 = vmatprep.subr.mxu0 %v2378
        %4630 = vmatpush1.msra.mxu0 %v2377
        %4631 = vmatprep.subr.mxu0 %v2376
        %4632 = vmatpush1.msra.mxu0 %v2375
        %4633 = vmatprep.subr.mxu0 %v2374
        %4634 = vmatpush1.msra.mxu0 %v2373
        %4635 = vmatprep.subr.mxu0 %v2372
        %4636 = vmatpush1.msra.mxu0 %v2371
        %4637 = vmatprep.subr.mxu0 %v2370
        %4638 = vmatpush1.msra.mxu0 %v2369
        %4639 = vmatprep.subr.mxu0 %v2368
        %4640 = vmatpush1.msra.mxu0 %v2367
        %4641 = vmatprep.subr.mxu0 %v2366
        %4642 = vmatpush1.msra.mxu0 %v2365
        %4643 = vmatprep.subr.mxu0 %v2364
        %4644 = vmatpush1.msra.mxu0 %v2363
        %4645 = vmatprep.subr.mxu0 %v2362
        %4646 = vmatpush1.msra.mxu0 %v2361
        %4647 = vmatprep.subr.mxu0 %v2360
        %4648 = vmatpush1.msra.mxu0 %v2359
        %4649 = vmatprep.subr.mxu0 %v2358
        %4650 = vmatpush1.msra.mxu0 %v2357
        %4651 = vmatprep.subr.mxu0 %v2356
        %4652 = vmatpush1.msra.mxu0 %v2355
        %4653 = vmatprep.subr.mxu0 %v2354
        %4654 = vmatpush1.msra.mxu0 %v2353
        %4655 = vmatprep.subr.mxu0 %v2416
        %4656 = vmatpush2.msra.mxu0 %v2415
        %4657 = vmatprep.subr.mxu0 %v2414
        %4658 = vmatpush2.msra.mxu0 %v2413
        %4659 = vmatprep.subr.mxu0 %v2412
        %4660 = vmatpush2.msra.mxu0 %v2411
        %4661 = vmatprep.subr.mxu0 %v2410
        %4662 = vmatpush2.msra.mxu0 %v2409
        %4663 = vmatprep.subr.mxu0 %v2408
        %4664 = vmatpush2.msra.mxu0 %v2407
        %4665 = vmatprep.subr.mxu0 %v2406
        %4666 = vmatpush2.msra.mxu0 %v2405
        %4667 = vmatprep.subr.mxu0 %v2404
        %4668 = vmatpush2.msra.mxu0 %v2403
        %4669 = vmatprep.subr.mxu0 %v2402
        %4670 = vmatpush2.msra.mxu0 %v2401
        %4671 = vmatprep.subr.mxu0 %v2400
        %4672 = vmatpush2.msra.mxu0 %v2399
        %4673 = vmatprep.subr.mxu0 %v2398
        %4674 = vmatpush2.msra.mxu0 %v2397
        %4675 = vmatprep.subr.mxu0 %v2396
        %4676 = vmatpush2.msra.mxu0 %v2395
        %4677 = vmatprep.subr.mxu0 %v2394
        %4678 = vmatpush2.msra.mxu0 %v2393
        %4679 = vmatprep.subr.mxu0 %v2392
        %4680 = vmatpush2.msra.mxu0 %v2391
        %4681 = vmatprep.subr.mxu0 %v2390
        %4682 = vmatpush2.msra.mxu0 %v2389
        %4683 = vmatprep.subr.mxu0 %v2388
        %4684 = vmatpush2.msra.mxu0 %v2387
        %4685 = vmatprep.subr.mxu0 %v2386
        %4686 = vmatpush2.msra.mxu0 %v2385
        %4687 = vmatprep.mubr.f32.mxu0 %v430
        %4688 = vmatmul.mubr.f32.gmra.mxu0 %v429
        %v4689 = vpop.f32.mrf.mxu0
        %v4690 = vadd.f32 %v4619, %v4689
        %v4691 = vpop.f32.mrf.mxu0
        %v4692 = vadd.f32 %v4621, %v4691
        %4693 = vdwg.mxu0
        %4694 = vmatprep.subr.mxu0 %v2448
        %4695 = vmatpush1.msra.mxu0 %v2447
        %4696 = vmatprep.subr.mxu0 %v2446
        %4697 = vmatpush1.msra.mxu0 %v2445
        %4698 = vmatprep.subr.mxu0 %v2444
        %4699 = vmatpush1.msra.mxu0 %v2443
        %4700 = vmatprep.subr.mxu0 %v2442
        %4701 = vmatpush1.msra.mxu0 %v2441
        %4702 = vmatprep.subr.mxu0 %v2440
        %4703 = vmatpush1.msra.mxu0 %v2439
        %4704 = vmatprep.subr.mxu0 %v2438
        %4705 = vmatpush1.msra.mxu0 %v2437
        %4706 = vmatprep.subr.mxu0 %v2436
        %4707 = vmatpush1.msra.mxu0 %v2435
        %4708 = vmatprep.subr.mxu0 %v2434
        %4709 = vmatpush1.msra.mxu0 %v2433
        %4710 = vmatprep.subr.mxu0 %v2432
        %4711 = vmatpush1.msra.mxu0 %v2431
        %4712 = vmatprep.subr.mxu0 %v2430
        %4713 = vmatpush1.msra.mxu0 %v2429
        %4714 = vmatprep.subr.mxu0 %v2428
        %4715 = vmatpush1.msra.mxu0 %v2427
        %4716 = vmatprep.subr.mxu0 %v2426
        %4717 = vmatpush1.msra.mxu0 %v2425
        %4718 = vmatprep.subr.mxu0 %v2424
        %4719 = vmatpush1.msra.mxu0 %v2423
        %4720 = vmatprep.subr.mxu0 %v2422
        %4721 = vmatpush1.msra.mxu0 %v2421
        %4722 = vmatprep.subr.mxu0 %v2420
        %4723 = vmatpush1.msra.mxu0 %v2419
        %4724 = vmatprep.subr.mxu0 %v2418
        %4725 = vmatpush1.msra.mxu0 %v2417
        %4726 = vmatprep.subr.mxu0 %v2480
        %4727 = vmatpush2.msra.mxu0 %v2479
        %4728 = vmatprep.subr.mxu0 %v2478
        %4729 = vmatpush2.msra.mxu0 %v2477
        %4730 = vmatprep.subr.mxu0 %v2476
        %4731 = vmatpush2.msra.mxu0 %v2475
        %4732 = vmatprep.subr.mxu0 %v2474
        %4733 = vmatpush2.msra.mxu0 %v2473
        %4734 = vmatprep.subr.mxu0 %v2472
        %4735 = vmatpush2.msra.mxu0 %v2471
        %4736 = vmatprep.subr.mxu0 %v2470
        %4737 = vmatpush2.msra.mxu0 %v2469
        %4738 = vmatprep.subr.mxu0 %v2468
        %4739 = vmatpush2.msra.mxu0 %v2467
        %4740 = vmatprep.subr.mxu0 %v2466
        %4741 = vmatpush2.msra.mxu0 %v2465
        %4742 = vmatprep.subr.mxu0 %v2464
        %4743 = vmatpush2.msra.mxu0 %v2463
        %4744 = vmatprep.subr.mxu0 %v2462
        %4745 = vmatpush2.msra.mxu0 %v2461
        %4746 = vmatprep.subr.mxu0 %v2460
        %4747 = vmatpush2.msra.mxu0 %v2459
        %4748 = vmatprep.subr.mxu0 %v2458
        %4749 = vmatpush2.msra.mxu0 %v2457
        %4750 = vmatprep.subr.mxu0 %v2456
        %4751 = vmatpush2.msra.mxu0 %v2455
        %4752 = vmatprep.subr.mxu0 %v2454
        %4753 = vmatpush2.msra.mxu0 %v2453
        %4754 = vmatprep.subr.mxu0 %v2452
        %4755 = vmatpush2.msra.mxu0 %v2451
        %4756 = vmatprep.subr.mxu0 %v2450
        %4757 = vmatpush2.msra.mxu0 %v2449
        %4758 = vmatprep.mubr.f32.mxu0 %v432
        %4759 = vmatmul.mubr.f32.gmra.mxu0 %v431
        %v4760 = vpop.f32.mrf.mxu0
        %v4761 = vadd.f32 %v4690, %v4760
        %v4762 = vpop.f32.mrf.mxu0
        %v4763 = vadd.f32 %v4692, %v4762
        %4764 = vdwg.mxu0
        %v4765 = vrot.slane %v4761, 4
        %v4766 = vadd.f32 %v4761, %v4765
        %v4767 = vrot.slane %v4766, 2
        %v4768 = vadd.f32 %v4766, %v4767
        %v4769 = vrot.slane %v4768, 1
        %v4770 = vadd.f32 %v4768, %v4769
        %v4771 = vrot.slane %v4763, 4
        %v4772 = vadd.f32 %v4763, %v4771
        %v4773 = vrot.slane %v4772, 2
        %v4774 = vadd.f32 %v4772, %v4773
        %v4775 = vrot.slane %v4774, 1
        %v4776 = vadd.f32 %v4774, %v4775
        %v4777 = vrcp.pop 8.0
        %v4778 = vmul.f32 %v4770, %v4777
        %v4779 = vmul.f32 %v4776, %v4777
        %v4780 = vsub.f32 %v4761, %v4778
        %v4781 = vsub.f32 %v4763, %v4779
        %v4782 = vmul.f32 %v4780, %v4780
        %v4783 = vmul.f32 %v4781, %v4781
        %v4784 = vrot.slane %v4782, 4
        %v4785 = vadd.f32 %v4782, %v4784
        %v4786 = vrot.slane %v4785, 2
        %v4787 = vadd.f32 %v4785, %v4786
        %v4788 = vrot.slane %v4787, 1
        %v4789 = vadd.f32 %v4787, %v4788
        %v4790 = vrot.slane %v4783, 4
        %v4791 = vadd.f32 %v4783, %v4790
        %v4792 = vrot.slane %v4791, 2
        %v4793 = vadd.f32 %v4791, %v4792
        %v4794 = vrot.slane %v4793, 1
        %v4795 = vadd.f32 %v4793, %v4794
        %v4796 = vmul.f32 %v4789, %v4777
        %v4797 = vmul.f32 %v4795, %v4777
        %v4798 = vadd.f32 %v4796, 1e-05
        %v4799 = vadd.f32 %v4797, 1e-05
        %v4800 = vrsqrt.pop %v4798
        %v4801 = vrsqrt.pop %v4799
        %v4802 = vmul.f32 %v4780, %v4800
        %v4803 = vmul.f32 %v4781, %v4801
        %v4804 = vld [vmem:[%s313] sm:$0x3]
        %v4806 = vlaneseq
        %v4807 = vshrl.u32 %v4806, 7
        %v4808 = vsub.s32 0, %v4807
        %v4809 = vrot.slane %v4804, %v4808
        %v4810 = vlaneseq
        %v4811 = vshrl.u32 %v4810, 7
        %v4812 = vsub.s32 1, %v4811
        %v4813 = vrot.slane %v4804, %v4812
        %v4816 = vmul.f32 %v4802, %v4809
        %v4817 = vmul.f32 %v4803, %v4813
        %v4818 = vld [vmem:[%s322] sm:$0x3]
        %v4820 = vlaneseq
        %v4821 = vshrl.u32 %v4820, 7
        %v4822 = vsub.s32 0, %v4821
        %v4823 = vrot.slane %v4818, %v4822
        %v4824 = vlaneseq
        %v4825 = vshrl.u32 %v4824, 7
        %v4826 = vsub.s32 1, %v4825
        %v4827 = vrot.slane %v4818, %v4826
        %v4830 = vadd.f32 %v4816, %v4823
        %v4831 = vadd.f32 %v4817, %v4827
        %v4832 = vmax.f32 %v4830, 0.0
        %v4833 = vmax.f32 %v4831, 0.0
        %4834 = vst [vmem:[%s363] sm:$0xff] %v4832
        %4835 = vst [vmem:[%s363 + $0x8] sm:$0xff] %v4833
        %s4836 = sand.u32 %s159, 1
        %s4837 = scalar_lea.sflag [#allocation4], %s4836
        %s4838 = sand.u32 %s159, 1
        %s4839 = smul.addr %s4838, 16
        %s4840 = scalar_lea.vmem [#allocation11], %s4839
        // Predicated region
        $region61: #{tpu_custom_call.1} parent=39 // pred_check
          %p4841 = pneg %p169
        $region62: #{tpu_custom_call.1} parent=39 // pred_check_branch
          %4843 = sbr.rel (%p4841) target = $region64
        $region63: #{tpu_custom_call.1} parent=39 // pred_region
          %s4844 = smul.u32 2, %s26
          %s4846 = ssub.s32 256, 256
          %4847 = vsyncadd %s4837, %s4846
          %s4848 = smul.addr %s4844, 128
          %s4849 = scalar_lea.hbm %s5, %s4848
          %s4851 = sshll.u32 %s4840, 4
          %s4852 = int_to_ptr.vmem [resolvable:$true] %s4851
          %4854 = dma.vmem_to_hbm [thread:$0]  %s4852, 256, %s4849, %s4837
        $region64: #{tpu_custom_call.1} parent=39 // pred_fallthru
          _
      $region40: #{tpu_custom_call.1} parent=5 // pred_fallthru
        _
      %p4855 = scmp.le.s32.totalorder 2, %s21
      // Predicated region
      $region65: #{tpu_custom_call.1} parent=5 // pred_check
        %p4856 = pneg %p4855
      $region66: #{tpu_custom_call.1} parent=5 // pred_check_branch
        %4858 = sbr.rel (%p4856) target = $region68
      $region67: #{tpu_custom_call.1} parent=5 // pred_region
        %s4859 = ssub.s32 %s21, 2
        // Predicated region
        $region69: #{tpu_custom_call.1} parent=67 // pred_check
          %p4860 = pneg %p175
        $region70: #{tpu_custom_call.1} parent=67 // pred_check_branch
          %4862 = sbr.rel (%p4860) target = $region72
        $region71: #{tpu_custom_call.1} parent=67 // pred_region
          %s4863 = sand.u32 %s160, 1
          %s4864 = scalar_lea.sflag [#allocation4], %s4863
          %s4865 = sand.u32 %s160, 1
          %s4866 = smul.addr %s4865, 16
          %s4867 = scalar_lea.vmem [#allocation11], %s4866
          %4868 = dma.done %s4864, 256
        $region72: #{tpu_custom_call.1} parent=67 // pred_fallthru
          _
      $region68: #{tpu_custom_call.1} parent=5 // pred_fallthru
        _
    $region6: #{tpu_custom_call.1} parent=1 // loop_footer
      %s25 = sadd.s32 1, %s21
    $region7: #{tpu_custom_call.1} parent=1 // loop_footer_branch
      %20 = sbr.rel target = $region3
    $region8: #{tpu_custom_call.1} parent=1 // loop_exit
      _
    %4869 = vsyncpa [#allocation3], 1
    %s4870 = scalar_lea.sflag [#allocation3], 1
    %4871 = vsyncpa %s4870, 1
    %4872 = vsyncpa [#allocation6], 1
    %s4873 = scalar_lea.sflag [#allocation6], 1
    %4874 = vsyncpa %s4873, 1
    %4875 = vsyncpa [#allocation9], 1
    %s4876 = scalar_lea.sflag [#allocation9], 1
    %4877 = vsyncpa %s4876, 1
    %4878 = vsyncpa [#allocation4], 1
    %s4879 = scalar_lea.sflag [#allocation4], 1
    %4880 = vsyncpa %s4879, 1

</llo_original>
